<compile_context>
chip_gen: v6e
topology: v6e:2x2x1
jax: 0.10.0
libtpu: 0.0.40
codegen_flags: <defaults>
</compile_context>

<pallas_src>
import functools

import jax
import jax.numpy as jnp
from jax.experimental import pallas as pl
from jax.experimental.pallas import tpu as pltpu


# ----------------------------------------------------------------------------
# Kernel helpers
# ----------------------------------------------------------------------------
def _layer_norm(x, w, b, eps=1e-5):
    # PyTorch nn.LayerNorm: biased variance over the last dim, f32 math.
    mu = jnp.mean(x, axis=-1, keepdims=True)
    var = jnp.mean((x - mu) ** 2, axis=-1, keepdims=True)
    return (x - mu) * jax.lax.rsqrt(var + eps) * w + b


def _mha(h, kv, mask2d, wq_ref, bq_ref, wk_ref, bk_ref, wv_ref, bv_ref,
         wo_ref, bo_ref, H, d_k):
    """Multi-head attention with full-width projections.

    h:  (Tq, D) f32 query source, kv: (Tk, D) f32 key/value source.
    mask2d: bool, broadcastable to (Tq, Tk); True = keep.
    wq/wk/wv/wo refs: (D, D) bf16 (wq pre-scaled by 1/sqrt(d_k)).
    bq/bk/bv/bo refs: (1, D) f32 (bq pre-scaled by 1/sqrt(d_k)).
    """
    Tq, D = h.shape
    hb = h.astype(jnp.bfloat16)
    kvb = kv.astype(jnp.bfloat16)

    # Full-width projections: one (T,D)x(D,D) MXU matmul each -- H x fewer MXU
    # ops and full lane/depth utilization vs per-head projections.
    q = (jnp.dot(hb, wq_ref[...], preferred_element_type=jnp.float32)
         + bq_ref[...]).astype(jnp.bfloat16)                          # (Tq, D)
    k = (jnp.dot(kvb, wk_ref[...], preferred_element_type=jnp.float32)
         + bk_ref[...]).astype(jnp.bfloat16)                          # (Tk, D)
    v = (jnp.dot(kvb, wv_ref[...], preferred_element_type=jnp.float32)
         + bv_ref[...]).astype(jnp.bfloat16)                          # (Tk, D)

    ddn_last = (((1,), (1,)), ((), ()))  # contract last dims, no batch dims

    # Output projection accumulated head-by-head through W_o row blocks
    # (no concatenate); accumulator starts from the output bias.
    att = jnp.zeros((Tq, D), jnp.float32) + bo_ref[...]

    # Static unrolled loop: H=4 and all temporaries are tiny, so vreg pressure
    # is negligible.  For larger H / T switch to lax.fori_loop(unroll=True)
    # with pl.ds slicing, or a head-batched dot_general.
    for hd in range(H):
        sl = slice(hd * d_k, (hd + 1) * d_k)      # static, tile-aligned slices
        q_h = q[:, sl]                            # (Tq, d_k)
        k_h = k[:, sl]                            # (Tk, d_k)
        v_h = v[:, sl]                            # (Tk, d_k)

        # scores: contract last dims of q/k -> transpose absorbed by the MXU;
        # 1/sqrt(d_k) already folded into q.
        s = jax.lax.dot_general(q_h, k_h, ddn_last,
                                preferred_element_type=jnp.float32)   # (Tq,Tk)
        s = jnp.where(mask2d, s, jnp.float32(-1e30))
        s = s - jnp.max(s, axis=-1, keepdims=True)
        p = jnp.exp(s)
        p = p * pl.reciprocal(jnp.sum(p, axis=-1, keepdims=True), approx=True)

        o_h = jnp.dot(p.astype(jnp.bfloat16), v_h,
                      preferred_element_type=jnp.float32)             # (Tq,d_k)
        att = att + jnp.dot(o_h.astype(jnp.bfloat16), wo_ref[sl, :],
                            preferred_element_type=jnp.float32)       # (Tq, D)
    return att


# ----------------------------------------------------------------------------
# Kernel
# ----------------------------------------------------------------------------
def decoder_layer_kernel(
    x_ref, mem_ref, trg_mask_ref, src_mask_ref,
    ln0_w_ref, ln0_b_ref,
    sq_w_ref, sq_b_ref, sk_w_ref, sk_b_ref, sv_w_ref, sv_b_ref, so_w_ref, so_b_ref,
    ln1_w_ref, ln1_b_ref,
    cq_w_ref, cq_b_ref, ck_w_ref, ck_b_ref, cv_w_ref, cv_b_ref, co_w_ref, co_b_ref,
    ln2_w_ref, ln2_b_ref,
    f1_w_ref, f1_b_ref, f2_w_ref, f2_b_ref,
    out_ref,
    *, H,
):
    x = x_ref[0]                          # (T, D) f32
    mem = mem_ref[0]                      # (S, D) f32
    trg_mask = trg_mask_ref[0] != 0       # (T, T) bool (int8 in HBM)
    src_mask = src_mask_ref[0] != 0       # (1, S) bool
    D = x.shape[1]
    d_k = D // H

    # ---- sublayer 0: masked self-attention over LayerNorm(x) ---------------
    h = _layer_norm(x, ln0_w_ref[...], ln0_b_ref[...])
    att = _mha(h, h, trg_mask,
               sq_w_ref, sq_b_ref, sk_w_ref, sk_b_ref, sv_w_ref, sv_b_ref,
               so_w_ref, so_b_ref, H, d_k)
    x = x + att                           # residual (dropout == identity)

    # ---- sublayer 1: cross-attention over encoder memory -------------------
    h = _layer_norm(x, ln1_w_ref[...], ln1_b_ref[...])
    att = _mha(h, mem, src_mask,
               cq_w_ref, cq_b_ref, ck_w_ref, ck_b_ref, cv_w_ref, cv_b_ref,
               co_w_ref, co_b_ref, H, d_k)
    x = x + att

    # ---- sublayer 2: position-wise feed-forward -----------------------------
    h = _layer_norm(x, ln2_w_ref[...], ln2_b_ref[...])
    f = jnp.dot(h.astype(jnp.bfloat16), f1_w_ref[...],
                preferred_element_type=jnp.float32) + f1_b_ref[...]
    f = jnp.maximum(f, 0.0)
    f = jnp.dot(f.astype(jnp.bfloat16), f2_w_ref[...],
                preferred_element_type=jnp.float32) + f2_b_ref[...]

    out_ref[0] = x + f                    # residual


# ----------------------------------------------------------------------------
# Wrapper
# ----------------------------------------------------------------------------
def decoder_layer_pallas(x, memory, src_mask, trg_mask, params, H,
                         vmem_limit_bytes=None):
    """DecoderLayer.forward.  x: (B,T,D) f32, memory: (B,S,D) f32,
    src_mask: (B,1,S) bool/{0,1}, trg_mask: (B,T,T) bool/{0,1}."""
    B, T, D = x.shape
    S = memory.shape[1]
    assert D % H == 0, "d_model must be divisible by H"
    d_ff = params["f1_w"].shape[1]
    d_k = D // H
    scale = 1.0 / float(d_k) ** 0.5       # folded into Wq / bq (exact: 2^-k)

    bf = jnp.bfloat16

    def w_bf(a):                           # lane-dense bf16 weight
        return a.astype(bf)

    def b_f32(a):                          # lane-dense (1, N) f32 bias
        return a.reshape(1, -1).astype(jnp.float32)

    operands = (
        x, memory,
        trg_mask.astype(jnp.int8), src_mask.astype(jnp.int8),   # 4x less DMA
        b_f32(params["ln0_w"]), b_f32(params["ln0_b"]),
        w_bf(params["sq_w"] * scale), b_f32(params["sq_b"] * scale),
        w_bf(params["sk_w"]), b_f32(params["sk_b"]),
        w_bf(params["sv_w"]), b_f32(params["sv_b"]),
        w_bf(params["so_w"]), b_f32(params["so_b"]),
        b_f32(params["ln1_w"]), b_f32(params["ln1_b"]),
        w_bf(params["cq_w"] * scale), b_f32(params["cq_b"] * scale),
        w_bf(params["ck_w"]), b_f32(params["ck_b"]),
        w_bf(params["cv_w"]), b_f32(params["cv_b"]),
        w_bf(params["co_w"]), b_f32(params["co_b"]),
        b_f32(params["ln2_w"]), b_f32(params["ln2_b"]),
        w_bf(params["f1_w"]), b_f32(params["f1_b"]),
        w_bf(params["f2_w"]), b_f32(params["f2_b"]),
    )

    def rep(shape):
        nd = len(shape)
        return pl.BlockSpec(shape, lambda b, _n=nd: (0,) * _n)

    in_specs = [
        pl.BlockSpec((1, T, D), lambda b: (b, 0, 0)),   # x
        pl.BlockSpec((1, S, D), lambda b: (b, 0, 0)),   # memory
        pl.BlockSpec((1, T, T), lambda b: (b, 0, 0)),   # trg_mask (int8)
        pl.BlockSpec((1, 1, S), lambda b: (b, 0, 0)),   # src_mask (int8)
        rep((1, D)), rep((1, D)),                       # ln0 w, b
        rep((D, D)), rep((1, D)),                       # self q w, b
        rep((D, D)), rep((1, D)),                       # self k w, b
        rep((D, D)), rep((1, D)),                       # self v w, b
        rep((D, D)), rep((1, D)),                       # self out w, b
        rep((1, D)), rep((1, D)),                       # ln1 w, b
        rep((D, D)), rep((1, D)),                       # cross q w, b
        rep((D, D)), rep((1, D)),                       # cross k w, b
        rep((D, D)), rep((1, D)),                       # cross v w, b
        rep((D, D)), rep((1, D)),                       # cross out w, b
        rep((1, D)), rep((1, D)),                       # ln2 w, b
        rep((D, d_ff)), rep((1, d_ff)),                 # fc1 w, b
        rep((d_ff, D)), rep((1, D)),                    # fc2 w, b
    ]

    if vmem_limit_bytes is None:
        # Actual per-step block footprint x2 (double buffering) + slack,
        # capped well below the 64 MiB physical VMEM of a v7x TensorCore.
        def _nb(a):
            return int(a.size) * a.dtype.itemsize
        per_step = (sum(_nb(a) // B for a in operands[:4])       # batched blocks
                    + sum(_nb(a) for a in operands[4:])          # resident weights
                    + T * D * 4)                                 # output block
        vmem_limit_bytes = int(min(48 << 20, max(8 << 20, 2 * per_step + (2 << 20))))

    kernel = functools.partial(decoder_layer_kernel, H=H)

    return pl.pallas_call(
        kernel,
        out_shape=jax.ShapeDtypeStruct((B, T, D), jnp.float32),
        grid_spec=pltpu.PrefetchScalarGridSpec(
            num_scalar_prefetch=0,
            grid=(B,),                                   # B>=2 -> both v7x TCs busy
            in_specs=in_specs,
            out_specs=pl.BlockSpec((1, T, D), lambda b: (b, 0, 0)),
        ),
        compiler_params=pltpu.CompilerParams(
            dimension_semantics=("parallel",),
            vmem_limit_bytes=vmem_limit_bytes,
        ),
    )(*operands)


# ----------------------------------------------------------------------------
# Deterministic parameter init (shapes follow the PyTorch __init__).
# Weights are rounded to bf16-representable values so the bf16 MXU path in the
# kernel is lossless on weights; biases / LayerNorm params stay f32.
# ----------------------------------------------------------------------------
def init_layer_params(key, d_model, d_ff):
    ks = jax.random.split(key, 20)

    def lin(kw, kb, fan_in, fan_out):
        bound = 1.0 / fan_in ** 0.5
        w = jax.random.uniform(kw, (fan_in, fan_out), jnp.float32, -bound, bound)
        w = w.astype(jnp.bfloat16).astype(jnp.float32)   # bf16-representable
        b = jax.random.uniform(kb, (1, fan_out), jnp.float32, -bound, bound)
        return w, b

    sq_w, sq_b = lin(ks[0], ks[1], d_model, d_model)
    sk_w, sk_b = lin(ks[2], ks[3], d_model, d_model)
    sv_w, sv_b = lin(ks[4], ks[5], d_model, d_model)
    so_w, so_b = lin(ks[6], ks[7], d_model, d_model)
    cq_w, cq_b = lin(ks[8], ks[9], d_model, d_model)
    ck_w, ck_b = lin(ks[10], ks[11], d_model, d_model)
    cv_w, cv_b = lin(ks[12], ks[13], d_model, d_model)
    co_w, co_b = lin(ks[14], ks[15], d_model, d_model)
    f1_w, f1_b = lin(ks[16], ks[17], d_model, d_ff)
    f2_w, f2_b = lin(ks[18], ks[19], d_ff, d_model)

    ones = lambda: jnp.ones((1, d_model), jnp.float32)
    zeros = lambda: jnp.zeros((1, d_model), jnp.float32)
    return {
        "ln0_w": ones(), "ln0_b": zeros(),
        "ln1_w": ones(), "ln1_b": zeros(),
        "ln2_w": ones(), "ln2_b": zeros(),
        "sq_w": sq_w, "sq_b": sq_b, "sk_w": sk_w, "sk_b": sk_b,
        "sv_w": sv_w, "sv_b": sv_b, "so_w": so_w, "so_b": so_b,
        "cq_w": cq_w, "cq_b": cq_b, "ck_w": ck_w, "ck_b": ck_b,
        "cv_w": cv_w, "cv_b": cv_b, "co_w": co_w, "co_b": co_b,
        "f1_w": f1_w, "f1_b": f1_b, "f2_w": f2_w, "f2_b": f2_b,
    }


# ----------------------------------------------------------------------------
# Pure-JAX reference (PyTorch semantics) for correctness check
# ----------------------------------------------------------------------------
def _ref_decoder_layer(x, memory, src_mask, trg_mask, p, H):
    def ln(x, w, b):
        mu = jnp.mean(x, -1, keepdims=True)
        var = jnp.mean((x - mu) ** 2, -1, keepdims=True)
        return (x - mu) / jnp.sqrt(var + 1e-5) * w + b

    def mha(hq, hkv, m, wq, bq, wk, bk, wv, bv, wo, bo):
        B, Tq, D = hq.shape
        Tk = hkv.shape[1]
        d_k = D // H
        q = (hq @ wq + bq).reshape(B, Tq, H, d_k).transpose(0, 2, 1, 3)
        k = (hkv @ wk + bk).reshape(B, Tk, H, d_k).transpose(0, 2, 1, 3)
        v = (hkv @ wv + bv).reshape(B, Tk, H, d_k).transpose(0, 2, 1, 3)
        s = jnp.einsum("bhqd,bhkd->bhqk", q, k) / jnp.sqrt(float(d_k))
        s = jnp.where(m[:, None, :, :], s, -1e30)
        a = jax.nn.softmax(s, axis=-1)
        o = jnp.einsum("bhqk,bhkd->bhqd", a, v)
        o = o.transpose(0, 2, 1, 3).reshape(B, Tq, D)
        return o @ wo + bo

    h = ln(x, p["ln0_w"], p["ln0_b"])
    x = x + mha(h, h, trg_mask, p["sq_w"], p["sq_b"], p["sk_w"], p["sk_b"],
                p["sv_w"], p["sv_b"], p["so_w"], p["so_b"])
    h = ln(x, p["ln1_w"], p["ln1_b"])
    x = x + mha(h, memory, src_mask, p["cq_w"], p["cq_b"], p["ck_w"], p["ck_b"],
                p["cv_w"], p["cv_b"], p["co_w"], p["co_b"])
    h = ln(x, p["ln2_w"], p["ln2_b"])
    f = jnp.maximum(h @ p["f1_w"] + p["f1_b"], 0.0) @ p["f2_w"] + p["f2_b"]
    return x + f


# ----------------------------------------------------------------------------
if __name__ == "__main__":
    # Small, module-consistent shapes
    B, T, S = 2, 8, 16            # batch, target seq, source (memory) seq
    d_model, H, d_ff = 64, 4, 128
    dout_p = 0.1                  # dropout is identity at inference; unused

    key = jax.random.PRNGKey(0)
    kx, km, kp = jax.random.split(key, 3)
    x = jax.random.normal(kx, (B, T, d_model), jnp.float32)
    memory = jax.random.normal(km, (B, S, d_model), jnp.float32)

    # Masks as produced by mask()/subsequent_mask(): padding at the tail,
    # causal structure on the target side.
    trg_lens = jnp.array([T, T - 3])
    src_lens = jnp.array([S, S - 5])
    trg_valid = jnp.arange(T)[None, :] < trg_lens[:, None]       # (B, T)
    src_valid = jnp.arange(S)[None, :] < src_lens[:, None]       # (B, S)
    causal = jnp.tril(jnp.ones((T, T), jnp.bool_))
    trg_mask = trg_valid[:, None, :] & causal[None, :, :]        # (B, T, T)
    src_mask = src_valid[:, None, :]                             # (B, 1, S)

    params = init_layer_params(kp, d_model, d_ff)

    out = decoder_layer_pallas(x, memory, src_mask, trg_mask, params, H)
    out = jax.block_until_ready(out)

    ref = _ref_decoder_layer(x, memory, src_mask, trg_mask, params, H)
    assert out.shape == (B, T, d_model)
    err = jnp.max(jnp.abs(out - ref))
    assert jnp.allclose(out, ref, atol=2e-2, rtol=2e-2), f"mismatch vs ref: {err}"

    print("KERNEL_OK")
</pallas_src>

<mosaic_0001>
module attributes {stable_mosaic.version = 11 : i64} {
  func.func @decoder_layer_kernel(%arg0: i32, %arg1: memref<1x8x64xf32, #tpu.memory_space<vmem>>, %arg2: memref<1x16x64xf32, #tpu.memory_space<vmem>>, %arg3: memref<1x8x8xi8, #tpu.memory_space<vmem>>, %arg4: memref<1x1x16xi8, #tpu.memory_space<vmem>>, %arg5: memref<1x64xf32, #tpu.memory_space<vmem>>, %arg6: memref<1x64xf32, #tpu.memory_space<vmem>>, %arg7: memref<64x64xbf16, #tpu.memory_space<vmem>>, %arg8: memref<1x64xf32, #tpu.memory_space<vmem>>, %arg9: memref<64x64xbf16, #tpu.memory_space<vmem>>, %arg10: memref<1x64xf32, #tpu.memory_space<vmem>>, %arg11: memref<64x64xbf16, #tpu.memory_space<vmem>>, %arg12: memref<1x64xf32, #tpu.memory_space<vmem>>, %arg13: memref<64x64xbf16, #tpu.memory_space<vmem>>, %arg14: memref<1x64xf32, #tpu.memory_space<vmem>>, %arg15: memref<1x64xf32, #tpu.memory_space<vmem>>, %arg16: memref<1x64xf32, #tpu.memory_space<vmem>>, %arg17: memref<64x64xbf16, #tpu.memory_space<vmem>>, %arg18: memref<1x64xf32, #tpu.memory_space<vmem>>, %arg19: memref<64x64xbf16, #tpu.memory_space<vmem>>, %arg20: memref<1x64xf32, #tpu.memory_space<vmem>>, %arg21: memref<64x64xbf16, #tpu.memory_space<vmem>>, %arg22: memref<1x64xf32, #tpu.memory_space<vmem>>, %arg23: memref<64x64xbf16, #tpu.memory_space<vmem>>, %arg24: memref<1x64xf32, #tpu.memory_space<vmem>>, %arg25: memref<1x64xf32, #tpu.memory_space<vmem>>, %arg26: memref<1x64xf32, #tpu.memory_space<vmem>>, %arg27: memref<64x128xbf16, #tpu.memory_space<vmem>>, %arg28: memref<1x128xf32, #tpu.memory_space<vmem>>, %arg29: memref<128x64xbf16, #tpu.memory_space<vmem>>, %arg30: memref<1x64xf32, #tpu.memory_space<vmem>>, %arg31: memref<1x8x64xf32, #tpu.memory_space<vmem>>) attributes {dimension_semantics = [#tpu.dimension_semantics<parallel>], iteration_bounds = array<i64: 2>, scalar_prefetch = 0 : i64, scratch_operands = 0 : i64, tpu.core_type = #tpu.core_type<tc>, window_params = [{transform_indices = @transform_0, window_bounds = array<i64: 1, 8, 64>}, {transform_indices = @transform_1, window_bounds = array<i64: 1, 16, 64>}, {transform_indices = @transform_2, window_bounds = array<i64: 1, 8, 8>}, {transform_indices = @transform_3, window_bounds = array<i64: 1, 1, 16>}, {pipeline_mode = #tpu.pipeline_mode<synchronous>, transform_indices = @transform_4, window_bounds = array<i64: 1, 64>}, {pipeline_mode = #tpu.pipeline_mode<synchronous>, transform_indices = @transform_5, window_bounds = array<i64: 1, 64>}, {pipeline_mode = #tpu.pipeline_mode<synchronous>, transform_indices = @transform_6, window_bounds = array<i64: 64, 64>}, {pipeline_mode = #tpu.pipeline_mode<synchronous>, transform_indices = @transform_7, window_bounds = array<i64: 1, 64>}, {pipeline_mode = #tpu.pipeline_mode<synchronous>, transform_indices = @transform_8, window_bounds = array<i64: 64, 64>}, {pipeline_mode = #tpu.pipeline_mode<synchronous>, transform_indices = @transform_9, window_bounds = array<i64: 1, 64>}, {pipeline_mode = #tpu.pipeline_mode<synchronous>, transform_indices = @transform_10, window_bounds = array<i64: 64, 64>}, {pipeline_mode = #tpu.pipeline_mode<synchronous>, transform_indices = @transform_11, window_bounds = array<i64: 1, 64>}, {pipeline_mode = #tpu.pipeline_mode<synchronous>, transform_indices = @transform_12, window_bounds = array<i64: 64, 64>}, {pipeline_mode = #tpu.pipeline_mode<synchronous>, transform_indices = @transform_13, window_bounds = array<i64: 1, 64>}, {pipeline_mode = #tpu.pipeline_mode<synchronous>, transform_indices = @transform_14, window_bounds = array<i64: 1, 64>}, {pipeline_mode = #tpu.pipeline_mode<synchronous>, transform_indices = @transform_15, window_bounds = array<i64: 1, 64>}, {pipeline_mode = #tpu.pipeline_mode<synchronous>, transform_indices = @transform_16, window_bounds = array<i64: 64, 64>}, {pipeline_mode = #tpu.pipeline_mode<synchronous>, transform_indices = @transform_17, window_bounds = array<i64: 1, 64>}, {pipeline_mode = #tpu.pipeline_mode<synchronous>, transform_indices = @transform_18, window_bounds = array<i64: 64, 64>}, {pipeline_mode = #tpu.pipeline_mode<synchronous>, transform_indices = @transform_19, window_bounds = array<i64: 1, 64>}, {pipeline_mode = #tpu.pipeline_mode<synchronous>, transform_indices = @transform_20, window_bounds = array<i64: 64, 64>}, {pipeline_mode = #tpu.pipeline_mode<synchronous>, transform_indices = @transform_21, window_bounds = array<i64: 1, 64>}, {pipeline_mode = #tpu.pipeline_mode<synchronous>, transform_indices = @transform_22, window_bounds = array<i64: 64, 64>}, {pipeline_mode = #tpu.pipeline_mode<synchronous>, transform_indices = @transform_23, window_bounds = array<i64: 1, 64>}, {pipeline_mode = #tpu.pipeline_mode<synchronous>, transform_indices = @transform_24, window_bounds = array<i64: 1, 64>}, {pipeline_mode = #tpu.pipeline_mode<synchronous>, transform_indices = @transform_25, window_bounds = array<i64: 1, 64>}, {pipeline_mode = #tpu.pipeline_mode<synchronous>, transform_indices = @transform_26, window_bounds = array<i64: 64, 128>}, {pipeline_mode = #tpu.pipeline_mode<synchronous>, transform_indices = @transform_27, window_bounds = array<i64: 1, 128>}, {pipeline_mode = #tpu.pipeline_mode<synchronous>, transform_indices = @transform_28, window_bounds = array<i64: 128, 64>}, {pipeline_mode = #tpu.pipeline_mode<synchronous>, transform_indices = @transform_29, window_bounds = array<i64: 1, 64>}, {transform_indices = @transform_30, window_bounds = array<i64: 1, 8, 64>}]} {
    %c0 = arith.constant 0 : index
    %c0_0 = arith.constant 0 : index
    %c0_1 = arith.constant 0 : index
    %0 = vector.load %arg1[%c0, %c0_0, %c0_1] : memref<1x8x64xf32, #tpu.memory_space<vmem>>, vector<1x8x64xf32>
    %1 = vector.shape_cast %0 : vector<1x8x64xf32> to vector<8x64xf32>
    %c0_2 = arith.constant 0 : index
    %c0_3 = arith.constant 0 : index
    %c0_4 = arith.constant 0 : index
    %2 = vector.load %arg2[%c0_2, %c0_3, %c0_4] : memref<1x16x64xf32, #tpu.memory_space<vmem>>, vector<1x16x64xf32>
    %3 = vector.shape_cast %2 : vector<1x16x64xf32> to vector<16x64xf32>
    %c0_5 = arith.constant 0 : index
    %c0_6 = arith.constant 0 : index
    %c0_7 = arith.constant 0 : index
    %4 = vector.load %arg3[%c0_5, %c0_6, %c0_7] : memref<1x8x8xi8, #tpu.memory_space<vmem>>, vector<1x8x8xi8>
    %5 = vector.shape_cast %4 : vector<1x8x8xi8> to vector<8x8xi8>
    %c0_i8 = arith.constant 0 : i8
    %6 = vector.broadcast %c0_i8 : i8 to vector<8x8xi8>
    %7 = arith.cmpi ne, %5, %6 : vector<8x8xi8>
    %c0_8 = arith.constant 0 : index
    %c0_9 = arith.constant 0 : index
    %c0_10 = arith.constant 0 : index
    %8 = vector.load %arg4[%c0_8, %c0_9, %c0_10] : memref<1x1x16xi8, #tpu.memory_space<vmem>>, vector<1x1x16xi8>
    %9 = vector.shape_cast %8 : vector<1x1x16xi8> to vector<1x16xi8>
    %c0_i8_11 = arith.constant 0 : i8
    %10 = vector.broadcast %c0_i8_11 : i8 to vector<1x16xi8>
    %11 = arith.cmpi ne, %9, %10 : vector<1x16xi8>
    %c0_12 = arith.constant 0 : index
    %c0_13 = arith.constant 0 : index
    %12 = vector.load %arg5[%c0_12, %c0_13] : memref<1x64xf32, #tpu.memory_space<vmem>>, vector<1x64xf32>
    %c0_14 = arith.constant 0 : index
    %c0_15 = arith.constant 0 : index
    %13 = vector.load %arg6[%c0_14, %c0_15] : memref<1x64xf32, #tpu.memory_space<vmem>>, vector<1x64xf32>
    %cst = arith.constant dense<0.000000e+00> : vector<8xf32>
    %14 = vector.multi_reduction <add>, %1, %cst [1] : vector<8x64xf32> to vector<8xf32>
    %15 = vector.shape_cast %14 : vector<8xf32> to vector<8x1xf32>
    %cst_16 = arith.constant 6.400000e+01 : f32
    %16 = vector.broadcast %cst_16 : f32 to vector<8x1xf32>
    %17 = arith.divf %15, %16 : vector<8x1xf32>
    %18 = vector.broadcast %17 : vector<8x1xf32> to vector<8x64xf32>
    %19 = arith.subf %1, %18 : vector<8x64xf32>
    %20 = arith.mulf %19, %19 : vector<8x64xf32>
    %cst_17 = arith.constant dense<0.000000e+00> : vector<8xf32>
    %21 = vector.multi_reduction <add>, %20, %cst_17 [1] : vector<8x64xf32> to vector<8xf32>
    %22 = vector.shape_cast %21 : vector<8xf32> to vector<8x1xf32>
    %cst_18 = arith.constant 6.400000e+01 : f32
    %23 = vector.broadcast %cst_18 : f32 to vector<8x1xf32>
    %24 = arith.divf %22, %23 : vector<8x1xf32>
    %25 = vector.broadcast %17 : vector<8x1xf32> to vector<8x64xf32>
    %26 = arith.subf %1, %25 : vector<8x64xf32>
    %cst_19 = arith.constant 9.99999974E-6 : f32
    %27 = vector.broadcast %cst_19 : f32 to vector<8x1xf32>
    %28 = arith.addf %24, %27 : vector<8x1xf32>
    %29 = math.rsqrt %28 : vector<8x1xf32>
    %30 = vector.broadcast %29 : vector<8x1xf32> to vector<8x64xf32>
    %31 = arith.mulf %26, %30 : vector<8x64xf32>
    %32 = vector.broadcast %12 : vector<1x64xf32> to vector<8x64xf32>
    %33 = arith.mulf %31, %32 : vector<8x64xf32>
    %34 = vector.broadcast %13 : vector<1x64xf32> to vector<8x64xf32>
    %35 = arith.addf %33, %34 : vector<8x64xf32>
    %36 = arith.truncf %35 : vector<8x64xf32> to vector<8x64xbf16>
    %37 = arith.truncf %35 : vector<8x64xf32> to vector<8x64xbf16>
    %c0_20 = arith.constant 0 : index
    %c0_21 = arith.constant 0 : index
    %38 = vector.load %arg7[%c0_20, %c0_21] : memref<64x64xbf16, #tpu.memory_space<vmem>>, vector<64x64xbf16>
    %cst_22 = arith.constant dense<0.000000e+00> : vector<8x64xf32>
    %39 = tpu.matmul %36, %38, %cst_22 {dimension_numbers = #tpu.dot_dimension_numbers<[1], [0], [0], [1], [0, 0, 1, 1], [], []>} : vector<8x64xbf16>, vector<64x64xbf16>, vector<8x64xf32> -> vector<8x64xf32>
    %c0_23 = arith.constant 0 : index
    %c0_24 = arith.constant 0 : index
    %40 = vector.load %arg8[%c0_23, %c0_24] : memref<1x64xf32, #tpu.memory_space<vmem>>, vector<1x64xf32>
    %41 = vector.broadcast %40 : vector<1x64xf32> to vector<8x64xf32>
    %42 = arith.addf %39, %41 : vector<8x64xf32>
    %43 = arith.truncf %42 : vector<8x64xf32> to vector<8x64xbf16>
    %c0_25 = arith.constant 0 : index
    %c0_26 = arith.constant 0 : index
    %44 = vector.load %arg9[%c0_25, %c0_26] : memref<64x64xbf16, #tpu.memory_space<vmem>>, vector<64x64xbf16>
    %cst_27 = arith.constant dense<0.000000e+00> : vector<8x64xf32>
    %45 = tpu.matmul %37, %44, %cst_27 {dimension_numbers = #tpu.dot_dimension_numbers<[1], [0], [0], [1], [0, 0, 1, 1], [], []>} : vector<8x64xbf16>, vector<64x64xbf16>, vector<8x64xf32> -> vector<8x64xf32>
    %c0_28 = arith.constant 0 : index
    %c0_29 = arith.constant 0 : index
    %46 = vector.load %arg10[%c0_28, %c0_29] : memref<1x64xf32, #tpu.memory_space<vmem>>, vector<1x64xf32>
    %47 = vector.broadcast %46 : vector<1x64xf32> to vector<8x64xf32>
    %48 = arith.addf %45, %47 : vector<8x64xf32>
    %49 = arith.truncf %48 : vector<8x64xf32> to vector<8x64xbf16>
    %c0_30 = arith.constant 0 : index
    %c0_31 = arith.constant 0 : index
    %50 = vector.load %arg11[%c0_30, %c0_31] : memref<64x64xbf16, #tpu.memory_space<vmem>>, vector<64x64xbf16>
    %cst_32 = arith.constant dense<0.000000e+00> : vector<8x64xf32>
    %51 = tpu.matmul %37, %50, %cst_32 {dimension_numbers = #tpu.dot_dimension_numbers<[1], [0], [0], [1], [0, 0, 1, 1], [], []>} : vector<8x64xbf16>, vector<64x64xbf16>, vector<8x64xf32> -> vector<8x64xf32>
    %c0_33 = arith.constant 0 : index
    %c0_34 = arith.constant 0 : index
    %52 = vector.load %arg12[%c0_33, %c0_34] : memref<1x64xf32, #tpu.memory_space<vmem>>, vector<1x64xf32>
    %53 = vector.broadcast %52 : vector<1x64xf32> to vector<8x64xf32>
    %54 = arith.addf %51, %53 : vector<8x64xf32>
    %55 = arith.truncf %54 : vector<8x64xf32> to vector<8x64xbf16>
    %cst_35 = arith.constant 0.000000e+00 : f32
    %56 = vector.broadcast %cst_35 : f32 to vector<8x64xf32>
    %c0_36 = arith.constant 0 : index
    %c0_37 = arith.constant 0 : index
    %57 = vector.load %arg14[%c0_36, %c0_37] : memref<1x64xf32, #tpu.memory_space<vmem>>, vector<1x64xf32>
    %58 = vector.broadcast %57 : vector<1x64xf32> to vector<8x64xf32>
    %59 = arith.addf %56, %58 : vector<8x64xf32>
    %60 = vector.extract_strided_slice %43 {offsets = [0, 0], sizes = [8, 16], strides = [1, 1]} : vector<8x64xbf16> to vector<8x16xbf16>
    %61 = vector.extract_strided_slice %49 {offsets = [0, 0], sizes = [8, 16], strides = [1, 1]} : vector<8x64xbf16> to vector<8x16xbf16>
    %62 = vector.extract_strided_slice %55 {offsets = [0, 0], sizes = [8, 16], strides = [1, 1]} : vector<8x64xbf16> to vector<8x16xbf16>
    %cst_38 = arith.constant dense<0.000000e+00> : vector<8x8xf32>
    %63 = tpu.matmul %60, %61, %cst_38 {dimension_numbers = #tpu.dot_dimension_numbers<[1], [1], [0], [0], [0, 0, 1, 0], [], []>} : vector<8x16xbf16>, vector<8x16xbf16>, vector<8x8xf32> -> vector<8x8xf32>
    %cst_39 = arith.constant -1.000000e+30 : f32
    %64 = vector.broadcast %cst_39 : f32 to vector<8x8xf32>
    %65 = arith.select %7, %63, %64 : vector<8x8xi1>, vector<8x8xf32>
    %cst_40 = arith.constant dense<0xFF800000> : vector<8xf32>
    %66 = vector.multi_reduction <maximumf>, %65, %cst_40 [1] : vector<8x8xf32> to vector<8xf32>
    %67 = vector.shape_cast %66 : vector<8xf32> to vector<8x1xf32>
    %68 = vector.broadcast %67 : vector<8x1xf32> to vector<8x8xf32>
    %69 = arith.subf %65, %68 : vector<8x8xf32>
    %70 = math.exp %69 : vector<8x8xf32>
    %cst_41 = arith.constant dense<0.000000e+00> : vector<8xf32>
    %71 = vector.multi_reduction <add>, %70, %cst_41 [1] : vector<8x8xf32> to vector<8xf32>
    %72 = vector.shape_cast %71 : vector<8xf32> to vector<8x1xf32>
    %73 = tpu.reciprocal %72 {approx = true} : vector<8x1xf32> -> vector<8x1xf32>
    %74 = vector.broadcast %73 : vector<8x1xf32> to vector<8x8xf32>
    %75 = arith.mulf %70, %74 : vector<8x8xf32>
    %76 = arith.truncf %75 : vector<8x8xf32> to vector<8x8xbf16>
    %cst_42 = arith.constant dense<0.000000e+00> : vector<8x16xf32>
    %77 = tpu.matmul %76, %62, %cst_42 {dimension_numbers = #tpu.dot_dimension_numbers<[1], [0], [0], [1], [0, 0, 1, 1], [], []>} : vector<8x8xbf16>, vector<8x16xbf16>, vector<8x16xf32> -> vector<8x16xf32>
    %78 = arith.truncf %77 : vector<8x16xf32> to vector<8x16xbf16>
    %c0_43 = arith.constant 0 : index
    %c0_44 = arith.constant 0 : index
    %79 = vector.load %arg13[%c0_43, %c0_44] : memref<64x64xbf16, #tpu.memory_space<vmem>>, vector<16x64xbf16>
    %cst_45 = arith.constant dense<0.000000e+00> : vector<8x64xf32>
    %80 = tpu.matmul %78, %79, %cst_45 {dimension_numbers = #tpu.dot_dimension_numbers<[1], [0], [0], [1], [0, 0, 1, 1], [], []>} : vector<8x16xbf16>, vector<16x64xbf16>, vector<8x64xf32> -> vector<8x64xf32>
    %81 = arith.addf %59, %80 : vector<8x64xf32>
    %82 = vector.extract_strided_slice %43 {offsets = [0, 16], sizes = [8, 16], strides = [1, 1]} : vector<8x64xbf16> to vector<8x16xbf16>
    %83 = vector.extract_strided_slice %49 {offsets = [0, 16], sizes = [8, 16], strides = [1, 1]} : vector<8x64xbf16> to vector<8x16xbf16>
    %84 = vector.extract_strided_slice %55 {offsets = [0, 16], sizes = [8, 16], strides = [1, 1]} : vector<8x64xbf16> to vector<8x16xbf16>
    %cst_46 = arith.constant dense<0.000000e+00> : vector<8x8xf32>
    %85 = tpu.matmul %82, %83, %cst_46 {dimension_numbers = #tpu.dot_dimension_numbers<[1], [1], [0], [0], [0, 0, 1, 0], [], []>} : vector<8x16xbf16>, vector<8x16xbf16>, vector<8x8xf32> -> vector<8x8xf32>
    %cst_47 = arith.constant -1.000000e+30 : f32
    %86 = vector.broadcast %cst_47 : f32 to vector<8x8xf32>
    %87 = arith.select %7, %85, %86 : vector<8x8xi1>, vector<8x8xf32>
    %cst_48 = arith.constant dense<0xFF800000> : vector<8xf32>
    %88 = vector.multi_reduction <maximumf>, %87, %cst_48 [1] : vector<8x8xf32> to vector<8xf32>
    %89 = vector.shape_cast %88 : vector<8xf32> to vector<8x1xf32>
    %90 = vector.broadcast %89 : vector<8x1xf32> to vector<8x8xf32>
    %91 = arith.subf %87, %90 : vector<8x8xf32>
    %92 = math.exp %91 : vector<8x8xf32>
    %cst_49 = arith.constant dense<0.000000e+00> : vector<8xf32>
    %93 = vector.multi_reduction <add>, %92, %cst_49 [1] : vector<8x8xf32> to vector<8xf32>
    %94 = vector.shape_cast %93 : vector<8xf32> to vector<8x1xf32>
    %95 = tpu.reciprocal %94 {approx = true} : vector<8x1xf32> -> vector<8x1xf32>
    %96 = vector.broadcast %95 : vector<8x1xf32> to vector<8x8xf32>
    %97 = arith.mulf %92, %96 : vector<8x8xf32>
    %98 = arith.truncf %97 : vector<8x8xf32> to vector<8x8xbf16>
    %cst_50 = arith.constant dense<0.000000e+00> : vector<8x16xf32>
    %99 = tpu.matmul %98, %84, %cst_50 {dimension_numbers = #tpu.dot_dimension_numbers<[1], [0], [0], [1], [0, 0, 1, 1], [], []>} : vector<8x8xbf16>, vector<8x16xbf16>, vector<8x16xf32> -> vector<8x16xf32>
    %100 = arith.truncf %99 : vector<8x16xf32> to vector<8x16xbf16>
    %c16 = arith.constant 16 : index
    %c0_51 = arith.constant 0 : index
    %101 = vector.load %arg13[%c16, %c0_51] : memref<64x64xbf16, #tpu.memory_space<vmem>>, vector<16x64xbf16>
    %cst_52 = arith.constant dense<0.000000e+00> : vector<8x64xf32>
    %102 = tpu.matmul %100, %101, %cst_52 {dimension_numbers = #tpu.dot_dimension_numbers<[1], [0], [0], [1], [0, 0, 1, 1], [], []>} : vector<8x16xbf16>, vector<16x64xbf16>, vector<8x64xf32> -> vector<8x64xf32>
    %103 = arith.addf %81, %102 : vector<8x64xf32>
    %104 = vector.extract_strided_slice %43 {offsets = [0, 32], sizes = [8, 16], strides = [1, 1]} : vector<8x64xbf16> to vector<8x16xbf16>
    %105 = vector.extract_strided_slice %49 {offsets = [0, 32], sizes = [8, 16], strides = [1, 1]} : vector<8x64xbf16> to vector<8x16xbf16>
    %106 = vector.extract_strided_slice %55 {offsets = [0, 32], sizes = [8, 16], strides = [1, 1]} : vector<8x64xbf16> to vector<8x16xbf16>
    %cst_53 = arith.constant dense<0.000000e+00> : vector<8x8xf32>
    %107 = tpu.matmul %104, %105, %cst_53 {dimension_numbers = #tpu.dot_dimension_numbers<[1], [1], [0], [0], [0, 0, 1, 0], [], []>} : vector<8x16xbf16>, vector<8x16xbf16>, vector<8x8xf32> -> vector<8x8xf32>
    %cst_54 = arith.constant -1.000000e+30 : f32
    %108 = vector.broadcast %cst_54 : f32 to vector<8x8xf32>
    %109 = arith.select %7, %107, %108 : vector<8x8xi1>, vector<8x8xf32>
    %cst_55 = arith.constant dense<0xFF800000> : vector<8xf32>
    %110 = vector.multi_reduction <maximumf>, %109, %cst_55 [1] : vector<8x8xf32> to vector<8xf32>
    %111 = vector.shape_cast %110 : vector<8xf32> to vector<8x1xf32>
    %112 = vector.broadcast %111 : vector<8x1xf32> to vector<8x8xf32>
    %113 = arith.subf %109, %112 : vector<8x8xf32>
    %114 = math.exp %113 : vector<8x8xf32>
    %cst_56 = arith.constant dense<0.000000e+00> : vector<8xf32>
    %115 = vector.multi_reduction <add>, %114, %cst_56 [1] : vector<8x8xf32> to vector<8xf32>
    %116 = vector.shape_cast %115 : vector<8xf32> to vector<8x1xf32>
    %117 = tpu.reciprocal %116 {approx = true} : vector<8x1xf32> -> vector<8x1xf32>
    %118 = vector.broadcast %117 : vector<8x1xf32> to vector<8x8xf32>
    %119 = arith.mulf %114, %118 : vector<8x8xf32>
    %120 = arith.truncf %119 : vector<8x8xf32> to vector<8x8xbf16>
    %cst_57 = arith.constant dense<0.000000e+00> : vector<8x16xf32>
    %121 = tpu.matmul %120, %106, %cst_57 {dimension_numbers = #tpu.dot_dimension_numbers<[1], [0], [0], [1], [0, 0, 1, 1], [], []>} : vector<8x8xbf16>, vector<8x16xbf16>, vector<8x16xf32> -> vector<8x16xf32>
    %122 = arith.truncf %121 : vector<8x16xf32> to vector<8x16xbf16>
    %c32 = arith.constant 32 : index
    %c0_58 = arith.constant 0 : index
    %123 = vector.load %arg13[%c32, %c0_58] : memref<64x64xbf16, #tpu.memory_space<vmem>>, vector<16x64xbf16>
    %cst_59 = arith.constant dense<0.000000e+00> : vector<8x64xf32>
    %124 = tpu.matmul %122, %123, %cst_59 {dimension_numbers = #tpu.dot_dimension_numbers<[1], [0], [0], [1], [0, 0, 1, 1], [], []>} : vector<8x16xbf16>, vector<16x64xbf16>, vector<8x64xf32> -> vector<8x64xf32>
    %125 = arith.addf %103, %124 : vector<8x64xf32>
    %126 = vector.extract_strided_slice %43 {offsets = [0, 48], sizes = [8, 16], strides = [1, 1]} : vector<8x64xbf16> to vector<8x16xbf16>
    %127 = vector.extract_strided_slice %49 {offsets = [0, 48], sizes = [8, 16], strides = [1, 1]} : vector<8x64xbf16> to vector<8x16xbf16>
    %128 = vector.extract_strided_slice %55 {offsets = [0, 48], sizes = [8, 16], strides = [1, 1]} : vector<8x64xbf16> to vector<8x16xbf16>
    %cst_60 = arith.constant dense<0.000000e+00> : vector<8x8xf32>
    %129 = tpu.matmul %126, %127, %cst_60 {dimension_numbers = #tpu.dot_dimension_numbers<[1], [1], [0], [0], [0, 0, 1, 0], [], []>} : vector<8x16xbf16>, vector<8x16xbf16>, vector<8x8xf32> -> vector<8x8xf32>
    %cst_61 = arith.constant -1.000000e+30 : f32
    %130 = vector.broadcast %cst_61 : f32 to vector<8x8xf32>
    %131 = arith.select %7, %129, %130 : vector<8x8xi1>, vector<8x8xf32>
    %cst_62 = arith.constant dense<0xFF800000> : vector<8xf32>
    %132 = vector.multi_reduction <maximumf>, %131, %cst_62 [1] : vector<8x8xf32> to vector<8xf32>
    %133 = vector.shape_cast %132 : vector<8xf32> to vector<8x1xf32>
    %134 = vector.broadcast %133 : vector<8x1xf32> to vector<8x8xf32>
    %135 = arith.subf %131, %134 : vector<8x8xf32>
    %136 = math.exp %135 : vector<8x8xf32>
    %cst_63 = arith.constant dense<0.000000e+00> : vector<8xf32>
    %137 = vector.multi_reduction <add>, %136, %cst_63 [1] : vector<8x8xf32> to vector<8xf32>
    %138 = vector.shape_cast %137 : vector<8xf32> to vector<8x1xf32>
    %139 = tpu.reciprocal %138 {approx = true} : vector<8x1xf32> -> vector<8x1xf32>
    %140 = vector.broadcast %139 : vector<8x1xf32> to vector<8x8xf32>
    %141 = arith.mulf %136, %140 : vector<8x8xf32>
    %142 = arith.truncf %141 : vector<8x8xf32> to vector<8x8xbf16>
    %cst_64 = arith.constant dense<0.000000e+00> : vector<8x16xf32>
    %143 = tpu.matmul %142, %128, %cst_64 {dimension_numbers = #tpu.dot_dimension_numbers<[1], [0], [0], [1], [0, 0, 1, 1], [], []>} : vector<8x8xbf16>, vector<8x16xbf16>, vector<8x16xf32> -> vector<8x16xf32>
    %144 = arith.truncf %143 : vector<8x16xf32> to vector<8x16xbf16>
    %c48 = arith.constant 48 : index
    %c0_65 = arith.constant 0 : index
    %145 = vector.load %arg13[%c48, %c0_65] : memref<64x64xbf16, #tpu.memory_space<vmem>>, vector<16x64xbf16>
    %cst_66 = arith.constant dense<0.000000e+00> : vector<8x64xf32>
    %146 = tpu.matmul %144, %145, %cst_66 {dimension_numbers = #tpu.dot_dimension_numbers<[1], [0], [0], [1], [0, 0, 1, 1], [], []>} : vector<8x16xbf16>, vector<16x64xbf16>, vector<8x64xf32> -> vector<8x64xf32>
    %147 = arith.addf %125, %146 : vector<8x64xf32>
    %148 = arith.addf %1, %147 : vector<8x64xf32>
    %c0_67 = arith.constant 0 : index
    %c0_68 = arith.constant 0 : index
    %149 = vector.load %arg15[%c0_67, %c0_68] : memref<1x64xf32, #tpu.memory_space<vmem>>, vector<1x64xf32>
    %c0_69 = arith.constant 0 : index
    %c0_70 = arith.constant 0 : index
    %150 = vector.load %arg16[%c0_69, %c0_70] : memref<1x64xf32, #tpu.memory_space<vmem>>, vector<1x64xf32>
    %cst_71 = arith.constant dense<0.000000e+00> : vector<8xf32>
    %151 = vector.multi_reduction <add>, %148, %cst_71 [1] : vector<8x64xf32> to vector<8xf32>
    %152 = vector.shape_cast %151 : vector<8xf32> to vector<8x1xf32>
    %cst_72 = arith.constant 6.400000e+01 : f32
    %153 = vector.broadcast %cst_72 : f32 to vector<8x1xf32>
    %154 = arith.divf %152, %153 : vector<8x1xf32>
    %155 = vector.broadcast %154 : vector<8x1xf32> to vector<8x64xf32>
    %156 = arith.subf %148, %155 : vector<8x64xf32>
    %157 = arith.mulf %156, %156 : vector<8x64xf32>
    %cst_73 = arith.constant dense<0.000000e+00> : vector<8xf32>
    %158 = vector.multi_reduction <add>, %157, %cst_73 [1] : vector<8x64xf32> to vector<8xf32>
    %159 = vector.shape_cast %158 : vector<8xf32> to vector<8x1xf32>
    %cst_74 = arith.constant 6.400000e+01 : f32
    %160 = vector.broadcast %cst_74 : f32 to vector<8x1xf32>
    %161 = arith.divf %159, %160 : vector<8x1xf32>
    %162 = vector.broadcast %154 : vector<8x1xf32> to vector<8x64xf32>
    %163 = arith.subf %148, %162 : vector<8x64xf32>
    %cst_75 = arith.constant 9.99999974E-6 : f32
    %164 = vector.broadcast %cst_75 : f32 to vector<8x1xf32>
    %165 = arith.addf %161, %164 : vector<8x1xf32>
    %166 = math.rsqrt %165 : vector<8x1xf32>
    %167 = vector.broadcast %166 : vector<8x1xf32> to vector<8x64xf32>
    %168 = arith.mulf %163, %167 : vector<8x64xf32>
    %169 = vector.broadcast %149 : vector<1x64xf32> to vector<8x64xf32>
    %170 = arith.mulf %168, %169 : vector<8x64xf32>
    %171 = vector.broadcast %150 : vector<1x64xf32> to vector<8x64xf32>
    %172 = arith.addf %170, %171 : vector<8x64xf32>
    %173 = arith.truncf %172 : vector<8x64xf32> to vector<8x64xbf16>
    %174 = arith.truncf %3 : vector<16x64xf32> to vector<16x64xbf16>
    %c0_76 = arith.constant 0 : index
    %c0_77 = arith.constant 0 : index
    %175 = vector.load %arg17[%c0_76, %c0_77] : memref<64x64xbf16, #tpu.memory_space<vmem>>, vector<64x64xbf16>
    %cst_78 = arith.constant dense<0.000000e+00> : vector<8x64xf32>
    %176 = tpu.matmul %173, %175, %cst_78 {dimension_numbers = #tpu.dot_dimension_numbers<[1], [0], [0], [1], [0, 0, 1, 1], [], []>} : vector<8x64xbf16>, vector<64x64xbf16>, vector<8x64xf32> -> vector<8x64xf32>
    %c0_79 = arith.constant 0 : index
    %c0_80 = arith.constant 0 : index
    %177 = vector.load %arg18[%c0_79, %c0_80] : memref<1x64xf32, #tpu.memory_space<vmem>>, vector<1x64xf32>
    %178 = vector.broadcast %177 : vector<1x64xf32> to vector<8x64xf32>
    %179 = arith.addf %176, %178 : vector<8x64xf32>
    %180 = arith.truncf %179 : vector<8x64xf32> to vector<8x64xbf16>
    %c0_81 = arith.constant 0 : index
    %c0_82 = arith.constant 0 : index
    %181 = vector.load %arg19[%c0_81, %c0_82] : memref<64x64xbf16, #tpu.memory_space<vmem>>, vector<64x64xbf16>
    %cst_83 = arith.constant dense<0.000000e+00> : vector<16x64xf32>
    %182 = tpu.matmul %174, %181, %cst_83 {dimension_numbers = #tpu.dot_dimension_numbers<[1], [0], [0], [1], [0, 0, 1, 1], [], []>} : vector<16x64xbf16>, vector<64x64xbf16>, vector<16x64xf32> -> vector<16x64xf32>
    %c0_84 = arith.constant 0 : index
    %c0_85 = arith.constant 0 : index
    %183 = vector.load %arg20[%c0_84, %c0_85] : memref<1x64xf32, #tpu.memory_space<vmem>>, vector<1x64xf32>
    %184 = vector.broadcast %183 : vector<1x64xf32> to vector<16x64xf32>
    %185 = arith.addf %182, %184 : vector<16x64xf32>
    %186 = arith.truncf %185 : vector<16x64xf32> to vector<16x64xbf16>
    %c0_86 = arith.constant 0 : index
    %c0_87 = arith.constant 0 : index
    %187 = vector.load %arg21[%c0_86, %c0_87] : memref<64x64xbf16, #tpu.memory_space<vmem>>, vector<64x64xbf16>
    %cst_88 = arith.constant dense<0.000000e+00> : vector<16x64xf32>
    %188 = tpu.matmul %174, %187, %cst_88 {dimension_numbers = #tpu.dot_dimension_numbers<[1], [0], [0], [1], [0, 0, 1, 1], [], []>} : vector<16x64xbf16>, vector<64x64xbf16>, vector<16x64xf32> -> vector<16x64xf32>
    %c0_89 = arith.constant 0 : index
    %c0_90 = arith.constant 0 : index
    %189 = vector.load %arg22[%c0_89, %c0_90] : memref<1x64xf32, #tpu.memory_space<vmem>>, vector<1x64xf32>
    %190 = vector.broadcast %189 : vector<1x64xf32> to vector<16x64xf32>
    %191 = arith.addf %188, %190 : vector<16x64xf32>
    %192 = arith.truncf %191 : vector<16x64xf32> to vector<16x64xbf16>
    %cst_91 = arith.constant 0.000000e+00 : f32
    %193 = vector.broadcast %cst_91 : f32 to vector<8x64xf32>
    %c0_92 = arith.constant 0 : index
    %c0_93 = arith.constant 0 : index
    %194 = vector.load %arg24[%c0_92, %c0_93] : memref<1x64xf32, #tpu.memory_space<vmem>>, vector<1x64xf32>
    %195 = vector.broadcast %194 : vector<1x64xf32> to vector<8x64xf32>
    %196 = arith.addf %193, %195 : vector<8x64xf32>
    %197 = vector.extract_strided_slice %180 {offsets = [0, 0], sizes = [8, 16], strides = [1, 1]} : vector<8x64xbf16> to vector<8x16xbf16>
    %198 = vector.extract_strided_slice %186 {offsets = [0, 0], sizes = [16, 16], strides = [1, 1]} : vector<16x64xbf16> to vector<16x16xbf16>
    %199 = vector.extract_strided_slice %192 {offsets = [0, 0], sizes = [16, 16], strides = [1, 1]} : vector<16x64xbf16> to vector<16x16xbf16>
    %cst_94 = arith.constant dense<0.000000e+00> : vector<8x16xf32>
    %200 = tpu.matmul %197, %198, %cst_94 {dimension_numbers = #tpu.dot_dimension_numbers<[1], [1], [0], [0], [0, 0, 1, 0], [], []>} : vector<8x16xbf16>, vector<16x16xbf16>, vector<8x16xf32> -> vector<8x16xf32>
    %cst_95 = arith.constant -1.000000e+30 : f32
    %201 = vector.shape_cast %11 : vector<1x16xi1> to vector<1x16xi1>
    %202 = vector.broadcast %201 : vector<1x16xi1> to vector<8x16xi1>
    %203 = vector.broadcast %cst_95 : f32 to vector<8x16xf32>
    %204 = arith.select %202, %200, %203 : vector<8x16xi1>, vector<8x16xf32>
    %cst_96 = arith.constant dense<0xFF800000> : vector<8xf32>
    %205 = vector.multi_reduction <maximumf>, %204, %cst_96 [1] : vector<8x16xf32> to vector<8xf32>
    %206 = vector.shape_cast %205 : vector<8xf32> to vector<8x1xf32>
    %207 = vector.broadcast %206 : vector<8x1xf32> to vector<8x16xf32>
    %208 = arith.subf %204, %207 : vector<8x16xf32>
    %209 = math.exp %208 : vector<8x16xf32>
    %cst_97 = arith.constant dense<0.000000e+00> : vector<8xf32>
    %210 = vector.multi_reduction <add>, %209, %cst_97 [1] : vector<8x16xf32> to vector<8xf32>
    %211 = vector.shape_cast %210 : vector<8xf32> to vector<8x1xf32>
    %212 = tpu.reciprocal %211 {approx = true} : vector<8x1xf32> -> vector<8x1xf32>
    %213 = vector.broadcast %212 : vector<8x1xf32> to vector<8x16xf32>
    %214 = arith.mulf %209, %213 : vector<8x16xf32>
    %215 = arith.truncf %214 : vector<8x16xf32> to vector<8x16xbf16>
    %cst_98 = arith.constant dense<0.000000e+00> : vector<8x16xf32>
    %216 = tpu.matmul %215, %199, %cst_98 {dimension_numbers = #tpu.dot_dimension_numbers<[1], [0], [0], [1], [0, 0, 1, 1], [], []>} : vector<8x16xbf16>, vector<16x16xbf16>, vector<8x16xf32> -> vector<8x16xf32>
    %217 = arith.truncf %216 : vector<8x16xf32> to vector<8x16xbf16>
    %c0_99 = arith.constant 0 : index
    %c0_100 = arith.constant 0 : index
    %218 = vector.load %arg23[%c0_99, %c0_100] : memref<64x64xbf16, #tpu.memory_space<vmem>>, vector<16x64xbf16>
    %cst_101 = arith.constant dense<0.000000e+00> : vector<8x64xf32>
    %219 = tpu.matmul %217, %218, %cst_101 {dimension_numbers = #tpu.dot_dimension_numbers<[1], [0], [0], [1], [0, 0, 1, 1], [], []>} : vector<8x16xbf16>, vector<16x64xbf16>, vector<8x64xf32> -> vector<8x64xf32>
    %220 = arith.addf %196, %219 : vector<8x64xf32>
    %221 = vector.extract_strided_slice %180 {offsets = [0, 16], sizes = [8, 16], strides = [1, 1]} : vector<8x64xbf16> to vector<8x16xbf16>
    %222 = vector.extract_strided_slice %186 {offsets = [0, 16], sizes = [16, 16], strides = [1, 1]} : vector<16x64xbf16> to vector<16x16xbf16>
    %223 = vector.extract_strided_slice %192 {offsets = [0, 16], sizes = [16, 16], strides = [1, 1]} : vector<16x64xbf16> to vector<16x16xbf16>
    %cst_102 = arith.constant dense<0.000000e+00> : vector<8x16xf32>
    %224 = tpu.matmul %221, %222, %cst_102 {dimension_numbers = #tpu.dot_dimension_numbers<[1], [1], [0], [0], [0, 0, 1, 0], [], []>} : vector<8x16xbf16>, vector<16x16xbf16>, vector<8x16xf32> -> vector<8x16xf32>
    %cst_103 = arith.constant -1.000000e+30 : f32
    %225 = vector.shape_cast %11 : vector<1x16xi1> to vector<1x16xi1>
    %226 = vector.broadcast %225 : vector<1x16xi1> to vector<8x16xi1>
    %227 = vector.broadcast %cst_103 : f32 to vector<8x16xf32>
    %228 = arith.select %226, %224, %227 : vector<8x16xi1>, vector<8x16xf32>
    %cst_104 = arith.constant dense<0xFF800000> : vector<8xf32>
    %229 = vector.multi_reduction <maximumf>, %228, %cst_104 [1] : vector<8x16xf32> to vector<8xf32>
    %230 = vector.shape_cast %229 : vector<8xf32> to vector<8x1xf32>
    %231 = vector.broadcast %230 : vector<8x1xf32> to vector<8x16xf32>
    %232 = arith.subf %228, %231 : vector<8x16xf32>
    %233 = math.exp %232 : vector<8x16xf32>
    %cst_105 = arith.constant dense<0.000000e+00> : vector<8xf32>
    %234 = vector.multi_reduction <add>, %233, %cst_105 [1] : vector<8x16xf32> to vector<8xf32>
    %235 = vector.shape_cast %234 : vector<8xf32> to vector<8x1xf32>
    %236 = tpu.reciprocal %235 {approx = true} : vector<8x1xf32> -> vector<8x1xf32>
    %237 = vector.broadcast %236 : vector<8x1xf32> to vector<8x16xf32>
    %238 = arith.mulf %233, %237 : vector<8x16xf32>
    %239 = arith.truncf %238 : vector<8x16xf32> to vector<8x16xbf16>
    %cst_106 = arith.constant dense<0.000000e+00> : vector<8x16xf32>
    %240 = tpu.matmul %239, %223, %cst_106 {dimension_numbers = #tpu.dot_dimension_numbers<[1], [0], [0], [1], [0, 0, 1, 1], [], []>} : vector<8x16xbf16>, vector<16x16xbf16>, vector<8x16xf32> -> vector<8x16xf32>
    %241 = arith.truncf %240 : vector<8x16xf32> to vector<8x16xbf16>
    %c16_107 = arith.constant 16 : index
    %c0_108 = arith.constant 0 : index
    %242 = vector.load %arg23[%c16_107, %c0_108] : memref<64x64xbf16, #tpu.memory_space<vmem>>, vector<16x64xbf16>
    %cst_109 = arith.constant dense<0.000000e+00> : vector<8x64xf32>
    %243 = tpu.matmul %241, %242, %cst_109 {dimension_numbers = #tpu.dot_dimension_numbers<[1], [0], [0], [1], [0, 0, 1, 1], [], []>} : vector<8x16xbf16>, vector<16x64xbf16>, vector<8x64xf32> -> vector<8x64xf32>
    %244 = arith.addf %220, %243 : vector<8x64xf32>
    %245 = vector.extract_strided_slice %180 {offsets = [0, 32], sizes = [8, 16], strides = [1, 1]} : vector<8x64xbf16> to vector<8x16xbf16>
    %246 = vector.extract_strided_slice %186 {offsets = [0, 32], sizes = [16, 16], strides = [1, 1]} : vector<16x64xbf16> to vector<16x16xbf16>
    %247 = vector.extract_strided_slice %192 {offsets = [0, 32], sizes = [16, 16], strides = [1, 1]} : vector<16x64xbf16> to vector<16x16xbf16>
    %cst_110 = arith.constant dense<0.000000e+00> : vector<8x16xf32>
    %248 = tpu.matmul %245, %246, %cst_110 {dimension_numbers = #tpu.dot_dimension_numbers<[1], [1], [0], [0], [0, 0, 1, 0], [], []>} : vector<8x16xbf16>, vector<16x16xbf16>, vector<8x16xf32> -> vector<8x16xf32>
    %cst_111 = arith.constant -1.000000e+30 : f32
    %249 = vector.shape_cast %11 : vector<1x16xi1> to vector<1x16xi1>
    %250 = vector.broadcast %249 : vector<1x16xi1> to vector<8x16xi1>
    %251 = vector.broadcast %cst_111 : f32 to vector<8x16xf32>
    %252 = arith.select %250, %248, %251 : vector<8x16xi1>, vector<8x16xf32>
    %cst_112 = arith.constant dense<0xFF800000> : vector<8xf32>
    %253 = vector.multi_reduction <maximumf>, %252, %cst_112 [1] : vector<8x16xf32> to vector<8xf32>
    %254 = vector.shape_cast %253 : vector<8xf32> to vector<8x1xf32>
    %255 = vector.broadcast %254 : vector<8x1xf32> to vector<8x16xf32>
    %256 = arith.subf %252, %255 : vector<8x16xf32>
    %257 = math.exp %256 : vector<8x16xf32>
    %cst_113 = arith.constant dense<0.000000e+00> : vector<8xf32>
    %258 = vector.multi_reduction <add>, %257, %cst_113 [1] : vector<8x16xf32> to vector<8xf32>
    %259 = vector.shape_cast %258 : vector<8xf32> to vector<8x1xf32>
    %260 = tpu.reciprocal %259 {approx = true} : vector<8x1xf32> -> vector<8x1xf32>
    %261 = vector.broadcast %260 : vector<8x1xf32> to vector<8x16xf32>
    %262 = arith.mulf %257, %261 : vector<8x16xf32>
    %263 = arith.truncf %262 : vector<8x16xf32> to vector<8x16xbf16>
    %cst_114 = arith.constant dense<0.000000e+00> : vector<8x16xf32>
    %264 = tpu.matmul %263, %247, %cst_114 {dimension_numbers = #tpu.dot_dimension_numbers<[1], [0], [0], [1], [0, 0, 1, 1], [], []>} : vector<8x16xbf16>, vector<16x16xbf16>, vector<8x16xf32> -> vector<8x16xf32>
    %265 = arith.truncf %264 : vector<8x16xf32> to vector<8x16xbf16>
    %c32_115 = arith.constant 32 : index
    %c0_116 = arith.constant 0 : index
    %266 = vector.load %arg23[%c32_115, %c0_116] : memref<64x64xbf16, #tpu.memory_space<vmem>>, vector<16x64xbf16>
    %cst_117 = arith.constant dense<0.000000e+00> : vector<8x64xf32>
    %267 = tpu.matmul %265, %266, %cst_117 {dimension_numbers = #tpu.dot_dimension_numbers<[1], [0], [0], [1], [0, 0, 1, 1], [], []>} : vector<8x16xbf16>, vector<16x64xbf16>, vector<8x64xf32> -> vector<8x64xf32>
    %268 = arith.addf %244, %267 : vector<8x64xf32>
    %269 = vector.extract_strided_slice %180 {offsets = [0, 48], sizes = [8, 16], strides = [1, 1]} : vector<8x64xbf16> to vector<8x16xbf16>
    %270 = vector.extract_strided_slice %186 {offsets = [0, 48], sizes = [16, 16], strides = [1, 1]} : vector<16x64xbf16> to vector<16x16xbf16>
    %271 = vector.extract_strided_slice %192 {offsets = [0, 48], sizes = [16, 16], strides = [1, 1]} : vector<16x64xbf16> to vector<16x16xbf16>
    %cst_118 = arith.constant dense<0.000000e+00> : vector<8x16xf32>
    %272 = tpu.matmul %269, %270, %cst_118 {dimension_numbers = #tpu.dot_dimension_numbers<[1], [1], [0], [0], [0, 0, 1, 0], [], []>} : vector<8x16xbf16>, vector<16x16xbf16>, vector<8x16xf32> -> vector<8x16xf32>
    %cst_119 = arith.constant -1.000000e+30 : f32
    %273 = vector.shape_cast %11 : vector<1x16xi1> to vector<1x16xi1>
    %274 = vector.broadcast %273 : vector<1x16xi1> to vector<8x16xi1>
    %275 = vector.broadcast %cst_119 : f32 to vector<8x16xf32>
    %276 = arith.select %274, %272, %275 : vector<8x16xi1>, vector<8x16xf32>
    %cst_120 = arith.constant dense<0xFF800000> : vector<8xf32>
    %277 = vector.multi_reduction <maximumf>, %276, %cst_120 [1] : vector<8x16xf32> to vector<8xf32>
    %278 = vector.shape_cast %277 : vector<8xf32> to vector<8x1xf32>
    %279 = vector.broadcast %278 : vector<8x1xf32> to vector<8x16xf32>
    %280 = arith.subf %276, %279 : vector<8x16xf32>
    %281 = math.exp %280 : vector<8x16xf32>
    %cst_121 = arith.constant dense<0.000000e+00> : vector<8xf32>
    %282 = vector.multi_reduction <add>, %281, %cst_121 [1] : vector<8x16xf32> to vector<8xf32>
    %283 = vector.shape_cast %282 : vector<8xf32> to vector<8x1xf32>
    %284 = tpu.reciprocal %283 {approx = true} : vector<8x1xf32> -> vector<8x1xf32>
    %285 = vector.broadcast %284 : vector<8x1xf32> to vector<8x16xf32>
    %286 = arith.mulf %281, %285 : vector<8x16xf32>
    %287 = arith.truncf %286 : vector<8x16xf32> to vector<8x16xbf16>
    %cst_122 = arith.constant dense<0.000000e+00> : vector<8x16xf32>
    %288 = tpu.matmul %287, %271, %cst_122 {dimension_numbers = #tpu.dot_dimension_numbers<[1], [0], [0], [1], [0, 0, 1, 1], [], []>} : vector<8x16xbf16>, vector<16x16xbf16>, vector<8x16xf32> -> vector<8x16xf32>
    %289 = arith.truncf %288 : vector<8x16xf32> to vector<8x16xbf16>
    %c48_123 = arith.constant 48 : index
    %c0_124 = arith.constant 0 : index
    %290 = vector.load %arg23[%c48_123, %c0_124] : memref<64x64xbf16, #tpu.memory_space<vmem>>, vector<16x64xbf16>
    %cst_125 = arith.constant dense<0.000000e+00> : vector<8x64xf32>
    %291 = tpu.matmul %289, %290, %cst_125 {dimension_numbers = #tpu.dot_dimension_numbers<[1], [0], [0], [1], [0, 0, 1, 1], [], []>} : vector<8x16xbf16>, vector<16x64xbf16>, vector<8x64xf32> -> vector<8x64xf32>
    %292 = arith.addf %268, %291 : vector<8x64xf32>
    %293 = arith.addf %148, %292 : vector<8x64xf32>
    %c0_126 = arith.constant 0 : index
    %c0_127 = arith.constant 0 : index
    %294 = vector.load %arg25[%c0_126, %c0_127] : memref<1x64xf32, #tpu.memory_space<vmem>>, vector<1x64xf32>
    %c0_128 = arith.constant 0 : index
    %c0_129 = arith.constant 0 : index
    %295 = vector.load %arg26[%c0_128, %c0_129] : memref<1x64xf32, #tpu.memory_space<vmem>>, vector<1x64xf32>
    %cst_130 = arith.constant dense<0.000000e+00> : vector<8xf32>
    %296 = vector.multi_reduction <add>, %293, %cst_130 [1] : vector<8x64xf32> to vector<8xf32>
    %297 = vector.shape_cast %296 : vector<8xf32> to vector<8x1xf32>
    %cst_131 = arith.constant 6.400000e+01 : f32
    %298 = vector.broadcast %cst_131 : f32 to vector<8x1xf32>
    %299 = arith.divf %297, %298 : vector<8x1xf32>
    %300 = vector.broadcast %299 : vector<8x1xf32> to vector<8x64xf32>
    %301 = arith.subf %293, %300 : vector<8x64xf32>
    %302 = arith.mulf %301, %301 : vector<8x64xf32>
    %cst_132 = arith.constant dense<0.000000e+00> : vector<8xf32>
    %303 = vector.multi_reduction <add>, %302, %cst_132 [1] : vector<8x64xf32> to vector<8xf32>
    %304 = vector.shape_cast %303 : vector<8xf32> to vector<8x1xf32>
    %cst_133 = arith.constant 6.400000e+01 : f32
    %305 = vector.broadcast %cst_133 : f32 to vector<8x1xf32>
    %306 = arith.divf %304, %305 : vector<8x1xf32>
    %307 = vector.broadcast %299 : vector<8x1xf32> to vector<8x64xf32>
    %308 = arith.subf %293, %307 : vector<8x64xf32>
    %cst_134 = arith.constant 9.99999974E-6 : f32
    %309 = vector.broadcast %cst_134 : f32 to vector<8x1xf32>
    %310 = arith.addf %306, %309 : vector<8x1xf32>
    %311 = math.rsqrt %310 : vector<8x1xf32>
    %312 = vector.broadcast %311 : vector<8x1xf32> to vector<8x64xf32>
    %313 = arith.mulf %308, %312 : vector<8x64xf32>
    %314 = vector.broadcast %294 : vector<1x64xf32> to vector<8x64xf32>
    %315 = arith.mulf %313, %314 : vector<8x64xf32>
    %316 = vector.broadcast %295 : vector<1x64xf32> to vector<8x64xf32>
    %317 = arith.addf %315, %316 : vector<8x64xf32>
    %318 = arith.truncf %317 : vector<8x64xf32> to vector<8x64xbf16>
    %c0_135 = arith.constant 0 : index
    %c0_136 = arith.constant 0 : index
    %319 = vector.load %arg27[%c0_135, %c0_136] : memref<64x128xbf16, #tpu.memory_space<vmem>>, vector<64x128xbf16>
    %cst_137 = arith.constant dense<0.000000e+00> : vector<8x128xf32>
    %320 = tpu.matmul %318, %319, %cst_137 {dimension_numbers = #tpu.dot_dimension_numbers<[1], [0], [0], [1], [0, 0, 1, 1], [], []>} : vector<8x64xbf16>, vector<64x128xbf16>, vector<8x128xf32> -> vector<8x128xf32>
    %c0_138 = arith.constant 0 : index
    %c0_139 = arith.constant 0 : index
    %321 = vector.load %arg28[%c0_138, %c0_139] : memref<1x128xf32, #tpu.memory_space<vmem>>, vector<1x128xf32>
    %322 = vector.broadcast %321 : vector<1x128xf32> to vector<8x128xf32>
    %323 = arith.addf %320, %322 : vector<8x128xf32>
    %cst_140 = arith.constant 0.000000e+00 : f32
    %324 = vector.broadcast %cst_140 : f32 to vector<8x128xf32>
    %325 = arith.maximumf %323, %324 : vector<8x128xf32>
    %326 = arith.truncf %325 : vector<8x128xf32> to vector<8x128xbf16>
    %c0_141 = arith.constant 0 : index
    %c0_142 = arith.constant 0 : index
    %327 = vector.load %arg29[%c0_141, %c0_142] : memref<128x64xbf16, #tpu.memory_space<vmem>>, vector<128x64xbf16>
    %cst_143 = arith.constant dense<0.000000e+00> : vector<8x64xf32>
    %328 = tpu.matmul %326, %327, %cst_143 {dimension_numbers = #tpu.dot_dimension_numbers<[1], [0], [0], [1], [0, 0, 1, 1], [], []>} : vector<8x128xbf16>, vector<128x64xbf16>, vector<8x64xf32> -> vector<8x64xf32>
    %c0_144 = arith.constant 0 : index
    %c0_145 = arith.constant 0 : index
    %329 = vector.load %arg30[%c0_144, %c0_145] : memref<1x64xf32, #tpu.memory_space<vmem>>, vector<1x64xf32>
    %330 = vector.broadcast %329 : vector<1x64xf32> to vector<8x64xf32>
    %331 = arith.addf %328, %330 : vector<8x64xf32>
    %332 = arith.addf %293, %331 : vector<8x64xf32>
    %c0_146 = arith.constant 0 : index
    %c0_147 = arith.constant 0 : index
    %c0_148 = arith.constant 0 : index
    %333 = vector.load %arg31[%c0_146, %c0_147, %c0_148] : memref<1x8x64xf32, #tpu.memory_space<vmem>>, vector<1x8x64xf32>
    %334 = vector.shape_cast %333 : vector<1x8x64xf32> to vector<8x64xf32>
    %335 = vector.shape_cast %332 : vector<8x64xf32> to vector<1x8x64xf32>
    tpu.vector_store %arg31[%c0_146, %c0_147, %c0_148], %335 {strides = array<i32>} : memref<1x8x64xf32, #tpu.memory_space<vmem>>, vector<1x8x64xf32>,
    return
  }
  func.func @transform_0(%arg0: i32) -> (i32, i32, i32) {
    %c0_i32 = arith.constant 0 : i32
    %c0_i32_0 = arith.constant 0 : i32
    %c0_i32_1 = arith.constant 0 : i32
    return %arg0, %c0_i32, %c0_i32_0 : i32, i32, i32
  }
  func.func @transform_1(%arg0: i32) -> (i32, i32, i32) {
    %c0_i32 = arith.constant 0 : i32
    %c0_i32_0 = arith.constant 0 : i32
    %c0_i32_1 = arith.constant 0 : i32
    return %arg0, %c0_i32, %c0_i32_0 : i32, i32, i32
  }
  func.func @transform_2(%arg0: i32) -> (i32, i32, i32) {
    %c0_i32 = arith.constant 0 : i32
    %c0_i32_0 = arith.constant 0 : i32
    %c0_i32_1 = arith.constant 0 : i32
    return %arg0, %c0_i32, %c0_i32_0 : i32, i32, i32
  }
  func.func @transform_3(%arg0: i32) -> (i32, i32, i32) {
    %c0_i32 = arith.constant 0 : i32
    %c0_i32_0 = arith.constant 0 : i32
    %c0_i32_1 = arith.constant 0 : i32
    return %arg0, %c0_i32, %c0_i32_0 : i32, i32, i32
  }
  func.func @transform_4(%arg0: i32) -> (i32, i32) {
    %c0_i32 = arith.constant 0 : i32
    %c0_i32_0 = arith.constant 0 : i32
    %c0_i32_1 = arith.constant 0 : i32
    return %c0_i32, %c0_i32_0 : i32, i32
  }
  func.func @transform_5(%arg0: i32) -> (i32, i32) {
    %c0_i32 = arith.constant 0 : i32
    %c0_i32_0 = arith.constant 0 : i32
    %c0_i32_1 = arith.constant 0 : i32
    return %c0_i32, %c0_i32_0 : i32, i32
  }
  func.func @transform_6(%arg0: i32) -> (i32, i32) {
    %c0_i32 = arith.constant 0 : i32
    %c0_i32_0 = arith.constant 0 : i32
    %c0_i32_1 = arith.constant 0 : i32
    return %c0_i32, %c0_i32_0 : i32, i32
  }
  func.func @transform_7(%arg0: i32) -> (i32, i32) {
    %c0_i32 = arith.constant 0 : i32
    %c0_i32_0 = arith.constant 0 : i32
    %c0_i32_1 = arith.constant 0 : i32
    return %c0_i32, %c0_i32_0 : i32, i32
  }
  func.func @transform_8(%arg0: i32) -> (i32, i32) {
    %c0_i32 = arith.constant 0 : i32
    %c0_i32_0 = arith.constant 0 : i32
    %c0_i32_1 = arith.constant 0 : i32
    return %c0_i32, %c0_i32_0 : i32, i32
  }
  func.func @transform_9(%arg0: i32) -> (i32, i32) {
    %c0_i32 = arith.constant 0 : i32
    %c0_i32_0 = arith.constant 0 : i32
    %c0_i32_1 = arith.constant 0 : i32
    return %c0_i32, %c0_i32_0 : i32, i32
  }
  func.func @transform_10(%arg0: i32) -> (i32, i32) {
    %c0_i32 = arith.constant 0 : i32
    %c0_i32_0 = arith.constant 0 : i32
    %c0_i32_1 = arith.constant 0 : i32
    return %c0_i32, %c0_i32_0 : i32, i32
  }
  func.func @transform_11(%arg0: i32) -> (i32, i32) {
    %c0_i32 = arith.constant 0 : i32
    %c0_i32_0 = arith.constant 0 : i32
    %c0_i32_1 = arith.constant 0 : i32
    return %c0_i32, %c0_i32_0 : i32, i32
  }
  func.func @transform_12(%arg0: i32) -> (i32, i32) {
    %c0_i32 = arith.constant 0 : i32
    %c0_i32_0 = arith.constant 0 : i32
    %c0_i32_1 = arith.constant 0 : i32
    return %c0_i32, %c0_i32_0 : i32, i32
  }
  func.func @transform_13(%arg0: i32) -> (i32, i32) {
    %c0_i32 = arith.constant 0 : i32
    %c0_i32_0 = arith.constant 0 : i32
    %c0_i32_1 = arith.constant 0 : i32
    return %c0_i32, %c0_i32_0 : i32, i32
  }
  func.func @transform_14(%arg0: i32) -> (i32, i32) {
    %c0_i32 = arith.constant 0 : i32
    %c0_i32_0 = arith.constant 0 : i32
    %c0_i32_1 = arith.constant 0 : i32
    return %c0_i32, %c0_i32_0 : i32, i32
  }
  func.func @transform_15(%arg0: i32) -> (i32, i32) {
    %c0_i32 = arith.constant 0 : i32
    %c0_i32_0 = arith.constant 0 : i32
    %c0_i32_1 = arith.constant 0 : i32
    return %c0_i32, %c0_i32_0 : i32, i32
  }
  func.func @transform_16(%arg0: i32) -> (i32, i32) {
    %c0_i32 = arith.constant 0 : i32
    %c0_i32_0 = arith.constant 0 : i32
    %c0_i32_1 = arith.constant 0 : i32
    return %c0_i32, %c0_i32_0 : i32, i32
  }
  func.func @transform_17(%arg0: i32) -> (i32, i32) {
    %c0_i32 = arith.constant 0 : i32
    %c0_i32_0 = arith.constant 0 : i32
    %c0_i32_1 = arith.constant 0 : i32
    return %c0_i32, %c0_i32_0 : i32, i32
  }
  func.func @transform_18(%arg0: i32) -> (i32, i32) {
    %c0_i32 = arith.constant 0 : i32
    %c0_i32_0 = arith.constant 0 : i32
    %c0_i32_1 = arith.constant 0 : i32
    return %c0_i32, %c0_i32_0 : i32, i32
  }
  func.func @transform_19(%arg0: i32) -> (i32, i32) {
    %c0_i32 = arith.constant 0 : i32
    %c0_i32_0 = arith.constant 0 : i32
    %c0_i32_1 = arith.constant 0 : i32
    return %c0_i32, %c0_i32_0 : i32, i32
  }
  func.func @transform_20(%arg0: i32) -> (i32, i32) {
    %c0_i32 = arith.constant 0 : i32
    %c0_i32_0 = arith.constant 0 : i32
    %c0_i32_1 = arith.constant 0 : i32
    return %c0_i32, %c0_i32_0 : i32, i32
  }
  func.func @transform_21(%arg0: i32) -> (i32, i32) {
    %c0_i32 = arith.constant 0 : i32
    %c0_i32_0 = arith.constant 0 : i32
    %c0_i32_1 = arith.constant 0 : i32
    return %c0_i32, %c0_i32_0 : i32, i32
  }
  func.func @transform_22(%arg0: i32) -> (i32, i32) {
    %c0_i32 = arith.constant 0 : i32
    %c0_i32_0 = arith.constant 0 : i32
    %c0_i32_1 = arith.constant 0 : i32
    return %c0_i32, %c0_i32_0 : i32, i32
  }
  func.func @transform_23(%arg0: i32) -> (i32, i32) {
    %c0_i32 = arith.constant 0 : i32
    %c0_i32_0 = arith.constant 0 : i32
    %c0_i32_1 = arith.constant 0 : i32
    return %c0_i32, %c0_i32_0 : i32, i32
  }
  func.func @transform_24(%arg0: i32) -> (i32, i32) {
    %c0_i32 = arith.constant 0 : i32
    %c0_i32_0 = arith.constant 0 : i32
    %c0_i32_1 = arith.constant 0 : i32
    return %c0_i32, %c0_i32_0 : i32, i32
  }
  func.func @transform_25(%arg0: i32) -> (i32, i32) {
    %c0_i32 = arith.constant 0 : i32
    %c0_i32_0 = arith.constant 0 : i32
    %c0_i32_1 = arith.constant 0 : i32
    return %c0_i32, %c0_i32_0 : i32, i32
  }
  func.func @transform_26(%arg0: i32) -> (i32, i32) {
    %c0_i32 = arith.constant 0 : i32
    %c0_i32_0 = arith.constant 0 : i32
    %c0_i32_1 = arith.constant 0 : i32
    return %c0_i32, %c0_i32_0 : i32, i32
  }
  func.func @transform_27(%arg0: i32) -> (i32, i32) {
    %c0_i32 = arith.constant 0 : i32
    %c0_i32_0 = arith.constant 0 : i32
    %c0_i32_1 = arith.constant 0 : i32
    return %c0_i32, %c0_i32_0 : i32, i32
  }
  func.func @transform_28(%arg0: i32) -> (i32, i32) {
    %c0_i32 = arith.constant 0 : i32
    %c0_i32_0 = arith.constant 0 : i32
    %c0_i32_1 = arith.constant 0 : i32
    return %c0_i32, %c0_i32_0 : i32, i32
  }
  func.func @transform_29(%arg0: i32) -> (i32, i32) {
    %c0_i32 = arith.constant 0 : i32
    %c0_i32_0 = arith.constant 0 : i32
    %c0_i32_1 = arith.constant 0 : i32
    return %c0_i32, %c0_i32_0 : i32, i32
  }
  func.func @transform_30(%arg0: i32) -> (i32, i32, i32) {
    %c0_i32 = arith.constant 0 : i32
    %c0_i32_0 = arith.constant 0 : i32
    %c0_i32_1 = arith.constant 0 : i32
    return %arg0, %c0_i32, %c0_i32_0 : i32, i32, i32
  }
}

</mosaic_0001>

<llo_original>
// kernel: tpu_custom_call.1
$region0: #{tpu_custom_call.1}
  #allocation0 [shape = 'u32[]', space=smem, size = 0x4, offset = 0x4, fixed_abs, tag = 'smem constant byte address 0x4 - core index']
  #allocation1 [shape = 'u32[144,128]{1,0:T(1,128)}', space=vmem, size = 0x12000, scoped, tag = 'internal scratch']
  %s0 = inlined_call_operand.smem [shape: u32[31], index: -1, kind: input, shape index: {}]
  %s1 = sld [smem:[%s0]]
  %s2 = scalar_lea.smem %s0, 1
  %s3 = sld [smem:[%s2]]
  %s4 = scalar_lea.smem %s0, 2
  %s5 = sld [smem:[%s4]]
  %s6 = scalar_lea.smem %s0, 3
  %s7 = sld [smem:[%s6]]
  %s8 = scalar_lea.smem %s0, 4
  %s9 = sld [smem:[%s8]]
  %s10 = scalar_lea.smem %s0, 5
  %s11 = sld [smem:[%s10]]
  %s12 = scalar_lea.smem %s0, 6
  %s13 = sld [smem:[%s12]]
  %s14 = scalar_lea.smem %s0, 7
  %s15 = sld [smem:[%s14]]
  %s16 = scalar_lea.smem %s0, 8
  %s17 = sld [smem:[%s16]]
  %s18 = scalar_lea.smem %s0, 9
  %s19 = sld [smem:[%s18]]
  %s20 = scalar_lea.smem %s0, 10
  %s21 = sld [smem:[%s20]]
  %s22 = scalar_lea.smem %s0, 11
  %s23 = sld [smem:[%s22]]
  %s24 = scalar_lea.smem %s0, 12
  %s25 = sld [smem:[%s24]]
  %s26 = scalar_lea.smem %s0, 13
  %s27 = sld [smem:[%s26]]
  %s28 = scalar_lea.smem %s0, 14
  %s29 = sld [smem:[%s28]]
  %s30 = scalar_lea.smem %s0, 15
  %s31 = sld [smem:[%s30]]
  %s32 = scalar_lea.smem %s0, 16
  %s33 = sld [smem:[%s32]]
  %s34 = scalar_lea.smem %s0, 17
  %s35 = sld [smem:[%s34]]
  %s36 = scalar_lea.smem %s0, 18
  %s37 = sld [smem:[%s36]]
  %s38 = scalar_lea.smem %s0, 19
  %s39 = sld [smem:[%s38]]
  %s40 = scalar_lea.smem %s0, 20
  %s41 = sld [smem:[%s40]]
  %s42 = scalar_lea.smem %s0, 21
  %s43 = sld [smem:[%s42]]
  %s44 = scalar_lea.smem %s0, 22
  %s45 = sld [smem:[%s44]]
  %s46 = scalar_lea.smem %s0, 23
  %s47 = sld [smem:[%s46]]
  %s48 = scalar_lea.smem %s0, 24
  %s49 = sld [smem:[%s48]]
  %s50 = scalar_lea.smem %s0, 25
  %s51 = sld [smem:[%s50]]
  %s52 = scalar_lea.smem %s0, 26
  %s53 = sld [smem:[%s52]]
  %s54 = scalar_lea.smem %s0, 27
  %s55 = sld [smem:[%s54]]
  %s56 = scalar_lea.smem %s0, 28
  %s57 = sld [smem:[%s56]]
  %s58 = scalar_lea.smem %s0, 29
  %s59 = sld [smem:[%s58]]
  %s60 = scalar_lea.smem %s0, 30
  %s61 = sld [smem:[%s60]]
  %s62 = sld [smem:[#allocation0]]
  $region185: #{tpu_custom_call.1} parent=0
    _
  %s64 = ssub.s32 1, %s62
  %s65 = scalar_select 0, %s64, %s62
  $region1: #{tpu_custom_call.1} parent=0
    #allocation2 [shape = 'u8[8192]{0}', space=vmem, size = 0x2000, scoped, tag = 'input window, operand 0']
    #allocation3 [shape = 's32[2]{0}', space=sflag, size = 0x8, scoped, tag = 'scoped memory for tpu_custom_call.1']
    #allocation4 [shape = 's32[2]{0}', space=sflag, size = 0x8, scoped, tag = 'scoped memory for tpu_custom_call.1']
    #allocation5 [shape = 'u8[16384]{0}', space=vmem, size = 0x4000, scoped, tag = 'input window, operand 10, single buffered']
    #allocation6 [shape = 's32[1]{0}', space=sflag, size = 0x4, scoped, tag = 'scoped memory for tpu_custom_call.1']
    #allocation7 [shape = 'u8[16384]{0}', space=vmem, size = 0x4000, scoped, tag = 'input window, operand 12, single buffered']
    #allocation8 [shape = 'u8[16384]{0}', space=vmem, size = 0x4000, scoped, tag = 'input window, operand 16, single buffered']
    #allocation9 [shape = 's32[1]{0}', space=sflag, size = 0x4, scoped, tag = 'scoped memory for tpu_custom_call.1']
    #allocation10 [shape = 'u8[16384]{0}', space=vmem, size = 0x4000, scoped, tag = 'input window, operand 18, single buffered']
    #allocation11 [shape = 'u8[16384]{0}', space=vmem, size = 0x4000, scoped, tag = 'input window, operand 20, single buffered']
    #allocation12 [shape = 's32[1]{0}', space=sflag, size = 0x4, scoped, tag = 'scoped memory for tpu_custom_call.1']
    #allocation13 [shape = 'u8[16384]{0}', space=vmem, size = 0x4000, scoped, tag = 'input window, operand 22, single buffered']
    #allocation14 [shape = 'u8[16384]{0}', space=vmem, size = 0x4000, scoped, tag = 'input window, operand 26, single buffered']
    #allocation15 [shape = 's32[1]{0}', space=sflag, size = 0x4, scoped, tag = 'scoped memory for tpu_custom_call.1']
    #allocation16 [shape = 'u8[8192]{0}', space=vmem, size = 0x2000, scoped, tag = 'output window, operand 0']
    %66 = vsyncpa [#allocation3], 0
    %s67 = scalar_lea.sflag [#allocation3], 1
    %68 = vsyncpa %s67, 0
    %69 = vsyncpa [#allocation6], 0
    %70 = vsyncpa [#allocation9], 0
    %71 = vsyncpa [#allocation12], 0
    %72 = vsyncpa [#allocation15], 0
    %73 = vsyncpa [#allocation4], 0
    %s74 = scalar_lea.sflag [#allocation4], 1
    %75 = vsyncpa %s74, 0
    loop: start=0, step=1, limit=4
    $region2: #{tpu_custom_call.1} parent=1 // loop_pre_header
      _
    $region3: #{tpu_custom_call.1} parent=1 // loop_header
      %s77 = sphi 0, %s81
      %p78 = scmp.ge.s32.totalorder %s77, 4
      %s87 = sphi 0, %s89
      %s90 = sphi 0, %s87
      %s91 = sphi 0, %s90
      %s107 = sphi 0, %s91
      %s113 = sphi 0, %s115
      %s116 = sphi 0, %s113
      %s117 = sphi 0, %s116
      %s133 = sphi 0, %s117
      %s139 = sphi 0, %s141
      %s142 = sphi 0, %s139
      %s143 = sphi 0, %s142
      %s159 = sphi 0, %s143
      %s165 = sphi 0, %s167
      %s168 = sphi 0, %s165
      %s169 = sphi 0, %s168
      %s185 = sphi 0, %s169
      %s189 = sphi 0, %s189
      %s191 = sphi 0, %s189
      %s192 = sphi 0, %s191
      %s206 = sphi 0, %s192
      %s210 = sphi 0, %s210
      %s212 = sphi 0, %s210
      %s213 = sphi 0, %s212
      %s227 = sphi 0, %s213
      %s231 = sphi 0, %s231
      %s233 = sphi 0, %s231
      %s234 = sphi 0, %s233
      %s248 = sphi 0, %s234
      %s252 = sphi 0, %s252
      %s254 = sphi 0, %s252
      %s255 = sphi 0, %s254
      %s269 = sphi 0, %s255
      %s273 = sphi 0, %s273
      %s275 = sphi 0, %s273
      %s276 = sphi 0, %s275
      %s290 = sphi 0, %s276
      %s294 = sphi 0, %s294
      %s296 = sphi 0, %s294
      %s297 = sphi 0, %s296
      %s311 = sphi 0, %s297
      %s315 = sphi 0, %s315
      %s317 = sphi 0, %s315
      %s318 = sphi 0, %s317
      %s332 = sphi 0, %s318
      %s336 = sphi 0, %s336
      %s338 = sphi 0, %s336
      %s339 = sphi 0, %s338
      %s353 = sphi 0, %s339
      %s357 = sphi 0, %s357
      %s359 = sphi 0, %s357
      %s360 = sphi 0, %s359
      %s374 = sphi 0, %s360
      %s378 = sphi 0, %s378
      %s380 = sphi 0, %s378
      %s381 = sphi 0, %s380
      %s395 = sphi 0, %s381
      %s399 = sphi 0, %s399
      %s401 = sphi 0, %s399
      %s402 = sphi 0, %s401
      %s416 = sphi 0, %s402
      %s420 = sphi 0, %s420
      %s422 = sphi 0, %s420
      %s423 = sphi 0, %s422
      %s437 = sphi 0, %s423
      %s441 = sphi 0, %s441
      %s443 = sphi 0, %s441
      %s444 = sphi 0, %s443
      %s458 = sphi 0, %s444
      %s462 = sphi 0, %s462
      %s464 = sphi 0, %s462
      %s465 = sphi 0, %s464
      %s479 = sphi 0, %s465
      %s483 = sphi 0, %s483
      %s485 = sphi 0, %s483
      %s486 = sphi 0, %s485
      %s500 = sphi 0, %s486
      %s504 = sphi 0, %s504
      %s506 = sphi 0, %s504
      %s507 = sphi 0, %s506
      %s521 = sphi 0, %s507
      %s525 = sphi 0, %s525
      %s527 = sphi 0, %s525
      %s528 = sphi 0, %s527
      %s542 = sphi 0, %s528
      %s546 = sphi 0, %s546
      %s548 = sphi 0, %s546
      %s549 = sphi 0, %s548
      %s563 = sphi 0, %s549
      %s567 = sphi 0, %s567
      %s569 = sphi 0, %s567
      %s570 = sphi 0, %s569
      %s584 = sphi 0, %s570
      %s588 = sphi 0, %s588
      %s590 = sphi 0, %s588
      %s591 = sphi 0, %s590
      %s605 = sphi 0, %s591
      %s609 = sphi 0, %s609
      %s611 = sphi 0, %s609
      %s612 = sphi 0, %s611
      %s626 = sphi 0, %s612
      %s630 = sphi 0, %s630
      %s632 = sphi 0, %s630
      %s633 = sphi 0, %s632
      %s647 = sphi 0, %s633
      %s651 = sphi 0, %s651
      %s653 = sphi 0, %s651
      %s654 = sphi 0, %s653
      %s668 = sphi 0, %s654
      %s672 = sphi 0, %s672
      %s674 = sphi 0, %s672
      %s675 = sphi 0, %s674
      %s689 = sphi 0, %s675
      %s693 = sphi 0, %s693
      %s695 = sphi 0, %s693
      %s696 = sphi 0, %s695
      %s710 = sphi 0, %s696
      %s714 = sphi 0, %s714
      %s716 = sphi 0, %s714
      %s717 = sphi 0, %s716
      %s731 = sphi 0, %s717
      %s737 = sphi 0, %s739
      %s740 = sphi 0, %s737
      %s741 = sphi 0, %s740
      %s757 = sphi 0, %s741
    $region4: #{tpu_custom_call.1} parent=1 // loop_header_branch
      %80 = sbr.rel (%p78) target = $region8
    $region5: #{tpu_custom_call.1} parent=1 // loop_body
      %s82 = ssub.s32 %s77, 1
      %s83 = ssub.s32 %s77, 2
      %s84 = sadd.s32 %s77, 1
      %s85 = ssub.s32 %s77, %s84
      %p86 = scmp.eq.s32.totalorder %s85, 0
      %s88 = sadd.s32 %s87, 1
      %s89 = scalar_select %p86, %s87, %s88
      %p92 = pneg %p86
      %p93 = scmp.eq.s32.totalorder %s77, 1
      %p94 = por %p92, %p93
      %p95 = scmp.ne.s32.totalorder %s87, %s90
      %p96 = scmp.eq.s32.totalorder %s77, 0
      %p97 = por %p95, %p96
      %p98 = scmp.ne.s32.totalorder %s87, %s90
      %p99 = scmp.eq.s32.totalorder %s82, 1
      %p100 = por %p98, %p99
      %p101 = scmp.ne.s32.totalorder %s90, %s91
      %p102 = scmp.eq.s32.totalorder %s82, 0
      %p103 = por %p101, %p102
      %p104 = scmp.ne.s32.totalorder %s90, %s91
      %p105 = scmp.eq.s32.totalorder %s83, 1
      %p106 = por %p104, %p105
      %p108 = scmp.ne.s32.totalorder %s91, %s107
      %p109 = scmp.eq.s32.totalorder %s83, 0
      %p110 = por %p108, %p109
      %s111 = ssub.s32 %s77, %s84
      %p112 = scmp.eq.s32.totalorder %s111, 0
      %s114 = sadd.s32 %s113, 1
      %s115 = scalar_select %p112, %s113, %s114
      %p118 = pneg %p112
      %p119 = scmp.eq.s32.totalorder %s77, 1
      %p120 = por %p118, %p119
      %p121 = scmp.ne.s32.totalorder %s113, %s116
      %p122 = scmp.eq.s32.totalorder %s77, 0
      %p123 = por %p121, %p122
      %p124 = scmp.ne.s32.totalorder %s113, %s116
      %p125 = scmp.eq.s32.totalorder %s82, 1
      %p126 = por %p124, %p125
      %p127 = scmp.ne.s32.totalorder %s116, %s117
      %p128 = scmp.eq.s32.totalorder %s82, 0
      %p129 = por %p127, %p128
      %p130 = scmp.ne.s32.totalorder %s116, %s117
      %p131 = scmp.eq.s32.totalorder %s83, 1
      %p132 = por %p130, %p131
      %p134 = scmp.ne.s32.totalorder %s117, %s133
      %p135 = scmp.eq.s32.totalorder %s83, 0
      %p136 = por %p134, %p135
      %s137 = ssub.s32 %s77, %s84
      %p138 = scmp.eq.s32.totalorder %s137, 0
      %s140 = sadd.s32 %s139, 1
      %s141 = scalar_select %p138, %s139, %s140
      %p144 = pneg %p138
      %p145 = scmp.eq.s32.totalorder %s77, 1
      %p146 = por %p144, %p145
      %p147 = scmp.ne.s32.totalorder %s139, %s142
      %p148 = scmp.eq.s32.totalorder %s77, 0
      %p149 = por %p147, %p148
      %p150 = scmp.ne.s32.totalorder %s139, %s142
      %p151 = scmp.eq.s32.totalorder %s82, 1
      %p152 = por %p150, %p151
      %p153 = scmp.ne.s32.totalorder %s142, %s143
      %p154 = scmp.eq.s32.totalorder %s82, 0
      %p155 = por %p153, %p154
      %p156 = scmp.ne.s32.totalorder %s142, %s143
      %p157 = scmp.eq.s32.totalorder %s83, 1
      %p158 = por %p156, %p157
      %p160 = scmp.ne.s32.totalorder %s143, %s159
      %p161 = scmp.eq.s32.totalorder %s83, 0
      %p162 = por %p160, %p161
      %s163 = ssub.s32 %s77, %s84
      %p164 = scmp.eq.s32.totalorder %s163, 0
      %s166 = sadd.s32 %s165, 1
      %s167 = scalar_select %p164, %s165, %s166
      %p170 = pneg %p164
      %p171 = scmp.eq.s32.totalorder %s77, 1
      %p172 = por %p170, %p171
      %p173 = scmp.ne.s32.totalorder %s165, %s168
      %p174 = scmp.eq.s32.totalorder %s77, 0
      %p175 = por %p173, %p174
      %p176 = scmp.ne.s32.totalorder %s165, %s168
      %p177 = scmp.eq.s32.totalorder %s82, 1
      %p178 = por %p176, %p177
      %p179 = scmp.ne.s32.totalorder %s168, %s169
      %p180 = scmp.eq.s32.totalorder %s82, 0
      %p181 = por %p179, %p180
      %p182 = scmp.ne.s32.totalorder %s168, %s169
      %p183 = scmp.eq.s32.totalorder %s83, 1
      %p184 = por %p182, %p183
      %p186 = scmp.ne.s32.totalorder %s169, %s185
      %p187 = scmp.eq.s32.totalorder %s83, 0
      %p188 = por %p186, %p187
      %s190 = sadd.s32 %s189, 1
      %p193 = scmp.eq.s32.totalorder %s77, 1
      %p194 = scmp.ne.s32.totalorder %s189, %s191
      %p195 = scmp.eq.s32.totalorder %s77, 0
      %p196 = por %p194, %p195
      %p197 = scmp.ne.s32.totalorder %s189, %s191
      %p198 = scmp.eq.s32.totalorder %s82, 1
      %p199 = por %p197, %p198
      %p200 = scmp.ne.s32.totalorder %s191, %s192
      %p201 = scmp.eq.s32.totalorder %s82, 0
      %p202 = por %p200, %p201
      %p203 = scmp.ne.s32.totalorder %s191, %s192
      %p204 = scmp.eq.s32.totalorder %s83, 1
      %p205 = por %p203, %p204
      %p207 = scmp.ne.s32.totalorder %s192, %s206
      %p208 = scmp.eq.s32.totalorder %s83, 0
      %p209 = por %p207, %p208
      %s211 = sadd.s32 %s210, 1
      %p214 = scmp.eq.s32.totalorder %s77, 1
      %p215 = scmp.ne.s32.totalorder %s210, %s212
      %p216 = scmp.eq.s32.totalorder %s77, 0
      %p217 = por %p215, %p216
      %p218 = scmp.ne.s32.totalorder %s210, %s212
      %p219 = scmp.eq.s32.totalorder %s82, 1
      %p220 = por %p218, %p219
      %p221 = scmp.ne.s32.totalorder %s212, %s213
      %p222 = scmp.eq.s32.totalorder %s82, 0
      %p223 = por %p221, %p222
      %p224 = scmp.ne.s32.totalorder %s212, %s213
      %p225 = scmp.eq.s32.totalorder %s83, 1
      %p226 = por %p224, %p225
      %p228 = scmp.ne.s32.totalorder %s213, %s227
      %p229 = scmp.eq.s32.totalorder %s83, 0
      %p230 = por %p228, %p229
      %s232 = sadd.s32 %s231, 1
      %p235 = scmp.eq.s32.totalorder %s77, 1
      %p236 = scmp.ne.s32.totalorder %s231, %s233
      %p237 = scmp.eq.s32.totalorder %s77, 0
      %p238 = por %p236, %p237
      %p239 = scmp.ne.s32.totalorder %s231, %s233
      %p240 = scmp.eq.s32.totalorder %s82, 1
      %p241 = por %p239, %p240
      %p242 = scmp.ne.s32.totalorder %s233, %s234
      %p243 = scmp.eq.s32.totalorder %s82, 0
      %p244 = por %p242, %p243
      %p245 = scmp.ne.s32.totalorder %s233, %s234
      %p246 = scmp.eq.s32.totalorder %s83, 1
      %p247 = por %p245, %p246
      %p249 = scmp.ne.s32.totalorder %s234, %s248
      %p250 = scmp.eq.s32.totalorder %s83, 0
      %p251 = por %p249, %p250
      %s253 = sadd.s32 %s252, 1
      %p256 = scmp.eq.s32.totalorder %s77, 1
      %p257 = scmp.ne.s32.totalorder %s252, %s254
      %p258 = scmp.eq.s32.totalorder %s77, 0
      %p259 = por %p257, %p258
      %p260 = scmp.ne.s32.totalorder %s252, %s254
      %p261 = scmp.eq.s32.totalorder %s82, 1
      %p262 = por %p260, %p261
      %p263 = scmp.ne.s32.totalorder %s254, %s255
      %p264 = scmp.eq.s32.totalorder %s82, 0
      %p265 = por %p263, %p264
      %p266 = scmp.ne.s32.totalorder %s254, %s255
      %p267 = scmp.eq.s32.totalorder %s83, 1
      %p268 = por %p266, %p267
      %p270 = scmp.ne.s32.totalorder %s255, %s269
      %p271 = scmp.eq.s32.totalorder %s83, 0
      %p272 = por %p270, %p271
      %s274 = sadd.s32 %s273, 1
      %p277 = scmp.eq.s32.totalorder %s77, 1
      %p278 = scmp.ne.s32.totalorder %s273, %s275
      %p279 = scmp.eq.s32.totalorder %s77, 0
      %p280 = por %p278, %p279
      %p281 = scmp.ne.s32.totalorder %s273, %s275
      %p282 = scmp.eq.s32.totalorder %s82, 1
      %p283 = por %p281, %p282
      %p284 = scmp.ne.s32.totalorder %s275, %s276
      %p285 = scmp.eq.s32.totalorder %s82, 0
      %p286 = por %p284, %p285
      %p287 = scmp.ne.s32.totalorder %s275, %s276
      %p288 = scmp.eq.s32.totalorder %s83, 1
      %p289 = por %p287, %p288
      %p291 = scmp.ne.s32.totalorder %s276, %s290
      %p292 = scmp.eq.s32.totalorder %s83, 0
      %p293 = por %p291, %p292
      %s295 = sadd.s32 %s294, 1
      %p298 = scmp.eq.s32.totalorder %s77, 1
      %p299 = scmp.ne.s32.totalorder %s294, %s296
      %p300 = scmp.eq.s32.totalorder %s77, 0
      %p301 = por %p299, %p300
      %p302 = scmp.ne.s32.totalorder %s294, %s296
      %p303 = scmp.eq.s32.totalorder %s82, 1
      %p304 = por %p302, %p303
      %p305 = scmp.ne.s32.totalorder %s296, %s297
      %p306 = scmp.eq.s32.totalorder %s82, 0
      %p307 = por %p305, %p306
      %p308 = scmp.ne.s32.totalorder %s296, %s297
      %p309 = scmp.eq.s32.totalorder %s83, 1
      %p310 = por %p308, %p309
      %p312 = scmp.ne.s32.totalorder %s297, %s311
      %p313 = scmp.eq.s32.totalorder %s83, 0
      %p314 = por %p312, %p313
      %s316 = sadd.s32 %s315, 1
      %p319 = scmp.eq.s32.totalorder %s77, 1
      %p320 = scmp.ne.s32.totalorder %s315, %s317
      %p321 = scmp.eq.s32.totalorder %s77, 0
      %p322 = por %p320, %p321
      %p323 = scmp.ne.s32.totalorder %s315, %s317
      %p324 = scmp.eq.s32.totalorder %s82, 1
      %p325 = por %p323, %p324
      %p326 = scmp.ne.s32.totalorder %s317, %s318
      %p327 = scmp.eq.s32.totalorder %s82, 0
      %p328 = por %p326, %p327
      %p329 = scmp.ne.s32.totalorder %s317, %s318
      %p330 = scmp.eq.s32.totalorder %s83, 1
      %p331 = por %p329, %p330
      %p333 = scmp.ne.s32.totalorder %s318, %s332
      %p334 = scmp.eq.s32.totalorder %s83, 0
      %p335 = por %p333, %p334
      %s337 = sadd.s32 %s336, 1
      %p340 = scmp.eq.s32.totalorder %s77, 1
      %p341 = scmp.ne.s32.totalorder %s336, %s338
      %p342 = scmp.eq.s32.totalorder %s77, 0
      %p343 = por %p341, %p342
      %p344 = scmp.ne.s32.totalorder %s336, %s338
      %p345 = scmp.eq.s32.totalorder %s82, 1
      %p346 = por %p344, %p345
      %p347 = scmp.ne.s32.totalorder %s338, %s339
      %p348 = scmp.eq.s32.totalorder %s82, 0
      %p349 = por %p347, %p348
      %p350 = scmp.ne.s32.totalorder %s338, %s339
      %p351 = scmp.eq.s32.totalorder %s83, 1
      %p352 = por %p350, %p351
      %p354 = scmp.ne.s32.totalorder %s339, %s353
      %p355 = scmp.eq.s32.totalorder %s83, 0
      %p356 = por %p354, %p355
      %s358 = sadd.s32 %s357, 1
      %p361 = scmp.eq.s32.totalorder %s77, 1
      %p362 = scmp.ne.s32.totalorder %s357, %s359
      %p363 = scmp.eq.s32.totalorder %s77, 0
      %p364 = por %p362, %p363
      %p365 = scmp.ne.s32.totalorder %s357, %s359
      %p366 = scmp.eq.s32.totalorder %s82, 1
      %p367 = por %p365, %p366
      %p368 = scmp.ne.s32.totalorder %s359, %s360
      %p369 = scmp.eq.s32.totalorder %s82, 0
      %p370 = por %p368, %p369
      %p371 = scmp.ne.s32.totalorder %s359, %s360
      %p372 = scmp.eq.s32.totalorder %s83, 1
      %p373 = por %p371, %p372
      %p375 = scmp.ne.s32.totalorder %s360, %s374
      %p376 = scmp.eq.s32.totalorder %s83, 0
      %p377 = por %p375, %p376
      %s379 = sadd.s32 %s378, 1
      %p382 = scmp.eq.s32.totalorder %s77, 1
      %p383 = scmp.ne.s32.totalorder %s378, %s380
      %p384 = scmp.eq.s32.totalorder %s77, 0
      %p385 = por %p383, %p384
      %p386 = scmp.ne.s32.totalorder %s378, %s380
      %p387 = scmp.eq.s32.totalorder %s82, 1
      %p388 = por %p386, %p387
      %p389 = scmp.ne.s32.totalorder %s380, %s381
      %p390 = scmp.eq.s32.totalorder %s82, 0
      %p391 = por %p389, %p390
      %p392 = scmp.ne.s32.totalorder %s380, %s381
      %p393 = scmp.eq.s32.totalorder %s83, 1
      %p394 = por %p392, %p393
      %p396 = scmp.ne.s32.totalorder %s381, %s395
      %p397 = scmp.eq.s32.totalorder %s83, 0
      %p398 = por %p396, %p397
      %s400 = sadd.s32 %s399, 1
      %p403 = scmp.eq.s32.totalorder %s77, 1
      %p404 = scmp.ne.s32.totalorder %s399, %s401
      %p405 = scmp.eq.s32.totalorder %s77, 0
      %p406 = por %p404, %p405
      %p407 = scmp.ne.s32.totalorder %s399, %s401
      %p408 = scmp.eq.s32.totalorder %s82, 1
      %p409 = por %p407, %p408
      %p410 = scmp.ne.s32.totalorder %s401, %s402
      %p411 = scmp.eq.s32.totalorder %s82, 0
      %p412 = por %p410, %p411
      %p413 = scmp.ne.s32.totalorder %s401, %s402
      %p414 = scmp.eq.s32.totalorder %s83, 1
      %p415 = por %p413, %p414
      %p417 = scmp.ne.s32.totalorder %s402, %s416
      %p418 = scmp.eq.s32.totalorder %s83, 0
      %p419 = por %p417, %p418
      %s421 = sadd.s32 %s420, 1
      %p424 = scmp.eq.s32.totalorder %s77, 1
      %p425 = scmp.ne.s32.totalorder %s420, %s422
      %p426 = scmp.eq.s32.totalorder %s77, 0
      %p427 = por %p425, %p426
      %p428 = scmp.ne.s32.totalorder %s420, %s422
      %p429 = scmp.eq.s32.totalorder %s82, 1
      %p430 = por %p428, %p429
      %p431 = scmp.ne.s32.totalorder %s422, %s423
      %p432 = scmp.eq.s32.totalorder %s82, 0
      %p433 = por %p431, %p432
      %p434 = scmp.ne.s32.totalorder %s422, %s423
      %p435 = scmp.eq.s32.totalorder %s83, 1
      %p436 = por %p434, %p435
      %p438 = scmp.ne.s32.totalorder %s423, %s437
      %p439 = scmp.eq.s32.totalorder %s83, 0
      %p440 = por %p438, %p439
      %s442 = sadd.s32 %s441, 1
      %p445 = scmp.eq.s32.totalorder %s77, 1
      %p446 = scmp.ne.s32.totalorder %s441, %s443
      %p447 = scmp.eq.s32.totalorder %s77, 0
      %p448 = por %p446, %p447
      %p449 = scmp.ne.s32.totalorder %s441, %s443
      %p450 = scmp.eq.s32.totalorder %s82, 1
      %p451 = por %p449, %p450
      %p452 = scmp.ne.s32.totalorder %s443, %s444
      %p453 = scmp.eq.s32.totalorder %s82, 0
      %p454 = por %p452, %p453
      %p455 = scmp.ne.s32.totalorder %s443, %s444
      %p456 = scmp.eq.s32.totalorder %s83, 1
      %p457 = por %p455, %p456
      %p459 = scmp.ne.s32.totalorder %s444, %s458
      %p460 = scmp.eq.s32.totalorder %s83, 0
      %p461 = por %p459, %p460
      %s463 = sadd.s32 %s462, 1
      %p466 = scmp.eq.s32.totalorder %s77, 1
      %p467 = scmp.ne.s32.totalorder %s462, %s464
      %p468 = scmp.eq.s32.totalorder %s77, 0
      %p469 = por %p467, %p468
      %p470 = scmp.ne.s32.totalorder %s462, %s464
      %p471 = scmp.eq.s32.totalorder %s82, 1
      %p472 = por %p470, %p471
      %p473 = scmp.ne.s32.totalorder %s464, %s465
      %p474 = scmp.eq.s32.totalorder %s82, 0
      %p475 = por %p473, %p474
      %p476 = scmp.ne.s32.totalorder %s464, %s465
      %p477 = scmp.eq.s32.totalorder %s83, 1
      %p478 = por %p476, %p477
      %p480 = scmp.ne.s32.totalorder %s465, %s479
      %p481 = scmp.eq.s32.totalorder %s83, 0
      %p482 = por %p480, %p481
      %s484 = sadd.s32 %s483, 1
      %p487 = scmp.eq.s32.totalorder %s77, 1
      %p488 = scmp.ne.s32.totalorder %s483, %s485
      %p489 = scmp.eq.s32.totalorder %s77, 0
      %p490 = por %p488, %p489
      %p491 = scmp.ne.s32.totalorder %s483, %s485
      %p492 = scmp.eq.s32.totalorder %s82, 1
      %p493 = por %p491, %p492
      %p494 = scmp.ne.s32.totalorder %s485, %s486
      %p495 = scmp.eq.s32.totalorder %s82, 0
      %p496 = por %p494, %p495
      %p497 = scmp.ne.s32.totalorder %s485, %s486
      %p498 = scmp.eq.s32.totalorder %s83, 1
      %p499 = por %p497, %p498
      %p501 = scmp.ne.s32.totalorder %s486, %s500
      %p502 = scmp.eq.s32.totalorder %s83, 0
      %p503 = por %p501, %p502
      %s505 = sadd.s32 %s504, 1
      %p508 = scmp.eq.s32.totalorder %s77, 1
      %p509 = scmp.ne.s32.totalorder %s504, %s506
      %p510 = scmp.eq.s32.totalorder %s77, 0
      %p511 = por %p509, %p510
      %p512 = scmp.ne.s32.totalorder %s504, %s506
      %p513 = scmp.eq.s32.totalorder %s82, 1
      %p514 = por %p512, %p513
      %p515 = scmp.ne.s32.totalorder %s506, %s507
      %p516 = scmp.eq.s32.totalorder %s82, 0
      %p517 = por %p515, %p516
      %p518 = scmp.ne.s32.totalorder %s506, %s507
      %p519 = scmp.eq.s32.totalorder %s83, 1
      %p520 = por %p518, %p519
      %p522 = scmp.ne.s32.totalorder %s507, %s521
      %p523 = scmp.eq.s32.totalorder %s83, 0
      %p524 = por %p522, %p523
      %s526 = sadd.s32 %s525, 1
      %p529 = scmp.eq.s32.totalorder %s77, 1
      %p530 = scmp.ne.s32.totalorder %s525, %s527
      %p531 = scmp.eq.s32.totalorder %s77, 0
      %p532 = por %p530, %p531
      %p533 = scmp.ne.s32.totalorder %s525, %s527
      %p534 = scmp.eq.s32.totalorder %s82, 1
      %p535 = por %p533, %p534
      %p536 = scmp.ne.s32.totalorder %s527, %s528
      %p537 = scmp.eq.s32.totalorder %s82, 0
      %p538 = por %p536, %p537
      %p539 = scmp.ne.s32.totalorder %s527, %s528
      %p540 = scmp.eq.s32.totalorder %s83, 1
      %p541 = por %p539, %p540
      %p543 = scmp.ne.s32.totalorder %s528, %s542
      %p544 = scmp.eq.s32.totalorder %s83, 0
      %p545 = por %p543, %p544
      %s547 = sadd.s32 %s546, 1
      %p550 = scmp.eq.s32.totalorder %s77, 1
      %p551 = scmp.ne.s32.totalorder %s546, %s548
      %p552 = scmp.eq.s32.totalorder %s77, 0
      %p553 = por %p551, %p552
      %p554 = scmp.ne.s32.totalorder %s546, %s548
      %p555 = scmp.eq.s32.totalorder %s82, 1
      %p556 = por %p554, %p555
      %p557 = scmp.ne.s32.totalorder %s548, %s549
      %p558 = scmp.eq.s32.totalorder %s82, 0
      %p559 = por %p557, %p558
      %p560 = scmp.ne.s32.totalorder %s548, %s549
      %p561 = scmp.eq.s32.totalorder %s83, 1
      %p562 = por %p560, %p561
      %p564 = scmp.ne.s32.totalorder %s549, %s563
      %p565 = scmp.eq.s32.totalorder %s83, 0
      %p566 = por %p564, %p565
      %s568 = sadd.s32 %s567, 1
      %p571 = scmp.eq.s32.totalorder %s77, 1
      %p572 = scmp.ne.s32.totalorder %s567, %s569
      %p573 = scmp.eq.s32.totalorder %s77, 0
      %p574 = por %p572, %p573
      %p575 = scmp.ne.s32.totalorder %s567, %s569
      %p576 = scmp.eq.s32.totalorder %s82, 1
      %p577 = por %p575, %p576
      %p578 = scmp.ne.s32.totalorder %s569, %s570
      %p579 = scmp.eq.s32.totalorder %s82, 0
      %p580 = por %p578, %p579
      %p581 = scmp.ne.s32.totalorder %s569, %s570
      %p582 = scmp.eq.s32.totalorder %s83, 1
      %p583 = por %p581, %p582
      %p585 = scmp.ne.s32.totalorder %s570, %s584
      %p586 = scmp.eq.s32.totalorder %s83, 0
      %p587 = por %p585, %p586
      %s589 = sadd.s32 %s588, 1
      %p592 = scmp.eq.s32.totalorder %s77, 1
      %p593 = scmp.ne.s32.totalorder %s588, %s590
      %p594 = scmp.eq.s32.totalorder %s77, 0
      %p595 = por %p593, %p594
      %p596 = scmp.ne.s32.totalorder %s588, %s590
      %p597 = scmp.eq.s32.totalorder %s82, 1
      %p598 = por %p596, %p597
      %p599 = scmp.ne.s32.totalorder %s590, %s591
      %p600 = scmp.eq.s32.totalorder %s82, 0
      %p601 = por %p599, %p600
      %p602 = scmp.ne.s32.totalorder %s590, %s591
      %p603 = scmp.eq.s32.totalorder %s83, 1
      %p604 = por %p602, %p603
      %p606 = scmp.ne.s32.totalorder %s591, %s605
      %p607 = scmp.eq.s32.totalorder %s83, 0
      %p608 = por %p606, %p607
      %s610 = sadd.s32 %s609, 1
      %p613 = scmp.eq.s32.totalorder %s77, 1
      %p614 = scmp.ne.s32.totalorder %s609, %s611
      %p615 = scmp.eq.s32.totalorder %s77, 0
      %p616 = por %p614, %p615
      %p617 = scmp.ne.s32.totalorder %s609, %s611
      %p618 = scmp.eq.s32.totalorder %s82, 1
      %p619 = por %p617, %p618
      %p620 = scmp.ne.s32.totalorder %s611, %s612
      %p621 = scmp.eq.s32.totalorder %s82, 0
      %p622 = por %p620, %p621
      %p623 = scmp.ne.s32.totalorder %s611, %s612
      %p624 = scmp.eq.s32.totalorder %s83, 1
      %p625 = por %p623, %p624
      %p627 = scmp.ne.s32.totalorder %s612, %s626
      %p628 = scmp.eq.s32.totalorder %s83, 0
      %p629 = por %p627, %p628
      %s631 = sadd.s32 %s630, 1
      %p634 = scmp.eq.s32.totalorder %s77, 1
      %p635 = scmp.ne.s32.totalorder %s630, %s632
      %p636 = scmp.eq.s32.totalorder %s77, 0
      %p637 = por %p635, %p636
      %p638 = scmp.ne.s32.totalorder %s630, %s632
      %p639 = scmp.eq.s32.totalorder %s82, 1
      %p640 = por %p638, %p639
      %p641 = scmp.ne.s32.totalorder %s632, %s633
      %p642 = scmp.eq.s32.totalorder %s82, 0
      %p643 = por %p641, %p642
      %p644 = scmp.ne.s32.totalorder %s632, %s633
      %p645 = scmp.eq.s32.totalorder %s83, 1
      %p646 = por %p644, %p645
      %p648 = scmp.ne.s32.totalorder %s633, %s647
      %p649 = scmp.eq.s32.totalorder %s83, 0
      %p650 = por %p648, %p649
      %s652 = sadd.s32 %s651, 1
      %p655 = scmp.eq.s32.totalorder %s77, 1
      %p656 = scmp.ne.s32.totalorder %s651, %s653
      %p657 = scmp.eq.s32.totalorder %s77, 0
      %p658 = por %p656, %p657
      %p659 = scmp.ne.s32.totalorder %s651, %s653
      %p660 = scmp.eq.s32.totalorder %s82, 1
      %p661 = por %p659, %p660
      %p662 = scmp.ne.s32.totalorder %s653, %s654
      %p663 = scmp.eq.s32.totalorder %s82, 0
      %p664 = por %p662, %p663
      %p665 = scmp.ne.s32.totalorder %s653, %s654
      %p666 = scmp.eq.s32.totalorder %s83, 1
      %p667 = por %p665, %p666
      %p669 = scmp.ne.s32.totalorder %s654, %s668
      %p670 = scmp.eq.s32.totalorder %s83, 0
      %p671 = por %p669, %p670
      %s673 = sadd.s32 %s672, 1
      %p676 = scmp.eq.s32.totalorder %s77, 1
      %p677 = scmp.ne.s32.totalorder %s672, %s674
      %p678 = scmp.eq.s32.totalorder %s77, 0
      %p679 = por %p677, %p678
      %p680 = scmp.ne.s32.totalorder %s672, %s674
      %p681 = scmp.eq.s32.totalorder %s82, 1
      %p682 = por %p680, %p681
      %p683 = scmp.ne.s32.totalorder %s674, %s675
      %p684 = scmp.eq.s32.totalorder %s82, 0
      %p685 = por %p683, %p684
      %p686 = scmp.ne.s32.totalorder %s674, %s675
      %p687 = scmp.eq.s32.totalorder %s83, 1
      %p688 = por %p686, %p687
      %p690 = scmp.ne.s32.totalorder %s675, %s689
      %p691 = scmp.eq.s32.totalorder %s83, 0
      %p692 = por %p690, %p691
      %s694 = sadd.s32 %s693, 1
      %p697 = scmp.eq.s32.totalorder %s77, 1
      %p698 = scmp.ne.s32.totalorder %s693, %s695
      %p699 = scmp.eq.s32.totalorder %s77, 0
      %p700 = por %p698, %p699
      %p701 = scmp.ne.s32.totalorder %s693, %s695
      %p702 = scmp.eq.s32.totalorder %s82, 1
      %p703 = por %p701, %p702
      %p704 = scmp.ne.s32.totalorder %s695, %s696
      %p705 = scmp.eq.s32.totalorder %s82, 0
      %p706 = por %p704, %p705
      %p707 = scmp.ne.s32.totalorder %s695, %s696
      %p708 = scmp.eq.s32.totalorder %s83, 1
      %p709 = por %p707, %p708
      %p711 = scmp.ne.s32.totalorder %s696, %s710
      %p712 = scmp.eq.s32.totalorder %s83, 0
      %p713 = por %p711, %p712
      %s715 = sadd.s32 %s714, 1
      %p718 = scmp.eq.s32.totalorder %s77, 1
      %p719 = scmp.ne.s32.totalorder %s714, %s716
      %p720 = scmp.eq.s32.totalorder %s77, 0
      %p721 = por %p719, %p720
      %p722 = scmp.ne.s32.totalorder %s714, %s716
      %p723 = scmp.eq.s32.totalorder %s82, 1
      %p724 = por %p722, %p723
      %p725 = scmp.ne.s32.totalorder %s716, %s717
      %p726 = scmp.eq.s32.totalorder %s82, 0
      %p727 = por %p725, %p726
      %p728 = scmp.ne.s32.totalorder %s716, %s717
      %p729 = scmp.eq.s32.totalorder %s83, 1
      %p730 = por %p728, %p729
      %p732 = scmp.ne.s32.totalorder %s717, %s731
      %p733 = scmp.eq.s32.totalorder %s83, 0
      %p734 = por %p732, %p733
      %s735 = ssub.s32 %s77, %s84
      %p736 = scmp.eq.s32.totalorder %s735, 0
      %s738 = sadd.s32 %s737, 1
      %s739 = scalar_select %p736, %s737, %s738
      %p742 = pneg %p736
      %p743 = scmp.eq.s32.totalorder %s77, 1
      %p744 = por %p742, %p743
      %p745 = scmp.ne.s32.totalorder %s737, %s740
      %p746 = scmp.eq.s32.totalorder %s77, 0
      %p747 = por %p745, %p746
      %p748 = scmp.ne.s32.totalorder %s737, %s740
      %p749 = scmp.eq.s32.totalorder %s82, 1
      %p750 = por %p748, %p749
      %p751 = scmp.ne.s32.totalorder %s740, %s741
      %p752 = scmp.eq.s32.totalorder %s82, 0
      %p753 = por %p751, %p752
      %p754 = scmp.ne.s32.totalorder %s740, %s741
      %p755 = scmp.eq.s32.totalorder %s83, 1
      %p756 = por %p754, %p755
      %p758 = scmp.ne.s32.totalorder %s741, %s757
      %p759 = scmp.eq.s32.totalorder %s83, 0
      %p760 = por %p758, %p759
      %p761 = scmp.le.s32.totalorder 1, %s77
      %p762 = scmp.lt.s32.totalorder %s77, 3
      %p763 = pnand %p761, %p762
      %p764 = pneg %p763
      // Predicated region
      $region9: #{tpu_custom_call.1} parent=5 // pred_check
        _
      $region10: #{tpu_custom_call.1} parent=5 // pred_check_branch
        %766 = sbr.rel (%p763) target = $region12
      $region11: #{tpu_custom_call.1} parent=5 // pred_region
        %s767 = ssub.s32 %s77, 1
        // Predicated region
        $region13: #{tpu_custom_call.1} parent=11 // pred_check
          %p768 = pneg %p202
        $region14: #{tpu_custom_call.1} parent=11 // pred_check_branch
          %770 = sbr.rel (%p768) target = $region16
        $region15: #{tpu_custom_call.1} parent=11 // pred_region
          _
        $region16: #{tpu_custom_call.1} parent=11 // pred_fallthru
          _
        // Predicated region
        $region17: #{tpu_custom_call.1} parent=11 // pred_check
          %p771 = pneg %p223
        $region18: #{tpu_custom_call.1} parent=11 // pred_check_branch
          %773 = sbr.rel (%p771) target = $region20
        $region19: #{tpu_custom_call.1} parent=11 // pred_region
          _
        $region20: #{tpu_custom_call.1} parent=11 // pred_fallthru
          _
        // Predicated region
        $region21: #{tpu_custom_call.1} parent=11 // pred_check
          %p774 = pneg %p244
        $region22: #{tpu_custom_call.1} parent=11 // pred_check_branch
          %776 = sbr.rel (%p774) target = $region24
        $region23: #{tpu_custom_call.1} parent=11 // pred_region
          _
        $region24: #{tpu_custom_call.1} parent=11 // pred_fallthru
          _
        // Predicated region
        $region25: #{tpu_custom_call.1} parent=11 // pred_check
          %p777 = pneg %p265
        $region26: #{tpu_custom_call.1} parent=11 // pred_check_branch
          %779 = sbr.rel (%p777) target = $region28
        $region27: #{tpu_custom_call.1} parent=11 // pred_region
          _
        $region28: #{tpu_custom_call.1} parent=11 // pred_fallthru
          _
        // Predicated region
        $region29: #{tpu_custom_call.1} parent=11 // pred_check
          %p780 = pneg %p286
        $region30: #{tpu_custom_call.1} parent=11 // pred_check_branch
          %782 = sbr.rel (%p780) target = $region32
        $region31: #{tpu_custom_call.1} parent=11 // pred_region
          _
        $region32: #{tpu_custom_call.1} parent=11 // pred_fallthru
          _
        // Predicated region
        $region33: #{tpu_custom_call.1} parent=11 // pred_check
          %p783 = pneg %p307
        $region34: #{tpu_custom_call.1} parent=11 // pred_check_branch
          %785 = sbr.rel (%p783) target = $region36
        $region35: #{tpu_custom_call.1} parent=11 // pred_region
          _
        $region36: #{tpu_custom_call.1} parent=11 // pred_fallthru
          _
        // Predicated region
        $region37: #{tpu_custom_call.1} parent=11 // pred_check
          %p786 = pneg %p328
        $region38: #{tpu_custom_call.1} parent=11 // pred_check_branch
          %788 = sbr.rel (%p786) target = $region40
        $region39: #{tpu_custom_call.1} parent=11 // pred_region
          %s790 = ssub.s32 512, 512
          %791 = vsyncadd [#allocation6], %s790
          %s792 = sshll.u32 [#allocation5], 4
          %s793 = int_to_ptr.vmem [resolvable:$true] %s792
          %798 = dma.hbm_to_vmem [thread:$0]  %s21, 512, %s793, [#allocation6], 64, 64, 4
        $region40: #{tpu_custom_call.1} parent=11 // pred_fallthru
          _
        // Predicated region
        $region41: #{tpu_custom_call.1} parent=11 // pred_check
          %p799 = pneg %p349
        $region42: #{tpu_custom_call.1} parent=11 // pred_check_branch
          %801 = sbr.rel (%p799) target = $region44
        $region43: #{tpu_custom_call.1} parent=11 // pred_region
          _
        $region44: #{tpu_custom_call.1} parent=11 // pred_fallthru
          _
        // Predicated region
        $region45: #{tpu_custom_call.1} parent=11 // pred_check
          %p802 = pneg %p370
        $region46: #{tpu_custom_call.1} parent=11 // pred_check_branch
          %804 = sbr.rel (%p802) target = $region48
        $region47: #{tpu_custom_call.1} parent=11 // pred_region
          %s806 = ssub.s32 512, 512
          %807 = vsyncadd [#allocation6], %s806
          %s808 = sshll.u32 [#allocation7], 4
          %s809 = int_to_ptr.vmem [resolvable:$true] %s808
          %814 = dma.hbm_to_vmem [thread:$0]  %s25, 512, %s809, [#allocation6], 64, 64, 4
        $region48: #{tpu_custom_call.1} parent=11 // pred_fallthru
          _
        // Predicated region
        $region49: #{tpu_custom_call.1} parent=11 // pred_check
          %p815 = pneg %p391
        $region50: #{tpu_custom_call.1} parent=11 // pred_check_branch
          %817 = sbr.rel (%p815) target = $region52
        $region51: #{tpu_custom_call.1} parent=11 // pred_region
          _
        $region52: #{tpu_custom_call.1} parent=11 // pred_fallthru
          _
        // Predicated region
        $region53: #{tpu_custom_call.1} parent=11 // pred_check
          %p818 = pneg %p412
        $region54: #{tpu_custom_call.1} parent=11 // pred_check_branch
          %820 = sbr.rel (%p818) target = $region56
        $region55: #{tpu_custom_call.1} parent=11 // pred_region
          _
        $region56: #{tpu_custom_call.1} parent=11 // pred_fallthru
          _
        // Predicated region
        $region57: #{tpu_custom_call.1} parent=11 // pred_check
          %p821 = pneg %p433
        $region58: #{tpu_custom_call.1} parent=11 // pred_check_branch
          %823 = sbr.rel (%p821) target = $region60
        $region59: #{tpu_custom_call.1} parent=11 // pred_region
          _
        $region60: #{tpu_custom_call.1} parent=11 // pred_fallthru
          _
        // Predicated region
        $region61: #{tpu_custom_call.1} parent=11 // pred_check
          %p824 = pneg %p454
        $region62: #{tpu_custom_call.1} parent=11 // pred_check_branch
          %826 = sbr.rel (%p824) target = $region64
        $region63: #{tpu_custom_call.1} parent=11 // pred_region
          %s828 = ssub.s32 512, 512
          %829 = vsyncadd [#allocation9], %s828
          %s830 = sshll.u32 [#allocation8], 4
          %s831 = int_to_ptr.vmem [resolvable:$true] %s830
          %836 = dma.hbm_to_vmem [thread:$0]  %s33, 512, %s831, [#allocation9], 64, 64, 4
        $region64: #{tpu_custom_call.1} parent=11 // pred_fallthru
          _
        // Predicated region
        $region65: #{tpu_custom_call.1} parent=11 // pred_check
          %p837 = pneg %p475
        $region66: #{tpu_custom_call.1} parent=11 // pred_check_branch
          %839 = sbr.rel (%p837) target = $region68
        $region67: #{tpu_custom_call.1} parent=11 // pred_region
          _
        $region68: #{tpu_custom_call.1} parent=11 // pred_fallthru
          _
        // Predicated region
        $region69: #{tpu_custom_call.1} parent=11 // pred_check
          %p840 = pneg %p496
        $region70: #{tpu_custom_call.1} parent=11 // pred_check_branch
          %842 = sbr.rel (%p840) target = $region72
        $region71: #{tpu_custom_call.1} parent=11 // pred_region
          %s844 = ssub.s32 512, 512
          %845 = vsyncadd [#allocation9], %s844
          %s846 = sshll.u32 [#allocation10], 4
          %s847 = int_to_ptr.vmem [resolvable:$true] %s846
          %852 = dma.hbm_to_vmem [thread:$0]  %s37, 512, %s847, [#allocation9], 64, 64, 4
        $region72: #{tpu_custom_call.1} parent=11 // pred_fallthru
          _
        // Predicated region
        $region73: #{tpu_custom_call.1} parent=11 // pred_check
          %p853 = pneg %p517
        $region74: #{tpu_custom_call.1} parent=11 // pred_check_branch
          %855 = sbr.rel (%p853) target = $region76
        $region75: #{tpu_custom_call.1} parent=11 // pred_region
          _
        $region76: #{tpu_custom_call.1} parent=11 // pred_fallthru
          _
        // Predicated region
        $region77: #{tpu_custom_call.1} parent=11 // pred_check
          %p856 = pneg %p538
        $region78: #{tpu_custom_call.1} parent=11 // pred_check_branch
          %858 = sbr.rel (%p856) target = $region80
        $region79: #{tpu_custom_call.1} parent=11 // pred_region
          %s860 = ssub.s32 512, 512
          %861 = vsyncadd [#allocation12], %s860
          %s862 = sshll.u32 [#allocation11], 4
          %s863 = int_to_ptr.vmem [resolvable:$true] %s862
          %868 = dma.hbm_to_vmem [thread:$0]  %s41, 512, %s863, [#allocation12], 64, 64, 4
        $region80: #{tpu_custom_call.1} parent=11 // pred_fallthru
          _
        // Predicated region
        $region81: #{tpu_custom_call.1} parent=11 // pred_check
          %p869 = pneg %p559
        $region82: #{tpu_custom_call.1} parent=11 // pred_check_branch
          %871 = sbr.rel (%p869) target = $region84
        $region83: #{tpu_custom_call.1} parent=11 // pred_region
          _
        $region84: #{tpu_custom_call.1} parent=11 // pred_fallthru
          _
        // Predicated region
        $region85: #{tpu_custom_call.1} parent=11 // pred_check
          %p872 = pneg %p580
        $region86: #{tpu_custom_call.1} parent=11 // pred_check_branch
          %874 = sbr.rel (%p872) target = $region88
        $region87: #{tpu_custom_call.1} parent=11 // pred_region
          %s876 = ssub.s32 512, 512
          %877 = vsyncadd [#allocation12], %s876
          %s878 = sshll.u32 [#allocation13], 4
          %s879 = int_to_ptr.vmem [resolvable:$true] %s878
          %884 = dma.hbm_to_vmem [thread:$0]  %s45, 512, %s879, [#allocation12], 64, 64, 4
        $region88: #{tpu_custom_call.1} parent=11 // pred_fallthru
          _
        // Predicated region
        $region89: #{tpu_custom_call.1} parent=11 // pred_check
          %p885 = pneg %p601
        $region90: #{tpu_custom_call.1} parent=11 // pred_check_branch
          %887 = sbr.rel (%p885) target = $region92
        $region91: #{tpu_custom_call.1} parent=11 // pred_region
          _
        $region92: #{tpu_custom_call.1} parent=11 // pred_fallthru
          _
        // Predicated region
        $region93: #{tpu_custom_call.1} parent=11 // pred_check
          %p888 = pneg %p622
        $region94: #{tpu_custom_call.1} parent=11 // pred_check_branch
          %890 = sbr.rel (%p888) target = $region96
        $region95: #{tpu_custom_call.1} parent=11 // pred_region
          _
        $region96: #{tpu_custom_call.1} parent=11 // pred_fallthru
          _
        // Predicated region
        $region97: #{tpu_custom_call.1} parent=11 // pred_check
          %p891 = pneg %p643
        $region98: #{tpu_custom_call.1} parent=11 // pred_check_branch
          %893 = sbr.rel (%p891) target = $region100
        $region99: #{tpu_custom_call.1} parent=11 // pred_region
          _
        $region100: #{tpu_custom_call.1} parent=11 // pred_fallthru
          _
        // Predicated region
        $region101: #{tpu_custom_call.1} parent=11 // pred_check
          %p894 = pneg %p664
        $region102: #{tpu_custom_call.1} parent=11 // pred_check_branch
          %896 = sbr.rel (%p894) target = $region104
        $region103: #{tpu_custom_call.1} parent=11 // pred_region
          %s898 = ssub.s32 512, 512
          %899 = vsyncadd [#allocation15], %s898
          %s900 = sshll.u32 [#allocation14], 4
          %s901 = int_to_ptr.vmem [resolvable:$true] %s900
          %906 = dma.hbm_to_vmem [thread:$0]  %s53, 512, %s901, [#allocation15], 64, 64, 4
        $region104: #{tpu_custom_call.1} parent=11 // pred_fallthru
          _
        // Predicated region
        $region105: #{tpu_custom_call.1} parent=11 // pred_check
          %p907 = pneg %p685
        $region106: #{tpu_custom_call.1} parent=11 // pred_check_branch
          %909 = sbr.rel (%p907) target = $region108
        $region107: #{tpu_custom_call.1} parent=11 // pred_region
          _
        $region108: #{tpu_custom_call.1} parent=11 // pred_fallthru
          _
        // Predicated region
        $region109: #{tpu_custom_call.1} parent=11 // pred_check
          %p910 = pneg %p706
        $region110: #{tpu_custom_call.1} parent=11 // pred_check_branch
          %912 = sbr.rel (%p910) target = $region112
        $region111: #{tpu_custom_call.1} parent=11 // pred_region
          _
        $region112: #{tpu_custom_call.1} parent=11 // pred_fallthru
          _
        // Predicated region
        $region113: #{tpu_custom_call.1} parent=11 // pred_check
          %p913 = pneg %p727
        $region114: #{tpu_custom_call.1} parent=11 // pred_check_branch
          %915 = sbr.rel (%p913) target = $region116
        $region115: #{tpu_custom_call.1} parent=11 // pred_region
          _
        $region116: #{tpu_custom_call.1} parent=11 // pred_fallthru
          _
      $region12: #{tpu_custom_call.1} parent=5 // pred_fallthru
        _
      %p916 = scmp.lt.s32.totalorder %s77, 2
      // Predicated region
      $region117: #{tpu_custom_call.1} parent=5 // pred_check
        %p917 = pneg %p916
      $region118: #{tpu_custom_call.1} parent=5 // pred_check_branch
        %919 = sbr.rel (%p917) target = $region120
      $region119: #{tpu_custom_call.1} parent=5 // pred_region
        // Predicated region
        $region121: #{tpu_custom_call.1} parent=119 // pred_check
          %p920 = pneg %p97
        $region122: #{tpu_custom_call.1} parent=119 // pred_check_branch
          %922 = sbr.rel (%p920) target = $region124
        $region123: #{tpu_custom_call.1} parent=119 // pred_region
          %s923 = sand.u32 %s87, 1
          %s924 = scalar_lea.sflag [#allocation3], %s923
          %s925 = sand.u32 %s87, 1
          %s926 = smul.addr %s925, 8
          %s927 = scalar_lea.vmem [#allocation2], %s926
          %s929 = ssub.s32 128, 128
          %930 = vsyncadd %s924, %s929
          %s931 = smul.addr %s77, 128
          %s932 = scalar_lea.hbm %s1, %s931
          %s934 = sshll.u32 %s927, 4
          %s935 = int_to_ptr.vmem [resolvable:$true] %s934
          %937 = dma.hbm_to_vmem [thread:$0]  %s932, 128, %s935, %s924
        $region124: #{tpu_custom_call.1} parent=119 // pred_fallthru
          _
        // Predicated region
        $region125: #{tpu_custom_call.1} parent=119 // pred_check
          %p938 = pneg %p123
        $region126: #{tpu_custom_call.1} parent=119 // pred_check_branch
          %940 = sbr.rel (%p938) target = $region128
        $region127: #{tpu_custom_call.1} parent=119 // pred_region
          %p941 = scmp.lt.s32.totalorder %s77, 1
          %s942 = scalar_select %p941, %s77, 1
          %s943 = smul.addr %s942, 2
          %s944 = smul.addr %s943, 8
          %s945 = scalar_lea.vmem %s3, %s944
        $region128: #{tpu_custom_call.1} parent=119 // pred_fallthru
          _
        // Predicated region
        $region129: #{tpu_custom_call.1} parent=119 // pred_check
          %p946 = pneg %p149
        $region130: #{tpu_custom_call.1} parent=119 // pred_check_branch
          %948 = sbr.rel (%p946) target = $region132
        $region131: #{tpu_custom_call.1} parent=119 // pred_region
          %p949 = scmp.lt.s32.totalorder %s77, 1
          %s950 = scalar_select %p949, %s77, 1
          %s951 = smul.addr %s950, 2
          %s952 = scalar_lea.vmem %s5, %s951
        $region132: #{tpu_custom_call.1} parent=119 // pred_fallthru
          _
        // Predicated region
        $region133: #{tpu_custom_call.1} parent=119 // pred_check
          %p953 = pneg %p175
        $region134: #{tpu_custom_call.1} parent=119 // pred_check_branch
          %955 = sbr.rel (%p953) target = $region136
        $region135: #{tpu_custom_call.1} parent=119 // pred_region
          %p956 = scmp.lt.s32.totalorder %s77, 1
          %s957 = scalar_select %p956, %s77, 1
          %s958 = scalar_lea.vmem %s7, %s957
        $region136: #{tpu_custom_call.1} parent=119 // pred_fallthru
          _
      $region120: #{tpu_custom_call.1} parent=5 // pred_fallthru
        _
      %p959 = scmp.le.s32.totalorder 1, %s77
      %p960 = scmp.lt.s32.totalorder %s77, 3
      %p961 = pnand %p959, %p960
      %p962 = pneg %p961
      // Predicated region
      $region137: #{tpu_custom_call.1} parent=5 // pred_check
        _
      $region138: #{tpu_custom_call.1} parent=5 // pred_check_branch
        %964 = sbr.rel (%p961) target = $region140
      $region139: #{tpu_custom_call.1} parent=5 // pred_region
        %s965 = ssub.s32 %s77, 1
        %s966 = sand.u32 %s90, 1
        %s967 = scalar_lea.sflag [#allocation3], %s966
        %s968 = sand.u32 %s90, 1
        %s969 = smul.addr %s968, 8
        %s970 = scalar_lea.vmem [#allocation2], %s969
        // Predicated region
        $region141: #{tpu_custom_call.1} parent=139 // pred_check
          %p971 = pneg %p103
        $region142: #{tpu_custom_call.1} parent=139 // pred_check_branch
          %973 = sbr.rel (%p971) target = $region144
        $region143: #{tpu_custom_call.1} parent=139 // pred_region
          %974 = dma.done %s967, 128
        $region144: #{tpu_custom_call.1} parent=139 // pred_fallthru
          _
        // Predicated region
        $region145: #{tpu_custom_call.1} parent=139 // pred_check
          %p975 = pneg %p328
        $region146: #{tpu_custom_call.1} parent=139 // pred_check_branch
          %977 = sbr.rel (%p975) target = $region148
        $region147: #{tpu_custom_call.1} parent=139 // pred_region
          %978 = dma.done [#allocation6], 512
        $region148: #{tpu_custom_call.1} parent=139 // pred_fallthru
          _
        // Predicated region
        $region149: #{tpu_custom_call.1} parent=139 // pred_check
          %p979 = pneg %p370
        $region150: #{tpu_custom_call.1} parent=139 // pred_check_branch
          %981 = sbr.rel (%p979) target = $region152
        $region151: #{tpu_custom_call.1} parent=139 // pred_region
          %982 = dma.done [#allocation6], 512
        $region152: #{tpu_custom_call.1} parent=139 // pred_fallthru
          _
        // Predicated region
        $region153: #{tpu_custom_call.1} parent=139 // pred_check
          %p983 = pneg %p454
        $region154: #{tpu_custom_call.1} parent=139 // pred_check_branch
          %985 = sbr.rel (%p983) target = $region156
        $region155: #{tpu_custom_call.1} parent=139 // pred_region
          %986 = dma.done [#allocation9], 512
        $region156: #{tpu_custom_call.1} parent=139 // pred_fallthru
          _
        // Predicated region
        $region157: #{tpu_custom_call.1} parent=139 // pred_check
          %p987 = pneg %p496
        $region158: #{tpu_custom_call.1} parent=139 // pred_check_branch
          %989 = sbr.rel (%p987) target = $region160
        $region159: #{tpu_custom_call.1} parent=139 // pred_region
          %990 = dma.done [#allocation9], 512
        $region160: #{tpu_custom_call.1} parent=139 // pred_fallthru
          _
        // Predicated region
        $region161: #{tpu_custom_call.1} parent=139 // pred_check
          %p991 = pneg %p538
        $region162: #{tpu_custom_call.1} parent=139 // pred_check_branch
          %993 = sbr.rel (%p991) target = $region164
        $region163: #{tpu_custom_call.1} parent=139 // pred_region
          %994 = dma.done [#allocation12], 512
        $region164: #{tpu_custom_call.1} parent=139 // pred_fallthru
          _
        // Predicated region
        $region165: #{tpu_custom_call.1} parent=139 // pred_check
          %p995 = pneg %p580
        $region166: #{tpu_custom_call.1} parent=139 // pred_check_branch
          %997 = sbr.rel (%p995) target = $region168
        $region167: #{tpu_custom_call.1} parent=139 // pred_region
          %998 = dma.done [#allocation12], 512
        $region168: #{tpu_custom_call.1} parent=139 // pred_fallthru
          _
        // Predicated region
        $region169: #{tpu_custom_call.1} parent=139 // pred_check
          %p999 = pneg %p664
        $region170: #{tpu_custom_call.1} parent=139 // pred_check_branch
          %1001 = sbr.rel (%p999) target = $region172
        $region171: #{tpu_custom_call.1} parent=139 // pred_region
          %1002 = dma.done [#allocation15], 512
        $region172: #{tpu_custom_call.1} parent=139 // pred_fallthru
          _
        %s1003 = sand.u32 %s90, 1
        %s1004 = scalar_lea.sflag [#allocation3], %s1003
        %s1005 = sand.u32 %s90, 1
        %s1006 = smul.addr %s1005, 8
        %s1007 = scalar_lea.vmem [#allocation2], %s1006
        %p1008 = pneg %p103
        %p1009 = pneg %p100
        %p1010 = scmp.lt.s32.totalorder %s82, 1
        %s1011 = scalar_select %p1010, %s82, 1
        %s1012 = smul.addr %s1011, 2
        %s1013 = smul.addr %s1012, 8
        %s1014 = scalar_lea.vmem %s3, %s1013
        %p1015 = pneg %p129
        %p1016 = pneg %p126
        %p1017 = scmp.lt.s32.totalorder %s82, 1
        %s1018 = scalar_select %p1017, %s82, 1
        %s1019 = smul.addr %s1018, 2
        %s1020 = scalar_lea.vmem %s5, %s1019
        %p1021 = pneg %p155
        %p1022 = pneg %p152
        %p1023 = scmp.lt.s32.totalorder %s82, 1
        %s1024 = scalar_select %p1023, %s82, 1
        %s1025 = scalar_lea.vmem %s7, %s1024
        %p1026 = pneg %p181
        %p1027 = pneg %p178
        %p1028 = pneg %p202
        %p1029 = pneg %p199
        %p1030 = pneg %p223
        %p1031 = pneg %p220
        %p1032 = pneg %p244
        %p1033 = pneg %p241
        %p1034 = pneg %p265
        %p1035 = pneg %p262
        %p1036 = pneg %p286
        %p1037 = pneg %p283
        %p1038 = pneg %p307
        %p1039 = pneg %p304
        %p1040 = pneg %p328
        %p1041 = pneg %p325
        %p1042 = pneg %p349
        %p1043 = pneg %p346
        %p1044 = pneg %p370
        %p1045 = pneg %p367
        %p1046 = pneg %p391
        %p1047 = pneg %p388
        %p1048 = pneg %p412
        %p1049 = pneg %p409
        %p1050 = pneg %p433
        %p1051 = pneg %p430
        %p1052 = pneg %p454
        %p1053 = pneg %p451
        %p1054 = pneg %p475
        %p1055 = pneg %p472
        %p1056 = pneg %p496
        %p1057 = pneg %p493
        %p1058 = pneg %p517
        %p1059 = pneg %p514
        %p1060 = pneg %p538
        %p1061 = pneg %p535
        %p1062 = pneg %p559
        %p1063 = pneg %p556
        %p1064 = pneg %p580
        %p1065 = pneg %p577
        %p1066 = pneg %p601
        %p1067 = pneg %p598
        %p1068 = pneg %p622
        %p1069 = pneg %p619
        %p1070 = pneg %p643
        %p1071 = pneg %p640
        %p1072 = pneg %p664
        %p1073 = pneg %p661
        %p1074 = pneg %p685
        %p1075 = pneg %p682
        %p1076 = pneg %p706
        %p1077 = pneg %p703
        %p1078 = pneg %p727
        %p1079 = pneg %p724
        %p1080 = pneg %p753
        %p1081 = pneg %p750
        %s1082 = sand.u32 %s740, 1
        %s1083 = scalar_lea.sflag [#allocation4], %s1082
        %s1084 = sand.u32 %s740, 1
        %s1085 = smul.addr %s1084, 8
        %s1086 = scalar_lea.vmem [#allocation16], %s1085
        %p1087 = scmp.lt.s32.totalorder %s82, 1
        %s1088 = scalar_select %p1087, %s82, 1
        %s1089 = smul.addr %s1088, 2
        %s1090 = smul.addr %s1089, 8
        %s1091 = scalar_lea.vmem %s3, %s1090
        %p1092 = scmp.lt.s32.totalorder %s82, 1
        %s1093 = scalar_select %p1092, %s82, 1
        %s1094 = smul.addr %s1093, 2
        %s1095 = scalar_lea.vmem %s5, %s1094
        %p1096 = scmp.lt.s32.totalorder %s82, 1
        %s1097 = scalar_select %p1096, %s82, 1
        %s1098 = scalar_lea.vmem %s7, %s1097
        %v1102 = vld [vmem:[%s970] sm:$0xff]
        %v1103 = vld [vmem:[%s1091] sm:$0xff]
        %v1104 = vld [vmem:[%s1091 + $0x8] sm:$0xff]
        %v1105 = vld [vmem:[%s1095] sm:$0x3]
        %vm1106 = vnez %v1105
        %v1107 = vld [vmem:[%s1098] sm:$0x1]
        %vm1108 = vnez %v1107
        %v1109 = vld [vmem:[%s9] sm:$0x1]
        %v1110 = vld [vmem:[%s11] sm:$0x1]
        %vm1111 = vcmask 523264
        %v1112 = vsel %vm1111, %v1102, 0.0
        %1113 = vadd.xlane.f32.xlu0 %v1112
        %v1114 = vpop.xlane.xlu0 %1113
        %v1115 = vrcp.pop 64.0
        %v1116 = vmul.f32 %v1114, %v1115
        %v1117 = vsub.f32 %v1102, %v1116
        %v1118 = vmul.f32 %v1117, %v1117
        %v1119 = vsel %vm1111, %v1118, 0.0
        %1120 = vadd.xlane.f32.xlu0 %v1119
        %v1121 = vpop.xlane.xlu0 %1120
        %v1122 = vmul.f32 %v1121, %v1115
        %v1123 = vadd.f32 %v1122, 1e-05
        %v1124 = vrsqrt.pop %v1123
        %v1125 = vmul.f32 %v1117, %v1124
        %v1127 = vlaneseq
        %v1128 = vshrl.u32 %v1127, 7
        %v1129 = vsub.s32 0, %v1128
        %v1130 = vrot.slane %v1109, %v1129
        %v1132 = vmul.f32 %v1125, %v1130
        %v1134 = vlaneseq
        %v1135 = vshrl.u32 %v1134, 7
        %v1136 = vsub.s32 0, %v1135
        %v1137 = vrot.slane %v1110, %v1136
        %v1139 = vadd.f32 %v1132, %v1137
        %v1140 = vpack.c.bf16 %v1139, %v1139
        %v1141 = vld [vmem:[%s13] sm:$0xf]
        %v1142 = vld [vmem:[%s13 + $0x4] sm:$0xf]
        %v1143 = vld [vmem:[%s13 + $0x8] sm:$0xf]
        %v1144 = vld [vmem:[%s13 + $0xc] sm:$0xf]
        %v1145 = vld [vmem:[%s13 + $0x10] sm:$0xf]
        %v1146 = vld [vmem:[%s13 + $0x14] sm:$0xf]
        %v1147 = vld [vmem:[%s13 + $0x18] sm:$0xf]
        %v1148 = vld [vmem:[%s13 + $0x1c] sm:$0xf]
        %v1149 = vld [vmem:[%s15] sm:$0x1]
        %v1151 = vlaneseq
        %v1152 = vshrl.u32 %v1151, 7
        %v1153 = vsub.s32 0, %v1152
        %v1154 = vrot.slane %v1149, %v1153
        %v1164 = vunpack.c.l.b16 %v1141
        %v1165 = vunpack.c.l.b16 %v1142
        %v1166 = vunpack.c.l.b16 %v1143
        %v1167 = vunpack.c.l.b16 %v1144
        %v1168 = vunpack.c.l.b16 %v1145
        %v1169 = vunpack.c.l.b16 %v1146
        %v1170 = vunpack.c.l.b16 %v1147
        %v1171 = vunpack.c.l.b16 %v1148
        %v1172 = vpack.c.b16 %v1165, %v1164
        %v1173 = vpack.c.b16 %v1167, %v1166
        %v1174 = vpack.c.b16 %v1169, %v1168
        %v1175 = vpack.c.b16 %v1171, %v1170
        %v1181 = vsel %vm1111, %v1140, 0
        %1183 = vmatprep.subr.bf16.mxu0 0
        %1184 = vmatpush1.bf16.msra.mxu0 0
        %1185 = vmatprep.subr.bf16.mxu0 0
        %1186 = vmatpush1.bf16.msra.mxu0 0
        %1187 = vmatprep.subr.bf16.mxu0 0
        %1188 = vmatpush1.bf16.msra.mxu0 0
        %1189 = vmatprep.subr.bf16.mxu0 0
        %1190 = vmatpush1.bf16.msra.mxu0 0
        %1191 = vmatprep.subr.bf16.mxu0 0
        %1192 = vmatpush1.bf16.msra.mxu0 %v1175
        %1193 = vmatprep.subr.bf16.mxu0 0
        %1194 = vmatpush1.bf16.msra.mxu0 %v1174
        %1195 = vmatprep.subr.bf16.mxu0 0
        %1196 = vmatpush1.bf16.msra.mxu0 %v1173
        %1197 = vmatprep.subr.bf16.mxu0 0
        %1198 = vmatpush1.bf16.msra.mxu0 %v1172
        %1199 = vmatprep.subr.bf16.mxu0 0
        %1200 = vmatpush2.bf16.msra.mxu0 0
        %1201 = vmatprep.subr.bf16.mxu0 0
        %1202 = vmatpush2.bf16.msra.mxu0 0
        %1203 = vmatprep.subr.bf16.mxu0 0
        %1204 = vmatpush2.bf16.msra.mxu0 0
        %1205 = vmatprep.subr.bf16.mxu0 0
        %1206 = vmatpush2.bf16.msra.mxu0 0
        %1207 = vmatprep.subr.bf16.mxu0 0
        %1208 = vmatpush2.bf16.msra.mxu0 0
        %1209 = vmatprep.subr.bf16.mxu0 0
        %1210 = vmatpush2.bf16.msra.mxu0 0
        %1211 = vmatprep.subr.bf16.mxu0 0
        %1212 = vmatpush2.bf16.msra.mxu0 0
        %1213 = vmatprep.subr.bf16.mxu0 0
        %1214 = vmatpush2.bf16.msra.mxu0 0
        %1215 = vmatprep.mubr.bf16.mxu0 0
        %1216 = vmatmul.mubr.bf16.gmra.mxu0 %v1181
        %v1217 = vpop.f32.mrf.mxu0
        %v1218 = vadd.f32 %v1154, %v1217
        %v1219 = vpop.f32.mrf.mxu0
        %v1220 = vpop.f32.mrf.mxu0
        %v1221 = vpop.f32.mrf.mxu0
        %1222 = vdwg.mxu0
        %v1223 = vpack.c.bf16 %v1218, %v1218
        %v1224 = vld [vmem:[%s17] sm:$0xf]
        %v1225 = vld [vmem:[%s17 + $0x4] sm:$0xf]
        %v1226 = vld [vmem:[%s17 + $0x8] sm:$0xf]
        %v1227 = vld [vmem:[%s17 + $0xc] sm:$0xf]
        %v1228 = vld [vmem:[%s17 + $0x10] sm:$0xf]
        %v1229 = vld [vmem:[%s17 + $0x14] sm:$0xf]
        %v1230 = vld [vmem:[%s17 + $0x18] sm:$0xf]
        %v1231 = vld [vmem:[%s17 + $0x1c] sm:$0xf]
        %v1232 = vld [vmem:[%s19] sm:$0x1]
        %v1234 = vlaneseq
        %v1235 = vshrl.u32 %v1234, 7
        %v1236 = vsub.s32 0, %v1235
        %v1237 = vrot.slane %v1232, %v1236
        %v1247 = vunpack.c.l.b16 %v1224
        %v1248 = vunpack.c.l.b16 %v1225
        %v1249 = vunpack.c.l.b16 %v1226
        %v1250 = vunpack.c.l.b16 %v1227
        %v1251 = vunpack.c.l.b16 %v1228
        %v1252 = vunpack.c.l.b16 %v1229
        %v1253 = vunpack.c.l.b16 %v1230
        %v1254 = vunpack.c.l.b16 %v1231
        %v1255 = vpack.c.b16 %v1248, %v1247
        %v1256 = vpack.c.b16 %v1250, %v1249
        %v1257 = vpack.c.b16 %v1252, %v1251
        %v1258 = vpack.c.b16 %v1254, %v1253
        %1263 = vmatprep.subr.bf16.mxu0 0
        %1264 = vmatpush1.bf16.msra.mxu0 0
        %1265 = vmatprep.subr.bf16.mxu0 0
        %1266 = vmatpush1.bf16.msra.mxu0 0
        %1267 = vmatprep.subr.bf16.mxu0 0
        %1268 = vmatpush1.bf16.msra.mxu0 0
        %1269 = vmatprep.subr.bf16.mxu0 0
        %1270 = vmatpush1.bf16.msra.mxu0 0
        %1271 = vmatprep.subr.bf16.mxu0 0
        %1272 = vmatpush1.bf16.msra.mxu0 %v1258
        %1273 = vmatprep.subr.bf16.mxu0 0
        %1274 = vmatpush1.bf16.msra.mxu0 %v1257
        %1275 = vmatprep.subr.bf16.mxu0 0
        %1276 = vmatpush1.bf16.msra.mxu0 %v1256
        %1277 = vmatprep.subr.bf16.mxu0 0
        %1278 = vmatpush1.bf16.msra.mxu0 %v1255
        %1279 = vmatprep.subr.bf16.mxu0 0
        %1280 = vmatpush2.bf16.msra.mxu0 0
        %1281 = vmatprep.subr.bf16.mxu0 0
        %1282 = vmatpush2.bf16.msra.mxu0 0
        %1283 = vmatprep.subr.bf16.mxu0 0
        %1284 = vmatpush2.bf16.msra.mxu0 0
        %1285 = vmatprep.subr.bf16.mxu0 0
        %1286 = vmatpush2.bf16.msra.mxu0 0
        %1287 = vmatprep.subr.bf16.mxu0 0
        %1288 = vmatpush2.bf16.msra.mxu0 0
        %1289 = vmatprep.subr.bf16.mxu0 0
        %1290 = vmatpush2.bf16.msra.mxu0 0
        %1291 = vmatprep.subr.bf16.mxu0 0
        %1292 = vmatpush2.bf16.msra.mxu0 0
        %1293 = vmatprep.subr.bf16.mxu0 0
        %1294 = vmatpush2.bf16.msra.mxu0 0
        %1295 = vmatprep.mubr.bf16.mxu0 0
        %1296 = vmatmul.mubr.bf16.gmra.mxu0 %v1181
        %v1297 = vpop.f32.mrf.mxu0
        %v1298 = vadd.f32 %v1237, %v1297
        %v1299 = vpop.f32.mrf.mxu0
        %v1300 = vpop.f32.mrf.mxu0
        %v1301 = vpop.f32.mrf.mxu0
        %1302 = vdwg.mxu0
        %v1303 = vpack.c.bf16 %v1298, %v1298
        %v1304 = vld [vmem:[#allocation5] sm:$0xf]
        %v1305 = vld [vmem:[#allocation5 + $0x4] sm:$0xf]
        %v1306 = vld [vmem:[#allocation5 + $0x8] sm:$0xf]
        %v1307 = vld [vmem:[#allocation5 + $0xc] sm:$0xf]
        %v1308 = vld [vmem:[#allocation5 + $0x10] sm:$0xf]
        %v1309 = vld [vmem:[#allocation5 + $0x14] sm:$0xf]
        %v1310 = vld [vmem:[#allocation5 + $0x18] sm:$0xf]
        %v1311 = vld [vmem:[#allocation5 + $0x1c] sm:$0xf]
        %v1312 = vld [vmem:[%s23] sm:$0x1]
        %v1314 = vlaneseq
        %v1315 = vshrl.u32 %v1314, 7
        %v1316 = vsub.s32 0, %v1315
        %v1317 = vrot.slane %v1312, %v1316
        %v1327 = vunpack.c.l.b16 %v1304
        %v1328 = vunpack.c.l.b16 %v1305
        %v1329 = vunpack.c.l.b16 %v1306
        %v1330 = vunpack.c.l.b16 %v1307
        %v1331 = vunpack.c.l.b16 %v1308
        %v1332 = vunpack.c.l.b16 %v1309
        %v1333 = vunpack.c.l.b16 %v1310
        %v1334 = vunpack.c.l.b16 %v1311
        %v1335 = vpack.c.b16 %v1328, %v1327
        %v1336 = vpack.c.b16 %v1330, %v1329
        %v1337 = vpack.c.b16 %v1332, %v1331
        %v1338 = vpack.c.b16 %v1334, %v1333
        %1343 = vmatprep.subr.bf16.mxu0 0
        %1344 = vmatpush1.bf16.msra.mxu0 0
        %1345 = vmatprep.subr.bf16.mxu0 0
        %1346 = vmatpush1.bf16.msra.mxu0 0
        %1347 = vmatprep.subr.bf16.mxu0 0
        %1348 = vmatpush1.bf16.msra.mxu0 0
        %1349 = vmatprep.subr.bf16.mxu0 0
        %1350 = vmatpush1.bf16.msra.mxu0 0
        %1351 = vmatprep.subr.bf16.mxu0 0
        %1352 = vmatpush1.bf16.msra.mxu0 %v1338
        %1353 = vmatprep.subr.bf16.mxu0 0
        %1354 = vmatpush1.bf16.msra.mxu0 %v1337
        %1355 = vmatprep.subr.bf16.mxu0 0
        %1356 = vmatpush1.bf16.msra.mxu0 %v1336
        %1357 = vmatprep.subr.bf16.mxu0 0
        %1358 = vmatpush1.bf16.msra.mxu0 %v1335
        %1359 = vmatprep.subr.bf16.mxu0 0
        %1360 = vmatpush2.bf16.msra.mxu0 0
        %1361 = vmatprep.subr.bf16.mxu0 0
        %1362 = vmatpush2.bf16.msra.mxu0 0
        %1363 = vmatprep.subr.bf16.mxu0 0
        %1364 = vmatpush2.bf16.msra.mxu0 0
        %1365 = vmatprep.subr.bf16.mxu0 0
        %1366 = vmatpush2.bf16.msra.mxu0 0
        %1367 = vmatprep.subr.bf16.mxu0 0
        %1368 = vmatpush2.bf16.msra.mxu0 0
        %1369 = vmatprep.subr.bf16.mxu0 0
        %1370 = vmatpush2.bf16.msra.mxu0 0
        %1371 = vmatprep.subr.bf16.mxu0 0
        %1372 = vmatpush2.bf16.msra.mxu0 0
        %1373 = vmatprep.subr.bf16.mxu0 0
        %1374 = vmatpush2.bf16.msra.mxu0 0
        %1375 = vmatprep.mubr.bf16.mxu0 0
        %1376 = vmatmul.mubr.bf16.gmra.mxu0 %v1181
        %v1377 = vpop.f32.mrf.mxu0
        %v1378 = vadd.f32 %v1317, %v1377
        %v1379 = vpop.f32.mrf.mxu0
        %v1380 = vpop.f32.mrf.mxu0
        %v1381 = vpop.f32.mrf.mxu0
        %1382 = vdwg.mxu0
        %v1383 = vpack.c.bf16 %v1378, %v1378
        %v1384 = vld [vmem:[%s27] sm:$0x1]
        %v1386 = vlaneseq
        %v1387 = vshrl.u32 %v1386, 7
        %v1388 = vsub.s32 0, %v1387
        %v1389 = vrot.slane %v1384, %v1388
        %v1391 = vadd.f32 %v1389, 0.0
        %vm1392 = vcmask 130048
        %v1394 = vsel %vm1392, %v1223, 0
        %v1397 = vsel %vm1392, %v1303, 0
        %1399 = vmatprep.subr.bf16.mxu0 0
        %1400 = vmatpush1.bf16.xpose.msra.mxu0 0
        %1401 = vmatprep.subr.bf16.mxu0 0
        %1402 = vmatpush1.bf16.xpose.msra.mxu0 0
        %1403 = vmatprep.subr.bf16.mxu0 0
        %1404 = vmatpush1.bf16.xpose.msra.mxu0 0
        %1405 = vmatprep.subr.bf16.mxu0 0
        %1406 = vmatpush1.bf16.xpose.msra.mxu0 0
        %1407 = vmatprep.subr.bf16.mxu0 0
        %1408 = vmatpush1.bf16.xpose.msra.mxu0 0
        %1409 = vmatprep.subr.bf16.mxu0 0
        %1410 = vmatpush1.bf16.xpose.msra.mxu0 0
        %1411 = vmatprep.subr.bf16.mxu0 0
        %1412 = vmatpush1.bf16.xpose.msra.mxu0 0
        %1413 = vmatprep.subr.bf16.mxu0 0
        %1414 = vmatpush1.bf16.xpose.msra.mxu0 %v1397
        %1415 = vmatprep.subr.bf16.mxu0 0
        %1416 = vmatpush2.bf16.xpose.msra.mxu0 0
        %1417 = vmatprep.subr.bf16.mxu0 0
        %1418 = vmatpush2.bf16.xpose.msra.mxu0 0
        %1419 = vmatprep.subr.bf16.mxu0 0
        %1420 = vmatpush2.bf16.xpose.msra.mxu0 0
        %1421 = vmatprep.subr.bf16.mxu0 0
        %1422 = vmatpush2.bf16.xpose.msra.mxu0 0
        %1423 = vmatprep.subr.bf16.mxu0 0
        %1424 = vmatpush2.bf16.xpose.msra.mxu0 0
        %1425 = vmatprep.subr.bf16.mxu0 0
        %1426 = vmatpush2.bf16.xpose.msra.mxu0 0
        %1427 = vmatprep.subr.bf16.mxu0 0
        %1428 = vmatpush2.bf16.xpose.msra.mxu0 0
        %1429 = vmatprep.subr.bf16.mxu0 0
        %1430 = vmatpush2.bf16.xpose.msra.mxu0 0
        %1431 = vmatprep.mubr.bf16.mxu0 0
        %1432 = vmatmul.mubr.bf16.gmra.mxu0 %v1394
        %v1433 = vpop.f32.mrf.mxu0
        %v1434 = vadd.f32 0.0, %v1433
        %v1435 = vpop.f32.mrf.mxu0
        %v1436 = vpop.f32.mrf.mxu0
        %v1437 = vpop.f32.mrf.mxu0
        %1438 = vdwg.mxu0
        %v1439 = vsel %vm1106, 16843009, 0
        %v1440 = vunpack.c.0.s8 %v1439
        %vm1441 = vcmp.ne.s32.totalorder %v1440, 0
        %v1442 = vsel %vm1441, %v1434, -1e+30
        %vm1443 = vcmask 64512
        %v1444 = vsel %vm1443, %v1442, -inf
        %1445 = vmax.xlane.f32.xlu0 %v1444
        %v1446 = vpop.xlane.xlu0 %1445
        %v1447 = vsub.f32 %v1442, %v1446
        %v1448 = vmul.f32 %v1447, 1.442695
        %v1449 = vpow.pop %v1448
        %v1450 = vsel %vm1443, %v1449, 0.0
        %1451 = vadd.xlane.f32.xlu0 %v1450
        %v1452 = vpop.xlane.xlu0 %1451
        %v1453 = vrcp.pop %v1452
        %v1454 = vmul.f32 %v1449, %v1453
        %v1455 = vpack.c.bf16 %v1454, %v1454
        %v1457 = vsel %vm1443, %v1455, 0
        %vm1459 = vcmask 1043456
        %v1461 = vsel %vm1459, %v1383, 0
        %1463 = vmatprep.subr.bf16.mxu0 0
        %1464 = vmatpush1.bf16.msra.mxu0 0
        %1465 = vmatprep.subr.bf16.mxu0 0
        %1466 = vmatpush1.bf16.msra.mxu0 0
        %1467 = vmatprep.subr.bf16.mxu0 0
        %1468 = vmatpush1.bf16.msra.mxu0 0
        %1469 = vmatprep.subr.bf16.mxu0 0
        %1470 = vmatpush1.bf16.msra.mxu0 0
        %1471 = vmatprep.subr.bf16.mxu0 0
        %1472 = vmatpush1.bf16.msra.mxu0 0
        %1473 = vmatprep.subr.bf16.mxu0 0
        %1474 = vmatpush1.bf16.msra.mxu0 0
        %1475 = vmatprep.subr.bf16.mxu0 0
        %1476 = vmatpush1.bf16.msra.mxu0 0
        %1477 = vmatprep.subr.bf16.mxu0 0
        %1478 = vmatpush1.bf16.msra.mxu0 %v1461
        %1479 = vmatprep.subr.bf16.mxu0 0
        %1480 = vmatpush2.bf16.msra.mxu0 0
        %1481 = vmatprep.subr.bf16.mxu0 0
        %1482 = vmatpush2.bf16.msra.mxu0 0
        %1483 = vmatprep.subr.bf16.mxu0 0
        %1484 = vmatpush2.bf16.msra.mxu0 0
        %1485 = vmatprep.subr.bf16.mxu0 0
        %1486 = vmatpush2.bf16.msra.mxu0 0
        %1487 = vmatprep.subr.bf16.mxu0 0
        %1488 = vmatpush2.bf16.msra.mxu0 0
        %1489 = vmatprep.subr.bf16.mxu0 0
        %1490 = vmatpush2.bf16.msra.mxu0 0
        %1491 = vmatprep.subr.bf16.mxu0 0
        %1492 = vmatpush2.bf16.msra.mxu0 0
        %1493 = vmatprep.subr.bf16.mxu0 0
        %1494 = vmatpush2.bf16.msra.mxu0 0
        %1495 = vmatprep.mubr.bf16.mxu0 0
        %1496 = vmatmul.mubr.bf16.gmra.mxu0 %v1457
        %v1497 = vpop.f32.mrf.mxu0
        %v1498 = vadd.f32 0.0, %v1497
        %v1499 = vpop.f32.mrf.mxu0
        %v1500 = vpop.f32.mrf.mxu0
        %v1501 = vpop.f32.mrf.mxu0
        %1502 = vdwg.mxu0
        %v1503 = vpack.c.bf16 %v1498, %v1498
        %v1504 = vld [vmem:[#allocation7] sm:$0xf]
        %v1505 = vld [vmem:[#allocation7 + $0x4] sm:$0xf]
        %v1508 = vunpack.c.l.b16 %v1504
        %v1509 = vunpack.c.l.b16 %v1505
        %v1510 = vpack.c.b16 %v1509, %v1508
        %v1513 = vsel %vm1392, %v1503, 0
        %1515 = vmatprep.subr.bf16.mxu0 0
        %1516 = vmatpush1.bf16.msra.mxu0 0
        %1517 = vmatprep.subr.bf16.mxu0 0
        %1518 = vmatpush1.bf16.msra.mxu0 0
        %1519 = vmatprep.subr.bf16.mxu0 0
        %1520 = vmatpush1.bf16.msra.mxu0 0
        %1521 = vmatprep.subr.bf16.mxu0 0
        %1522 = vmatpush1.bf16.msra.mxu0 0
        %1523 = vmatprep.subr.bf16.mxu0 0
        %1524 = vmatpush1.bf16.msra.mxu0 0
        %1525 = vmatprep.subr.bf16.mxu0 0
        %1526 = vmatpush1.bf16.msra.mxu0 0
        %1527 = vmatprep.subr.bf16.mxu0 0
        %1528 = vmatpush1.bf16.msra.mxu0 0
        %1529 = vmatprep.subr.bf16.mxu0 0
        %1530 = vmatpush1.bf16.msra.mxu0 %v1510
        %1531 = vmatprep.subr.bf16.mxu0 0
        %1532 = vmatpush2.bf16.msra.mxu0 0
        %1533 = vmatprep.subr.bf16.mxu0 0
        %1534 = vmatpush2.bf16.msra.mxu0 0
        %1535 = vmatprep.subr.bf16.mxu0 0
        %1536 = vmatpush2.bf16.msra.mxu0 0
        %1537 = vmatprep.subr.bf16.mxu0 0
        %1538 = vmatpush2.bf16.msra.mxu0 0
        %1539 = vmatprep.subr.bf16.mxu0 0
        %1540 = vmatpush2.bf16.msra.mxu0 0
        %1541 = vmatprep.subr.bf16.mxu0 0
        %1542 = vmatpush2.bf16.msra.mxu0 0
        %1543 = vmatprep.subr.bf16.mxu0 0
        %1544 = vmatpush2.bf16.msra.mxu0 0
        %1545 = vmatprep.subr.bf16.mxu0 0
        %1546 = vmatpush2.bf16.msra.mxu0 0
        %1547 = vmatprep.mubr.bf16.mxu0 0
        %1548 = vmatmul.mubr.bf16.gmra.mxu0 %v1513
        %v1549 = vpop.f32.mrf.mxu0
        %v1550 = vadd.f32 0.0, %v1549
        %v1551 = vpop.f32.mrf.mxu0
        %v1552 = vpop.f32.mrf.mxu0
        %v1553 = vpop.f32.mrf.mxu0
        %1554 = vdwg.mxu0
        %v1555 = vadd.f32 %v1391, %v1550
        %1557 = vrot.lane.b32.xlu0 %v1223, 112
        %v1558 = vpop.permute.xlu0 %1557
        %1560 = vrot.lane.b32.xlu0 %v1303, 112
        %v1561 = vpop.permute.xlu0 %1560
        %v1563 = vsel %vm1392, %v1558, 0
        %v1566 = vsel %vm1392, %v1561, 0
        %1568 = vmatprep.subr.bf16.mxu0 0
        %1569 = vmatpush1.bf16.xpose.msra.mxu0 0
        %1570 = vmatprep.subr.bf16.mxu0 0
        %1571 = vmatpush1.bf16.xpose.msra.mxu0 0
        %1572 = vmatprep.subr.bf16.mxu0 0
        %1573 = vmatpush1.bf16.xpose.msra.mxu0 0
        %1574 = vmatprep.subr.bf16.mxu0 0
        %1575 = vmatpush1.bf16.xpose.msra.mxu0 0
        %1576 = vmatprep.subr.bf16.mxu0 0
        %1577 = vmatpush1.bf16.xpose.msra.mxu0 0
        %1578 = vmatprep.subr.bf16.mxu0 0
        %1579 = vmatpush1.bf16.xpose.msra.mxu0 0
        %1580 = vmatprep.subr.bf16.mxu0 0
        %1581 = vmatpush1.bf16.xpose.msra.mxu0 0
        %1582 = vmatprep.subr.bf16.mxu0 0
        %1583 = vmatpush1.bf16.xpose.msra.mxu0 %v1566
        %1584 = vmatprep.subr.bf16.mxu0 0
        %1585 = vmatpush2.bf16.xpose.msra.mxu0 0
        %1586 = vmatprep.subr.bf16.mxu0 0
        %1587 = vmatpush2.bf16.xpose.msra.mxu0 0
        %1588 = vmatprep.subr.bf16.mxu0 0
        %1589 = vmatpush2.bf16.xpose.msra.mxu0 0
        %1590 = vmatprep.subr.bf16.mxu0 0
        %1591 = vmatpush2.bf16.xpose.msra.mxu0 0
        %1592 = vmatprep.subr.bf16.mxu0 0
        %1593 = vmatpush2.bf16.xpose.msra.mxu0 0
        %1594 = vmatprep.subr.bf16.mxu0 0
        %1595 = vmatpush2.bf16.xpose.msra.mxu0 0
        %1596 = vmatprep.subr.bf16.mxu0 0
        %1597 = vmatpush2.bf16.xpose.msra.mxu0 0
        %1598 = vmatprep.subr.bf16.mxu0 0
        %1599 = vmatpush2.bf16.xpose.msra.mxu0 0
        %1600 = vmatprep.mubr.bf16.mxu0 0
        %1601 = vmatmul.mubr.bf16.gmra.mxu0 %v1563
        %v1602 = vpop.f32.mrf.mxu0
        %v1603 = vadd.f32 0.0, %v1602
        %v1604 = vpop.f32.mrf.mxu0
        %v1605 = vpop.f32.mrf.mxu0
        %v1606 = vpop.f32.mrf.mxu0
        %1607 = vdwg.mxu0
        %v1608 = vsel %vm1441, %v1603, -1e+30
        %v1609 = vsel %vm1443, %v1608, -inf
        %1610 = vmax.xlane.f32.xlu0 %v1609
        %v1611 = vpop.xlane.xlu0 %1610
        %v1612 = vsub.f32 %v1608, %v1611
        %v1613 = vmul.f32 %v1612, 1.442695
        %v1614 = vpow.pop %v1613
        %v1615 = vsel %vm1443, %v1614, 0.0
        %1616 = vadd.xlane.f32.xlu0 %v1615
        %v1617 = vpop.xlane.xlu0 %1616
        %v1618 = vrcp.pop %v1617
        %v1619 = vmul.f32 %v1614, %v1618
        %v1620 = vpack.c.bf16 %v1619, %v1619
        %1622 = vrot.lane.b32.xlu0 %v1383, 112
        %v1623 = vpop.permute.xlu0 %1622
        %v1625 = vsel %vm1443, %v1620, 0
        %v1628 = vsel %vm1459, %v1623, 0
        %1630 = vmatprep.subr.bf16.mxu0 0
        %1631 = vmatpush1.bf16.msra.mxu0 0
        %1632 = vmatprep.subr.bf16.mxu0 0
        %1633 = vmatpush1.bf16.msra.mxu0 0
        %1634 = vmatprep.subr.bf16.mxu0 0
        %1635 = vmatpush1.bf16.msra.mxu0 0
        %1636 = vmatprep.subr.bf16.mxu0 0
        %1637 = vmatpush1.bf16.msra.mxu0 0
        %1638 = vmatprep.subr.bf16.mxu0 0
        %1639 = vmatpush1.bf16.msra.mxu0 0
        %1640 = vmatprep.subr.bf16.mxu0 0
        %1641 = vmatpush1.bf16.msra.mxu0 0
        %1642 = vmatprep.subr.bf16.mxu0 0
        %1643 = vmatpush1.bf16.msra.mxu0 0
        %1644 = vmatprep.subr.bf16.mxu0 0
        %1645 = vmatpush1.bf16.msra.mxu0 %v1628
        %1646 = vmatprep.subr.bf16.mxu0 0
        %1647 = vmatpush2.bf16.msra.mxu0 0
        %1648 = vmatprep.subr.bf16.mxu0 0
        %1649 = vmatpush2.bf16.msra.mxu0 0
        %1650 = vmatprep.subr.bf16.mxu0 0
        %1651 = vmatpush2.bf16.msra.mxu0 0
        %1652 = vmatprep.subr.bf16.mxu0 0
        %1653 = vmatpush2.bf16.msra.mxu0 0
        %1654 = vmatprep.subr.bf16.mxu0 0
        %1655 = vmatpush2.bf16.msra.mxu0 0
        %1656 = vmatprep.subr.bf16.mxu0 0
        %1657 = vmatpush2.bf16.msra.mxu0 0
        %1658 = vmatprep.subr.bf16.mxu0 0
        %1659 = vmatpush2.bf16.msra.mxu0 0
        %1660 = vmatprep.subr.bf16.mxu0 0
        %1661 = vmatpush2.bf16.msra.mxu0 0
        %1662 = vmatprep.mubr.bf16.mxu0 0
        %1663 = vmatmul.mubr.bf16.gmra.mxu0 %v1625
        %v1664 = vpop.f32.mrf.mxu0
        %v1665 = vadd.f32 0.0, %v1664
        %v1666 = vpop.f32.mrf.mxu0
        %v1667 = vpop.f32.mrf.mxu0
        %v1668 = vpop.f32.mrf.mxu0
        %1669 = vdwg.mxu0
        %v1670 = vpack.c.bf16 %v1665, %v1665
        %v1671 = vld [vmem:[#allocation7 + $0x8] sm:$0xf]
        %v1672 = vld [vmem:[#allocation7 + $0xc] sm:$0xf]
        %v1675 = vunpack.c.l.b16 %v1671
        %v1676 = vunpack.c.l.b16 %v1672
        %v1677 = vpack.c.b16 %v1676, %v1675
        %v1680 = vsel %vm1392, %v1670, 0
        %1682 = vmatprep.subr.bf16.mxu0 0
        %1683 = vmatpush1.bf16.msra.mxu0 0
        %1684 = vmatprep.subr.bf16.mxu0 0
        %1685 = vmatpush1.bf16.msra.mxu0 0
        %1686 = vmatprep.subr.bf16.mxu0 0
        %1687 = vmatpush1.bf16.msra.mxu0 0
        %1688 = vmatprep.subr.bf16.mxu0 0
        %1689 = vmatpush1.bf16.msra.mxu0 0
        %1690 = vmatprep.subr.bf16.mxu0 0
        %1691 = vmatpush1.bf16.msra.mxu0 0
        %1692 = vmatprep.subr.bf16.mxu0 0
        %1693 = vmatpush1.bf16.msra.mxu0 0
        %1694 = vmatprep.subr.bf16.mxu0 0
        %1695 = vmatpush1.bf16.msra.mxu0 0
        %1696 = vmatprep.subr.bf16.mxu0 0
        %1697 = vmatpush1.bf16.msra.mxu0 %v1677
        %1698 = vmatprep.subr.bf16.mxu0 0
        %1699 = vmatpush2.bf16.msra.mxu0 0
        %1700 = vmatprep.subr.bf16.mxu0 0
        %1701 = vmatpush2.bf16.msra.mxu0 0
        %1702 = vmatprep.subr.bf16.mxu0 0
        %1703 = vmatpush2.bf16.msra.mxu0 0
        %1704 = vmatprep.subr.bf16.mxu0 0
        %1705 = vmatpush2.bf16.msra.mxu0 0
        %1706 = vmatprep.subr.bf16.mxu0 0
        %1707 = vmatpush2.bf16.msra.mxu0 0
        %1708 = vmatprep.subr.bf16.mxu0 0
        %1709 = vmatpush2.bf16.msra.mxu0 0
        %1710 = vmatprep.subr.bf16.mxu0 0
        %1711 = vmatpush2.bf16.msra.mxu0 0
        %1712 = vmatprep.subr.bf16.mxu0 0
        %1713 = vmatpush2.bf16.msra.mxu0 0
        %1714 = vmatprep.mubr.bf16.mxu0 0
        %1715 = vmatmul.mubr.bf16.gmra.mxu0 %v1680
        %v1716 = vpop.f32.mrf.mxu0
        %v1717 = vadd.f32 0.0, %v1716
        %v1718 = vpop.f32.mrf.mxu0
        %v1719 = vpop.f32.mrf.mxu0
        %v1720 = vpop.f32.mrf.mxu0
        %1721 = vdwg.mxu0
        %v1722 = vadd.f32 %v1555, %v1717
        %1723 = vrot.lane.b32.xlu0 %v1223, 96
        %v1724 = vpop.permute.xlu0 %1723
        %1725 = vrot.lane.b32.xlu0 %v1303, 96
        %v1726 = vpop.permute.xlu0 %1725
        %v1728 = vsel %vm1392, %v1724, 0
        %v1731 = vsel %vm1392, %v1726, 0
        %1733 = vmatprep.subr.bf16.mxu0 0
        %1734 = vmatpush1.bf16.xpose.msra.mxu0 0
        %1735 = vmatprep.subr.bf16.mxu0 0
        %1736 = vmatpush1.bf16.xpose.msra.mxu0 0
        %1737 = vmatprep.subr.bf16.mxu0 0
        %1738 = vmatpush1.bf16.xpose.msra.mxu0 0
        %1739 = vmatprep.subr.bf16.mxu0 0
        %1740 = vmatpush1.bf16.xpose.msra.mxu0 0
        %1741 = vmatprep.subr.bf16.mxu0 0
        %1742 = vmatpush1.bf16.xpose.msra.mxu0 0
        %1743 = vmatprep.subr.bf16.mxu0 0
        %1744 = vmatpush1.bf16.xpose.msra.mxu0 0
        %1745 = vmatprep.subr.bf16.mxu0 0
        %1746 = vmatpush1.bf16.xpose.msra.mxu0 0
        %1747 = vmatprep.subr.bf16.mxu0 0
        %1748 = vmatpush1.bf16.xpose.msra.mxu0 %v1731
        %1749 = vmatprep.subr.bf16.mxu0 0
        %1750 = vmatpush2.bf16.xpose.msra.mxu0 0
        %1751 = vmatprep.subr.bf16.mxu0 0
        %1752 = vmatpush2.bf16.xpose.msra.mxu0 0
        %1753 = vmatprep.subr.bf16.mxu0 0
        %1754 = vmatpush2.bf16.xpose.msra.mxu0 0
        %1755 = vmatprep.subr.bf16.mxu0 0
        %1756 = vmatpush2.bf16.xpose.msra.mxu0 0
        %1757 = vmatprep.subr.bf16.mxu0 0
        %1758 = vmatpush2.bf16.xpose.msra.mxu0 0
        %1759 = vmatprep.subr.bf16.mxu0 0
        %1760 = vmatpush2.bf16.xpose.msra.mxu0 0
        %1761 = vmatprep.subr.bf16.mxu0 0
        %1762 = vmatpush2.bf16.xpose.msra.mxu0 0
        %1763 = vmatprep.subr.bf16.mxu0 0
        %1764 = vmatpush2.bf16.xpose.msra.mxu0 0
        %1765 = vmatprep.mubr.bf16.mxu0 0
        %1766 = vmatmul.mubr.bf16.gmra.mxu0 %v1728
        %v1767 = vpop.f32.mrf.mxu0
        %v1768 = vadd.f32 0.0, %v1767
        %v1769 = vpop.f32.mrf.mxu0
        %v1770 = vpop.f32.mrf.mxu0
        %v1771 = vpop.f32.mrf.mxu0
        %1772 = vdwg.mxu0
        %v1773 = vsel %vm1441, %v1768, -1e+30
        %v1774 = vsel %vm1443, %v1773, -inf
        %1775 = vmax.xlane.f32.xlu0 %v1774
        %v1776 = vpop.xlane.xlu0 %1775
        %v1777 = vsub.f32 %v1773, %v1776
        %v1778 = vmul.f32 %v1777, 1.442695
        %v1779 = vpow.pop %v1778
        %v1780 = vsel %vm1443, %v1779, 0.0
        %1781 = vadd.xlane.f32.xlu0 %v1780
        %v1782 = vpop.xlane.xlu0 %1781
        %v1783 = vrcp.pop %v1782
        %v1784 = vmul.f32 %v1779, %v1783
        %v1785 = vpack.c.bf16 %v1784, %v1784
        %1786 = vrot.lane.b32.xlu0 %v1383, 96
        %v1787 = vpop.permute.xlu0 %1786
        %v1789 = vsel %vm1443, %v1785, 0
        %v1792 = vsel %vm1459, %v1787, 0
        %1794 = vmatprep.subr.bf16.mxu0 0
        %1795 = vmatpush1.bf16.msra.mxu0 0
        %1796 = vmatprep.subr.bf16.mxu0 0
        %1797 = vmatpush1.bf16.msra.mxu0 0
        %1798 = vmatprep.subr.bf16.mxu0 0
        %1799 = vmatpush1.bf16.msra.mxu0 0
        %1800 = vmatprep.subr.bf16.mxu0 0
        %1801 = vmatpush1.bf16.msra.mxu0 0
        %1802 = vmatprep.subr.bf16.mxu0 0
        %1803 = vmatpush1.bf16.msra.mxu0 0
        %1804 = vmatprep.subr.bf16.mxu0 0
        %1805 = vmatpush1.bf16.msra.mxu0 0
        %1806 = vmatprep.subr.bf16.mxu0 0
        %1807 = vmatpush1.bf16.msra.mxu0 0
        %1808 = vmatprep.subr.bf16.mxu0 0
        %1809 = vmatpush1.bf16.msra.mxu0 %v1792
        %1810 = vmatprep.subr.bf16.mxu0 0
        %1811 = vmatpush2.bf16.msra.mxu0 0
        %1812 = vmatprep.subr.bf16.mxu0 0
        %1813 = vmatpush2.bf16.msra.mxu0 0
        %1814 = vmatprep.subr.bf16.mxu0 0
        %1815 = vmatpush2.bf16.msra.mxu0 0
        %1816 = vmatprep.subr.bf16.mxu0 0
        %1817 = vmatpush2.bf16.msra.mxu0 0
        %1818 = vmatprep.subr.bf16.mxu0 0
        %1819 = vmatpush2.bf16.msra.mxu0 0
        %1820 = vmatprep.subr.bf16.mxu0 0
        %1821 = vmatpush2.bf16.msra.mxu0 0
        %1822 = vmatprep.subr.bf16.mxu0 0
        %1823 = vmatpush2.bf16.msra.mxu0 0
        %1824 = vmatprep.subr.bf16.mxu0 0
        %1825 = vmatpush2.bf16.msra.mxu0 0
        %1826 = vmatprep.mubr.bf16.mxu0 0
        %1827 = vmatmul.mubr.bf16.gmra.mxu0 %v1789
        %v1828 = vpop.f32.mrf.mxu0
        %v1829 = vadd.f32 0.0, %v1828
        %v1830 = vpop.f32.mrf.mxu0
        %v1831 = vpop.f32.mrf.mxu0
        %v1832 = vpop.f32.mrf.mxu0
        %1833 = vdwg.mxu0
        %v1834 = vpack.c.bf16 %v1829, %v1829
        %v1835 = vld [vmem:[#allocation7 + $0x10] sm:$0xf]
        %v1836 = vld [vmem:[#allocation7 + $0x14] sm:$0xf]
        %v1839 = vunpack.c.l.b16 %v1835
        %v1840 = vunpack.c.l.b16 %v1836
        %v1841 = vpack.c.b16 %v1840, %v1839
        %v1844 = vsel %vm1392, %v1834, 0
        %1846 = vmatprep.subr.bf16.mxu0 0
        %1847 = vmatpush1.bf16.msra.mxu0 0
        %1848 = vmatprep.subr.bf16.mxu0 0
        %1849 = vmatpush1.bf16.msra.mxu0 0
        %1850 = vmatprep.subr.bf16.mxu0 0
        %1851 = vmatpush1.bf16.msra.mxu0 0
        %1852 = vmatprep.subr.bf16.mxu0 0
        %1853 = vmatpush1.bf16.msra.mxu0 0
        %1854 = vmatprep.subr.bf16.mxu0 0
        %1855 = vmatpush1.bf16.msra.mxu0 0
        %1856 = vmatprep.subr.bf16.mxu0 0
        %1857 = vmatpush1.bf16.msra.mxu0 0
        %1858 = vmatprep.subr.bf16.mxu0 0
        %1859 = vmatpush1.bf16.msra.mxu0 0
        %1860 = vmatprep.subr.bf16.mxu0 0
        %1861 = vmatpush1.bf16.msra.mxu0 %v1841
        %1862 = vmatprep.subr.bf16.mxu0 0
        %1863 = vmatpush2.bf16.msra.mxu0 0
        %1864 = vmatprep.subr.bf16.mxu0 0
        %1865 = vmatpush2.bf16.msra.mxu0 0
        %1866 = vmatprep.subr.bf16.mxu0 0
        %1867 = vmatpush2.bf16.msra.mxu0 0
        %1868 = vmatprep.subr.bf16.mxu0 0
        %1869 = vmatpush2.bf16.msra.mxu0 0
        %1870 = vmatprep.subr.bf16.mxu0 0
        %1871 = vmatpush2.bf16.msra.mxu0 0
        %1872 = vmatprep.subr.bf16.mxu0 0
        %1873 = vmatpush2.bf16.msra.mxu0 0
        %1874 = vmatprep.subr.bf16.mxu0 0
        %1875 = vmatpush2.bf16.msra.mxu0 0
        %1876 = vmatprep.subr.bf16.mxu0 0
        %1877 = vmatpush2.bf16.msra.mxu0 0
        %1878 = vmatprep.mubr.bf16.mxu0 0
        %1879 = vmatmul.mubr.bf16.gmra.mxu0 %v1844
        %v1880 = vpop.f32.mrf.mxu0
        %v1881 = vadd.f32 0.0, %v1880
        %v1882 = vpop.f32.mrf.mxu0
        %v1883 = vpop.f32.mrf.mxu0
        %v1884 = vpop.f32.mrf.mxu0
        %1885 = vdwg.mxu0
        %v1886 = vadd.f32 %v1722, %v1881
        %1887 = vrot.lane.b32.xlu0 %v1223, 80
        %v1888 = vpop.permute.xlu0 %1887
        %1889 = vrot.lane.b32.xlu0 %v1303, 80
        %v1890 = vpop.permute.xlu0 %1889
        %v1892 = vsel %vm1392, %v1888, 0
        %v1895 = vsel %vm1392, %v1890, 0
        %1897 = vmatprep.subr.bf16.mxu0 0
        %1898 = vmatpush1.bf16.xpose.msra.mxu0 0
        %1899 = vmatprep.subr.bf16.mxu0 0
        %1900 = vmatpush1.bf16.xpose.msra.mxu0 0
        %1901 = vmatprep.subr.bf16.mxu0 0
        %1902 = vmatpush1.bf16.xpose.msra.mxu0 0
        %1903 = vmatprep.subr.bf16.mxu0 0
        %1904 = vmatpush1.bf16.xpose.msra.mxu0 0
        %1905 = vmatprep.subr.bf16.mxu0 0
        %1906 = vmatpush1.bf16.xpose.msra.mxu0 0
        %1907 = vmatprep.subr.bf16.mxu0 0
        %1908 = vmatpush1.bf16.xpose.msra.mxu0 0
        %1909 = vmatprep.subr.bf16.mxu0 0
        %1910 = vmatpush1.bf16.xpose.msra.mxu0 0
        %1911 = vmatprep.subr.bf16.mxu0 0
        %1912 = vmatpush1.bf16.xpose.msra.mxu0 %v1895
        %1913 = vmatprep.subr.bf16.mxu0 0
        %1914 = vmatpush2.bf16.xpose.msra.mxu0 0
        %1915 = vmatprep.subr.bf16.mxu0 0
        %1916 = vmatpush2.bf16.xpose.msra.mxu0 0
        %1917 = vmatprep.subr.bf16.mxu0 0
        %1918 = vmatpush2.bf16.xpose.msra.mxu0 0
        %1919 = vmatprep.subr.bf16.mxu0 0
        %1920 = vmatpush2.bf16.xpose.msra.mxu0 0
        %1921 = vmatprep.subr.bf16.mxu0 0
        %1922 = vmatpush2.bf16.xpose.msra.mxu0 0
        %1923 = vmatprep.subr.bf16.mxu0 0
        %1924 = vmatpush2.bf16.xpose.msra.mxu0 0
        %1925 = vmatprep.subr.bf16.mxu0 0
        %1926 = vmatpush2.bf16.xpose.msra.mxu0 0
        %1927 = vmatprep.subr.bf16.mxu0 0
        %1928 = vmatpush2.bf16.xpose.msra.mxu0 0
        %1929 = vmatprep.mubr.bf16.mxu0 0
        %1930 = vmatmul.mubr.bf16.gmra.mxu0 %v1892
        %v1931 = vpop.f32.mrf.mxu0
        %v1932 = vadd.f32 0.0, %v1931
        %v1933 = vpop.f32.mrf.mxu0
        %v1934 = vpop.f32.mrf.mxu0
        %v1935 = vpop.f32.mrf.mxu0
        %1936 = vdwg.mxu0
        %v1937 = vsel %vm1441, %v1932, -1e+30
        %v1938 = vsel %vm1443, %v1937, -inf
        %1939 = vmax.xlane.f32.xlu0 %v1938
        %v1940 = vpop.xlane.xlu0 %1939
        %v1941 = vsub.f32 %v1937, %v1940
        %v1942 = vmul.f32 %v1941, 1.442695
        %v1943 = vpow.pop %v1942
        %v1944 = vsel %vm1443, %v1943, 0.0
        %1945 = vadd.xlane.f32.xlu0 %v1944
        %v1946 = vpop.xlane.xlu0 %1945
        %v1947 = vrcp.pop %v1946
        %v1948 = vmul.f32 %v1943, %v1947
        %v1949 = vpack.c.bf16 %v1948, %v1948
        %1950 = vrot.lane.b32.xlu0 %v1383, 80
        %v1951 = vpop.permute.xlu0 %1950
        %v1953 = vsel %vm1443, %v1949, 0
        %v1956 = vsel %vm1459, %v1951, 0
        %1958 = vmatprep.subr.bf16.mxu0 0
        %1959 = vmatpush1.bf16.msra.mxu0 0
        %1960 = vmatprep.subr.bf16.mxu0 0
        %1961 = vmatpush1.bf16.msra.mxu0 0
        %1962 = vmatprep.subr.bf16.mxu0 0
        %1963 = vmatpush1.bf16.msra.mxu0 0
        %1964 = vmatprep.subr.bf16.mxu0 0
        %1965 = vmatpush1.bf16.msra.mxu0 0
        %1966 = vmatprep.subr.bf16.mxu0 0
        %1967 = vmatpush1.bf16.msra.mxu0 0
        %1968 = vmatprep.subr.bf16.mxu0 0
        %1969 = vmatpush1.bf16.msra.mxu0 0
        %1970 = vmatprep.subr.bf16.mxu0 0
        %1971 = vmatpush1.bf16.msra.mxu0 0
        %1972 = vmatprep.subr.bf16.mxu0 0
        %1973 = vmatpush1.bf16.msra.mxu0 %v1956
        %1974 = vmatprep.subr.bf16.mxu0 0
        %1975 = vmatpush2.bf16.msra.mxu0 0
        %1976 = vmatprep.subr.bf16.mxu0 0
        %1977 = vmatpush2.bf16.msra.mxu0 0
        %1978 = vmatprep.subr.bf16.mxu0 0
        %1979 = vmatpush2.bf16.msra.mxu0 0
        %1980 = vmatprep.subr.bf16.mxu0 0
        %1981 = vmatpush2.bf16.msra.mxu0 0
        %1982 = vmatprep.subr.bf16.mxu0 0
        %1983 = vmatpush2.bf16.msra.mxu0 0
        %1984 = vmatprep.subr.bf16.mxu0 0
        %1985 = vmatpush2.bf16.msra.mxu0 0
        %1986 = vmatprep.subr.bf16.mxu0 0
        %1987 = vmatpush2.bf16.msra.mxu0 0
        %1988 = vmatprep.subr.bf16.mxu0 0
        %1989 = vmatpush2.bf16.msra.mxu0 0
        %1990 = vmatprep.mubr.bf16.mxu0 0
        %1991 = vmatmul.mubr.bf16.gmra.mxu0 %v1953
        %v1992 = vpop.f32.mrf.mxu0
        %v1993 = vadd.f32 0.0, %v1992
        %v1994 = vpop.f32.mrf.mxu0
        %v1995 = vpop.f32.mrf.mxu0
        %v1996 = vpop.f32.mrf.mxu0
        %1997 = vdwg.mxu0
        %v1998 = vpack.c.bf16 %v1993, %v1993
        %v1999 = vld [vmem:[#allocation7 + $0x18] sm:$0xf]
        %v2000 = vld [vmem:[#allocation7 + $0x1c] sm:$0xf]
        %v2003 = vunpack.c.l.b16 %v1999
        %v2004 = vunpack.c.l.b16 %v2000
        %v2005 = vpack.c.b16 %v2004, %v2003
        %v2008 = vsel %vm1392, %v1998, 0
        %2010 = vmatprep.subr.bf16.mxu0 0
        %2011 = vmatpush1.bf16.msra.mxu0 0
        %2012 = vmatprep.subr.bf16.mxu0 0
        %2013 = vmatpush1.bf16.msra.mxu0 0
        %2014 = vmatprep.subr.bf16.mxu0 0
        %2015 = vmatpush1.bf16.msra.mxu0 0
        %2016 = vmatprep.subr.bf16.mxu0 0
        %2017 = vmatpush1.bf16.msra.mxu0 0
        %2018 = vmatprep.subr.bf16.mxu0 0
        %2019 = vmatpush1.bf16.msra.mxu0 0
        %2020 = vmatprep.subr.bf16.mxu0 0
        %2021 = vmatpush1.bf16.msra.mxu0 0
        %2022 = vmatprep.subr.bf16.mxu0 0
        %2023 = vmatpush1.bf16.msra.mxu0 0
        %2024 = vmatprep.subr.bf16.mxu0 0
        %2025 = vmatpush1.bf16.msra.mxu0 %v2005
        %2026 = vmatprep.subr.bf16.mxu0 0
        %2027 = vmatpush2.bf16.msra.mxu0 0
        %2028 = vmatprep.subr.bf16.mxu0 0
        %2029 = vmatpush2.bf16.msra.mxu0 0
        %2030 = vmatprep.subr.bf16.mxu0 0
        %2031 = vmatpush2.bf16.msra.mxu0 0
        %2032 = vmatprep.subr.bf16.mxu0 0
        %2033 = vmatpush2.bf16.msra.mxu0 0
        %2034 = vmatprep.subr.bf16.mxu0 0
        %2035 = vmatpush2.bf16.msra.mxu0 0
        %2036 = vmatprep.subr.bf16.mxu0 0
        %2037 = vmatpush2.bf16.msra.mxu0 0
        %2038 = vmatprep.subr.bf16.mxu0 0
        %2039 = vmatpush2.bf16.msra.mxu0 0
        %2040 = vmatprep.subr.bf16.mxu0 0
        %2041 = vmatpush2.bf16.msra.mxu0 0
        %2042 = vmatprep.mubr.bf16.mxu0 0
        %2043 = vmatmul.mubr.bf16.gmra.mxu0 %v2008
        %v2044 = vpop.f32.mrf.mxu0
        %v2045 = vadd.f32 0.0, %v2044
        %v2046 = vpop.f32.mrf.mxu0
        %v2047 = vpop.f32.mrf.mxu0
        %v2048 = vpop.f32.mrf.mxu0
        %2049 = vdwg.mxu0
        %v2050 = vadd.f32 %v1886, %v2045
        %v2051 = vadd.f32 %v1102, %v2050
        %v2052 = vld [vmem:[%s29] sm:$0x1]
        %v2053 = vld [vmem:[%s31] sm:$0x1]
        %v2054 = vsel %vm1111, %v2051, 0.0
        %2055 = vadd.xlane.f32.xlu0 %v2054
        %v2056 = vpop.xlane.xlu0 %2055
        %v2057 = vmul.f32 %v2056, %v1115
        %v2058 = vsub.f32 %v2051, %v2057
        %v2059 = vmul.f32 %v2058, %v2058
        %v2060 = vsel %vm1111, %v2059, 0.0
        %2061 = vadd.xlane.f32.xlu0 %v2060
        %v2062 = vpop.xlane.xlu0 %2061
        %v2063 = vmul.f32 %v2062, %v1115
        %v2064 = vadd.f32 %v2063, 1e-05
        %v2065 = vrsqrt.pop %v2064
        %v2066 = vmul.f32 %v2058, %v2065
        %v2068 = vlaneseq
        %v2069 = vshrl.u32 %v2068, 7
        %v2070 = vsub.s32 0, %v2069
        %v2071 = vrot.slane %v2052, %v2070
        %v2073 = vmul.f32 %v2066, %v2071
        %v2075 = vlaneseq
        %v2076 = vshrl.u32 %v2075, 7
        %v2077 = vsub.s32 0, %v2076
        %v2078 = vrot.slane %v2053, %v2077
        %v2080 = vadd.f32 %v2073, %v2078
        %v2081 = vpack.c.bf16 %v2080, %v2080
        %v2082 = vpack.c.bf16 %v1104, %v1103
        %v2083 = vld [vmem:[#allocation8] sm:$0xf]
        %v2084 = vld [vmem:[#allocation8 + $0x4] sm:$0xf]
        %v2085 = vld [vmem:[#allocation8 + $0x8] sm:$0xf]
        %v2086 = vld [vmem:[#allocation8 + $0xc] sm:$0xf]
        %v2087 = vld [vmem:[#allocation8 + $0x10] sm:$0xf]
        %v2088 = vld [vmem:[#allocation8 + $0x14] sm:$0xf]
        %v2089 = vld [vmem:[#allocation8 + $0x18] sm:$0xf]
        %v2090 = vld [vmem:[#allocation8 + $0x1c] sm:$0xf]
        %v2091 = vld [vmem:[%s35] sm:$0x1]
        %v2093 = vlaneseq
        %v2094 = vshrl.u32 %v2093, 7
        %v2095 = vsub.s32 0, %v2094
        %v2096 = vrot.slane %v2091, %v2095
        %v2106 = vunpack.c.l.b16 %v2083
        %v2107 = vunpack.c.l.b16 %v2084
        %v2108 = vunpack.c.l.b16 %v2085
        %v2109 = vunpack.c.l.b16 %v2086
        %v2110 = vunpack.c.l.b16 %v2087
        %v2111 = vunpack.c.l.b16 %v2088
        %v2112 = vunpack.c.l.b16 %v2089
        %v2113 = vunpack.c.l.b16 %v2090
        %v2114 = vpack.c.b16 %v2107, %v2106
        %v2115 = vpack.c.b16 %v2109, %v2108
        %v2116 = vpack.c.b16 %v2111, %v2110
        %v2117 = vpack.c.b16 %v2113, %v2112
        %v2123 = vsel %vm1111, %v2081, 0
        %2125 = vmatprep.subr.bf16.mxu0 0
        %2126 = vmatpush1.bf16.msra.mxu0 0
        %2127 = vmatprep.subr.bf16.mxu0 0
        %2128 = vmatpush1.bf16.msra.mxu0 0
        %2129 = vmatprep.subr.bf16.mxu0 0
        %2130 = vmatpush1.bf16.msra.mxu0 0
        %2131 = vmatprep.subr.bf16.mxu0 0
        %2132 = vmatpush1.bf16.msra.mxu0 0
        %2133 = vmatprep.subr.bf16.mxu0 0
        %2134 = vmatpush1.bf16.msra.mxu0 %v2117
        %2135 = vmatprep.subr.bf16.mxu0 0
        %2136 = vmatpush1.bf16.msra.mxu0 %v2116
        %2137 = vmatprep.subr.bf16.mxu0 0
        %2138 = vmatpush1.bf16.msra.mxu0 %v2115
        %2139 = vmatprep.subr.bf16.mxu0 0
        %2140 = vmatpush1.bf16.msra.mxu0 %v2114
        %2141 = vmatprep.subr.bf16.mxu0 0
        %2142 = vmatpush2.bf16.msra.mxu0 0
        %2143 = vmatprep.subr.bf16.mxu0 0
        %2144 = vmatpush2.bf16.msra.mxu0 0
        %2145 = vmatprep.subr.bf16.mxu0 0
        %2146 = vmatpush2.bf16.msra.mxu0 0
        %2147 = vmatprep.subr.bf16.mxu0 0
        %2148 = vmatpush2.bf16.msra.mxu0 0
        %2149 = vmatprep.subr.bf16.mxu0 0
        %2150 = vmatpush2.bf16.msra.mxu0 0
        %2151 = vmatprep.subr.bf16.mxu0 0
        %2152 = vmatpush2.bf16.msra.mxu0 0
        %2153 = vmatprep.subr.bf16.mxu0 0
        %2154 = vmatpush2.bf16.msra.mxu0 0
        %2155 = vmatprep.subr.bf16.mxu0 0
        %2156 = vmatpush2.bf16.msra.mxu0 0
        %2157 = vmatprep.mubr.bf16.mxu0 0
        %2158 = vmatmul.mubr.bf16.gmra.mxu0 %v2123
        %v2159 = vpop.f32.mrf.mxu0
        %v2160 = vadd.f32 %v2096, %v2159
        %v2161 = vpop.f32.mrf.mxu0
        %v2162 = vpop.f32.mrf.mxu0
        %v2163 = vpop.f32.mrf.mxu0
        %2164 = vdwg.mxu0
        %v2165 = vpack.c.bf16 %v2160, %v2160
        %v2166 = vld [vmem:[#allocation10] sm:$0xf]
        %v2167 = vld [vmem:[#allocation10 + $0x4] sm:$0xf]
        %v2168 = vld [vmem:[#allocation10 + $0x8] sm:$0xf]
        %v2169 = vld [vmem:[#allocation10 + $0xc] sm:$0xf]
        %v2170 = vld [vmem:[#allocation10 + $0x10] sm:$0xf]
        %v2171 = vld [vmem:[#allocation10 + $0x14] sm:$0xf]
        %v2172 = vld [vmem:[#allocation10 + $0x18] sm:$0xf]
        %v2173 = vld [vmem:[#allocation10 + $0x1c] sm:$0xf]
        %v2174 = vld [vmem:[%s39] sm:$0x1]
        %v2176 = vlaneseq
        %v2177 = vshrl.u32 %v2176, 7
        %v2178 = vsub.s32 0, %v2177
        %v2179 = vrot.slane %v2174, %v2178
        %v2189 = vunpack.c.l.b16 %v2166
        %v2190 = vunpack.c.l.b16 %v2167
        %v2191 = vunpack.c.l.b16 %v2168
        %v2192 = vunpack.c.l.b16 %v2169
        %v2193 = vunpack.c.l.b16 %v2170
        %v2194 = vunpack.c.l.b16 %v2171
        %v2195 = vunpack.c.l.b16 %v2172
        %v2196 = vunpack.c.l.b16 %v2173
        %v2197 = vpack.c.b16 %v2190, %v2189
        %v2198 = vpack.c.b16 %v2192, %v2191
        %v2199 = vpack.c.b16 %v2194, %v2193
        %v2200 = vpack.c.b16 %v2196, %v2195
        %v2206 = vsel %vm1111, %v2082, 0
        %2208 = vmatprep.subr.bf16.mxu0 0
        %2209 = vmatpush1.bf16.msra.mxu0 0
        %2210 = vmatprep.subr.bf16.mxu0 0
        %2211 = vmatpush1.bf16.msra.mxu0 0
        %2212 = vmatprep.subr.bf16.mxu0 0
        %2213 = vmatpush1.bf16.msra.mxu0 0
        %2214 = vmatprep.subr.bf16.mxu0 0
        %2215 = vmatpush1.bf16.msra.mxu0 0
        %2216 = vmatprep.subr.bf16.mxu0 0
        %2217 = vmatpush1.bf16.msra.mxu0 %v2200
        %2218 = vmatprep.subr.bf16.mxu0 0
        %2219 = vmatpush1.bf16.msra.mxu0 %v2199
        %2220 = vmatprep.subr.bf16.mxu0 0
        %2221 = vmatpush1.bf16.msra.mxu0 %v2198
        %2222 = vmatprep.subr.bf16.mxu0 0
        %2223 = vmatpush1.bf16.msra.mxu0 %v2197
        %2224 = vmatprep.subr.bf16.mxu0 0
        %2225 = vmatpush2.bf16.msra.mxu0 0
        %2226 = vmatprep.subr.bf16.mxu0 0
        %2227 = vmatpush2.bf16.msra.mxu0 0
        %2228 = vmatprep.subr.bf16.mxu0 0
        %2229 = vmatpush2.bf16.msra.mxu0 0
        %2230 = vmatprep.subr.bf16.mxu0 0
        %2231 = vmatpush2.bf16.msra.mxu0 0
        %2232 = vmatprep.subr.bf16.mxu0 0
        %2233 = vmatpush2.bf16.msra.mxu0 0
        %2234 = vmatprep.subr.bf16.mxu0 0
        %2235 = vmatpush2.bf16.msra.mxu0 0
        %2236 = vmatprep.subr.bf16.mxu0 0
        %2237 = vmatpush2.bf16.msra.mxu0 0
        %2238 = vmatprep.subr.bf16.mxu0 0
        %2239 = vmatpush2.bf16.msra.mxu0 0
        %2240 = vmatprep.mubr.bf16.mxu0 0
        %2241 = vmatmul.mubr.bf16.gmra.mxu0 %v2206
        %v2242 = vpop.f32.mrf.mxu0
        %v2243 = vadd.f32 %v2179, %v2242
        %v2244 = vpop.f32.mrf.mxu0
        %v2245 = vpop.f32.mrf.mxu0
        %v2246 = vadd.f32 %v2179, %v2245
        %v2247 = vpop.f32.mrf.mxu0
        %2248 = vdwg.mxu0
        %v2249 = vpack.c.bf16 %v2246, %v2243
        %v2250 = vld [vmem:[#allocation11] sm:$0xf]
        %v2251 = vld [vmem:[#allocation11 + $0x4] sm:$0xf]
        %v2252 = vld [vmem:[#allocation11 + $0x8] sm:$0xf]
        %v2253 = vld [vmem:[#allocation11 + $0xc] sm:$0xf]
        %v2254 = vld [vmem:[#allocation11 + $0x10] sm:$0xf]
        %v2255 = vld [vmem:[#allocation11 + $0x14] sm:$0xf]
        %v2256 = vld [vmem:[#allocation11 + $0x18] sm:$0xf]
        %v2257 = vld [vmem:[#allocation11 + $0x1c] sm:$0xf]
        %v2258 = vld [vmem:[%s43] sm:$0x1]
        %v2260 = vlaneseq
        %v2261 = vshrl.u32 %v2260, 7
        %v2262 = vsub.s32 0, %v2261
        %v2263 = vrot.slane %v2258, %v2262
        %v2273 = vunpack.c.l.b16 %v2250
        %v2274 = vunpack.c.l.b16 %v2251
        %v2275 = vunpack.c.l.b16 %v2252
        %v2276 = vunpack.c.l.b16 %v2253
        %v2277 = vunpack.c.l.b16 %v2254
        %v2278 = vunpack.c.l.b16 %v2255
        %v2279 = vunpack.c.l.b16 %v2256
        %v2280 = vunpack.c.l.b16 %v2257
        %v2281 = vpack.c.b16 %v2274, %v2273
        %v2282 = vpack.c.b16 %v2276, %v2275
        %v2283 = vpack.c.b16 %v2278, %v2277
        %v2284 = vpack.c.b16 %v2280, %v2279
        %2289 = vmatprep.subr.bf16.mxu0 0
        %2290 = vmatpush1.bf16.msra.mxu0 0
        %2291 = vmatprep.subr.bf16.mxu0 0
        %2292 = vmatpush1.bf16.msra.mxu0 0
        %2293 = vmatprep.subr.bf16.mxu0 0
        %2294 = vmatpush1.bf16.msra.mxu0 0
        %2295 = vmatprep.subr.bf16.mxu0 0
        %2296 = vmatpush1.bf16.msra.mxu0 0
        %2297 = vmatprep.subr.bf16.mxu0 0
        %2298 = vmatpush1.bf16.msra.mxu0 %v2284
        %2299 = vmatprep.subr.bf16.mxu0 0
        %2300 = vmatpush1.bf16.msra.mxu0 %v2283
        %2301 = vmatprep.subr.bf16.mxu0 0
        %2302 = vmatpush1.bf16.msra.mxu0 %v2282
        %2303 = vmatprep.subr.bf16.mxu0 0
        %2304 = vmatpush1.bf16.msra.mxu0 %v2281
        %2305 = vmatprep.subr.bf16.mxu0 0
        %2306 = vmatpush2.bf16.msra.mxu0 0
        %2307 = vmatprep.subr.bf16.mxu0 0
        %2308 = vmatpush2.bf16.msra.mxu0 0
        %2309 = vmatprep.subr.bf16.mxu0 0
        %2310 = vmatpush2.bf16.msra.mxu0 0
        %2311 = vmatprep.subr.bf16.mxu0 0
        %2312 = vmatpush2.bf16.msra.mxu0 0
        %2313 = vmatprep.subr.bf16.mxu0 0
        %2314 = vmatpush2.bf16.msra.mxu0 0
        %2315 = vmatprep.subr.bf16.mxu0 0
        %2316 = vmatpush2.bf16.msra.mxu0 0
        %2317 = vmatprep.subr.bf16.mxu0 0
        %2318 = vmatpush2.bf16.msra.mxu0 0
        %2319 = vmatprep.subr.bf16.mxu0 0
        %2320 = vmatpush2.bf16.msra.mxu0 0
        %2321 = vmatprep.mubr.bf16.mxu0 0
        %2322 = vmatmul.mubr.bf16.gmra.mxu0 %v2206
        %v2323 = vpop.f32.mrf.mxu0
        %v2324 = vadd.f32 %v2263, %v2323
        %v2325 = vpop.f32.mrf.mxu0
        %v2326 = vpop.f32.mrf.mxu0
        %v2327 = vadd.f32 %v2263, %v2326
        %v2328 = vpop.f32.mrf.mxu0
        %2329 = vdwg.mxu0
        %v2330 = vpack.c.bf16 %v2327, %v2324
        %v2331 = vld [vmem:[%s47] sm:$0x1]
        %v2333 = vlaneseq
        %v2334 = vshrl.u32 %v2333, 7
        %v2335 = vsub.s32 0, %v2334
        %v2336 = vrot.slane %v2331, %v2335
        %v2338 = vadd.f32 %v2336, 0.0
        %v2340 = vsel %vm1392, %v2165, 0
        %v2343 = vsel %vm1392, %v2249, 0
        %2345 = vmatprep.subr.bf16.mxu0 0
        %2346 = vmatpush1.bf16.xpose.msra.mxu0 0
        %2347 = vmatprep.subr.bf16.mxu0 0
        %2348 = vmatpush1.bf16.xpose.msra.mxu0 0
        %2349 = vmatprep.subr.bf16.mxu0 0
        %2350 = vmatpush1.bf16.xpose.msra.mxu0 0
        %2351 = vmatprep.subr.bf16.mxu0 0
        %2352 = vmatpush1.bf16.xpose.msra.mxu0 0
        %2353 = vmatprep.subr.bf16.mxu0 0
        %2354 = vmatpush1.bf16.xpose.msra.mxu0 0
        %2355 = vmatprep.subr.bf16.mxu0 0
        %2356 = vmatpush1.bf16.xpose.msra.mxu0 0
        %2357 = vmatprep.subr.bf16.mxu0 0
        %2358 = vmatpush1.bf16.xpose.msra.mxu0 0
        %2359 = vmatprep.subr.bf16.mxu0 0
        %2360 = vmatpush1.bf16.xpose.msra.mxu0 %v2343
        %2361 = vmatprep.subr.bf16.mxu0 0
        %2362 = vmatpush2.bf16.xpose.msra.mxu0 0
        %2363 = vmatprep.subr.bf16.mxu0 0
        %2364 = vmatpush2.bf16.xpose.msra.mxu0 0
        %2365 = vmatprep.subr.bf16.mxu0 0
        %2366 = vmatpush2.bf16.xpose.msra.mxu0 0
        %2367 = vmatprep.subr.bf16.mxu0 0
        %2368 = vmatpush2.bf16.xpose.msra.mxu0 0
        %2369 = vmatprep.subr.bf16.mxu0 0
        %2370 = vmatpush2.bf16.xpose.msra.mxu0 0
        %2371 = vmatprep.subr.bf16.mxu0 0
        %2372 = vmatpush2.bf16.xpose.msra.mxu0 0
        %2373 = vmatprep.subr.bf16.mxu0 0
        %2374 = vmatpush2.bf16.xpose.msra.mxu0 0
        %2375 = vmatprep.subr.bf16.mxu0 0
        %2376 = vmatpush2.bf16.xpose.msra.mxu0 0
        %2377 = vmatprep.mubr.bf16.mxu0 0
        %2378 = vmatmul.mubr.bf16.gmra.mxu0 %v2340
        %v2379 = vpop.f32.mrf.mxu0
        %v2380 = vadd.f32 0.0, %v2379
        %v2381 = vpop.f32.mrf.mxu0
        %v2382 = vpop.f32.mrf.mxu0
        %v2383 = vpop.f32.mrf.mxu0
        %2384 = vdwg.mxu0
        %v2385 = vsel %vm1108, 16843009, 0
        %v2386 = vunpack.c.0.s8 %v2385
        %vm2387 = vcmp.ne.s32.totalorder %v2386, 0
        %v2388 = vsel %vm2387, 1, 0
        %v2389 = vlaneseq
        %v2390 = vshrl.u32 %v2389, 7
        %v2391 = vsub.s32 0, %v2390
        %v2392 = vrot.slane %v2388, %v2391
        %vm2393 = vcmp.eq.s32.totalorder %v2392, 1
        %v2394 = vsel %vm2393, %v2380, -1e+30
        %v2395 = vsel %vm1392, %v2394, -inf
        %2396 = vmax.xlane.f32.xlu0 %v2395
        %v2397 = vpop.xlane.xlu0 %2396
        %v2398 = vsub.f32 %v2394, %v2397
        %v2399 = vmul.f32 %v2398, 1.442695
        %v2400 = vpow.pop %v2399
        %v2401 = vsel %vm1392, %v2400, 0.0
        %2402 = vadd.xlane.f32.xlu0 %v2401
        %v2403 = vpop.xlane.xlu0 %2402
        %v2404 = vrcp.pop %v2403
        %v2405 = vmul.f32 %v2400, %v2404
        %v2406 = vpack.c.bf16 %v2405, %v2405
        %v2408 = vsel %vm1392, %v2406, 0
        %2410 = vmatprep.subr.bf16.mxu0 0
        %2411 = vmatpush1.bf16.msra.mxu0 0
        %2412 = vmatprep.subr.bf16.mxu0 0
        %2413 = vmatpush1.bf16.msra.mxu0 0
        %2414 = vmatprep.subr.bf16.mxu0 0
        %2415 = vmatpush1.bf16.msra.mxu0 0
        %2416 = vmatprep.subr.bf16.mxu0 0
        %2417 = vmatpush1.bf16.msra.mxu0 0
        %2418 = vmatprep.subr.bf16.mxu0 0
        %2419 = vmatpush1.bf16.msra.mxu0 0
        %2420 = vmatprep.subr.bf16.mxu0 0
        %2421 = vmatpush1.bf16.msra.mxu0 0
        %2422 = vmatprep.subr.bf16.mxu0 0
        %2423 = vmatpush1.bf16.msra.mxu0 0
        %2424 = vmatprep.subr.bf16.mxu0 0
        %2425 = vmatpush1.bf16.msra.mxu0 %v2330
        %2426 = vmatprep.subr.bf16.mxu0 0
        %2427 = vmatpush2.bf16.msra.mxu0 0
        %2428 = vmatprep.subr.bf16.mxu0 0
        %2429 = vmatpush2.bf16.msra.mxu0 0
        %2430 = vmatprep.subr.bf16.mxu0 0
        %2431 = vmatpush2.bf16.msra.mxu0 0
        %2432 = vmatprep.subr.bf16.mxu0 0
        %2433 = vmatpush2.bf16.msra.mxu0 0
        %2434 = vmatprep.subr.bf16.mxu0 0
        %2435 = vmatpush2.bf16.msra.mxu0 0
        %2436 = vmatprep.subr.bf16.mxu0 0
        %2437 = vmatpush2.bf16.msra.mxu0 0
        %2438 = vmatprep.subr.bf16.mxu0 0
        %2439 = vmatpush2.bf16.msra.mxu0 0
        %2440 = vmatprep.subr.bf16.mxu0 0
        %2441 = vmatpush2.bf16.msra.mxu0 0
        %2442 = vmatprep.mubr.bf16.mxu0 0
        %2443 = vmatmul.mubr.bf16.gmra.mxu0 %v2408
        %v2444 = vpop.f32.mrf.mxu0
        %v2445 = vadd.f32 0.0, %v2444
        %v2446 = vpop.f32.mrf.mxu0
        %v2447 = vpop.f32.mrf.mxu0
        %v2448 = vpop.f32.mrf.mxu0
        %2449 = vdwg.mxu0
        %v2450 = vpack.c.bf16 %v2445, %v2445
        %v2451 = vld [vmem:[#allocation13] sm:$0xf]
        %v2452 = vld [vmem:[#allocation13 + $0x4] sm:$0xf]
        %v2455 = vunpack.c.l.b16 %v2451
        %v2456 = vunpack.c.l.b16 %v2452
        %v2457 = vpack.c.b16 %v2456, %v2455
        %v2460 = vsel %vm1392, %v2450, 0
        %2462 = vmatprep.subr.bf16.mxu0 0
        %2463 = vmatpush1.bf16.msra.mxu0 0
        %2464 = vmatprep.subr.bf16.mxu0 0
        %2465 = vmatpush1.bf16.msra.mxu0 0
        %2466 = vmatprep.subr.bf16.mxu0 0
        %2467 = vmatpush1.bf16.msra.mxu0 0
        %2468 = vmatprep.subr.bf16.mxu0 0
        %2469 = vmatpush1.bf16.msra.mxu0 0
        %2470 = vmatprep.subr.bf16.mxu0 0
        %2471 = vmatpush1.bf16.msra.mxu0 0
        %2472 = vmatprep.subr.bf16.mxu0 0
        %2473 = vmatpush1.bf16.msra.mxu0 0
        %2474 = vmatprep.subr.bf16.mxu0 0
        %2475 = vmatpush1.bf16.msra.mxu0 0
        %2476 = vmatprep.subr.bf16.mxu0 0
        %2477 = vmatpush1.bf16.msra.mxu0 %v2457
        %2478 = vmatprep.subr.bf16.mxu0 0
        %2479 = vmatpush2.bf16.msra.mxu0 0
        %2480 = vmatprep.subr.bf16.mxu0 0
        %2481 = vmatpush2.bf16.msra.mxu0 0
        %2482 = vmatprep.subr.bf16.mxu0 0
        %2483 = vmatpush2.bf16.msra.mxu0 0
        %2484 = vmatprep.subr.bf16.mxu0 0
        %2485 = vmatpush2.bf16.msra.mxu0 0
        %2486 = vmatprep.subr.bf16.mxu0 0
        %2487 = vmatpush2.bf16.msra.mxu0 0
        %2488 = vmatprep.subr.bf16.mxu0 0
        %2489 = vmatpush2.bf16.msra.mxu0 0
        %2490 = vmatprep.subr.bf16.mxu0 0
        %2491 = vmatpush2.bf16.msra.mxu0 0
        %2492 = vmatprep.subr.bf16.mxu0 0
        %2493 = vmatpush2.bf16.msra.mxu0 0
        %2494 = vmatprep.mubr.bf16.mxu0 0
        %2495 = vmatmul.mubr.bf16.gmra.mxu0 %v2460
        %v2496 = vpop.f32.mrf.mxu0
        %v2497 = vadd.f32 0.0, %v2496
        %v2498 = vpop.f32.mrf.mxu0
        %v2499 = vpop.f32.mrf.mxu0
        %v2500 = vpop.f32.mrf.mxu0
        %2501 = vdwg.mxu0
        %v2502 = vadd.f32 %v2338, %v2497
        %2504 = vrot.lane.b32.xlu0 %v2165, 112
        %v2505 = vpop.permute.xlu0 %2504
        %2507 = vrot.lane.b32.xlu0 %v2249, 112
        %v2508 = vpop.permute.xlu0 %2507
        %v2510 = vsel %vm1392, %v2505, 0
        %v2513 = vsel %vm1392, %v2508, 0
        %2515 = vmatprep.subr.bf16.mxu0 0
        %2516 = vmatpush1.bf16.xpose.msra.mxu0 0
        %2517 = vmatprep.subr.bf16.mxu0 0
        %2518 = vmatpush1.bf16.xpose.msra.mxu0 0
        %2519 = vmatprep.subr.bf16.mxu0 0
        %2520 = vmatpush1.bf16.xpose.msra.mxu0 0
        %2521 = vmatprep.subr.bf16.mxu0 0
        %2522 = vmatpush1.bf16.xpose.msra.mxu0 0
        %2523 = vmatprep.subr.bf16.mxu0 0
        %2524 = vmatpush1.bf16.xpose.msra.mxu0 0
        %2525 = vmatprep.subr.bf16.mxu0 0
        %2526 = vmatpush1.bf16.xpose.msra.mxu0 0
        %2527 = vmatprep.subr.bf16.mxu0 0
        %2528 = vmatpush1.bf16.xpose.msra.mxu0 0
        %2529 = vmatprep.subr.bf16.mxu0 0
        %2530 = vmatpush1.bf16.xpose.msra.mxu0 %v2513
        %2531 = vmatprep.subr.bf16.mxu0 0
        %2532 = vmatpush2.bf16.xpose.msra.mxu0 0
        %2533 = vmatprep.subr.bf16.mxu0 0
        %2534 = vmatpush2.bf16.xpose.msra.mxu0 0
        %2535 = vmatprep.subr.bf16.mxu0 0
        %2536 = vmatpush2.bf16.xpose.msra.mxu0 0
        %2537 = vmatprep.subr.bf16.mxu0 0
        %2538 = vmatpush2.bf16.xpose.msra.mxu0 0
        %2539 = vmatprep.subr.bf16.mxu0 0
        %2540 = vmatpush2.bf16.xpose.msra.mxu0 0
        %2541 = vmatprep.subr.bf16.mxu0 0
        %2542 = vmatpush2.bf16.xpose.msra.mxu0 0
        %2543 = vmatprep.subr.bf16.mxu0 0
        %2544 = vmatpush2.bf16.xpose.msra.mxu0 0
        %2545 = vmatprep.subr.bf16.mxu0 0
        %2546 = vmatpush2.bf16.xpose.msra.mxu0 0
        %2547 = vmatprep.mubr.bf16.mxu0 0
        %2548 = vmatmul.mubr.bf16.gmra.mxu0 %v2510
        %v2549 = vpop.f32.mrf.mxu0
        %v2550 = vadd.f32 0.0, %v2549
        %v2551 = vpop.f32.mrf.mxu0
        %v2552 = vpop.f32.mrf.mxu0
        %v2553 = vpop.f32.mrf.mxu0
        %2554 = vdwg.mxu0
        %v2555 = vsel %vm2393, %v2550, -1e+30
        %v2556 = vsel %vm1392, %v2555, -inf
        %2557 = vmax.xlane.f32.xlu0 %v2556
        %v2558 = vpop.xlane.xlu0 %2557
        %v2559 = vsub.f32 %v2555, %v2558
        %v2560 = vmul.f32 %v2559, 1.442695
        %v2561 = vpow.pop %v2560
        %v2562 = vsel %vm1392, %v2561, 0.0
        %2563 = vadd.xlane.f32.xlu0 %v2562
        %v2564 = vpop.xlane.xlu0 %2563
        %v2565 = vrcp.pop %v2564
        %v2566 = vmul.f32 %v2561, %v2565
        %v2567 = vpack.c.bf16 %v2566, %v2566
        %2569 = vrot.lane.b32.xlu0 %v2330, 112
        %v2570 = vpop.permute.xlu0 %2569
        %v2573 = vsel %vm1392, %v2567, 0
        %2575 = vmatprep.subr.bf16.mxu0 0
        %2576 = vmatpush1.bf16.msra.mxu0 0
        %2577 = vmatprep.subr.bf16.mxu0 0
        %2578 = vmatpush1.bf16.msra.mxu0 0
        %2579 = vmatprep.subr.bf16.mxu0 0
        %2580 = vmatpush1.bf16.msra.mxu0 0
        %2581 = vmatprep.subr.bf16.mxu0 0
        %2582 = vmatpush1.bf16.msra.mxu0 0
        %2583 = vmatprep.subr.bf16.mxu0 0
        %2584 = vmatpush1.bf16.msra.mxu0 0
        %2585 = vmatprep.subr.bf16.mxu0 0
        %2586 = vmatpush1.bf16.msra.mxu0 0
        %2587 = vmatprep.subr.bf16.mxu0 0
        %2588 = vmatpush1.bf16.msra.mxu0 0
        %2589 = vmatprep.subr.bf16.mxu0 0
        %2590 = vmatpush1.bf16.msra.mxu0 %v2570
        %2591 = vmatprep.subr.bf16.mxu0 0
        %2592 = vmatpush2.bf16.msra.mxu0 0
        %2593 = vmatprep.subr.bf16.mxu0 0
        %2594 = vmatpush2.bf16.msra.mxu0 0
        %2595 = vmatprep.subr.bf16.mxu0 0
        %2596 = vmatpush2.bf16.msra.mxu0 0
        %2597 = vmatprep.subr.bf16.mxu0 0
        %2598 = vmatpush2.bf16.msra.mxu0 0
        %2599 = vmatprep.subr.bf16.mxu0 0
        %2600 = vmatpush2.bf16.msra.mxu0 0
        %2601 = vmatprep.subr.bf16.mxu0 0
        %2602 = vmatpush2.bf16.msra.mxu0 0
        %2603 = vmatprep.subr.bf16.mxu0 0
        %2604 = vmatpush2.bf16.msra.mxu0 0
        %2605 = vmatprep.subr.bf16.mxu0 0
        %2606 = vmatpush2.bf16.msra.mxu0 0
        %2607 = vmatprep.mubr.bf16.mxu0 0
        %2608 = vmatmul.mubr.bf16.gmra.mxu0 %v2573
        %v2609 = vpop.f32.mrf.mxu0
        %v2610 = vadd.f32 0.0, %v2609
        %v2611 = vpop.f32.mrf.mxu0
        %v2612 = vpop.f32.mrf.mxu0
        %v2613 = vpop.f32.mrf.mxu0
        %2614 = vdwg.mxu0
        %v2615 = vpack.c.bf16 %v2610, %v2610
        %v2616 = vld [vmem:[#allocation13 + $0x8] sm:$0xf]
        %v2617 = vld [vmem:[#allocation13 + $0xc] sm:$0xf]
        %v2620 = vunpack.c.l.b16 %v2616
        %v2621 = vunpack.c.l.b16 %v2617
        %v2622 = vpack.c.b16 %v2621, %v2620
        %v2625 = vsel %vm1392, %v2615, 0
        %2627 = vmatprep.subr.bf16.mxu0 0
        %2628 = vmatpush1.bf16.msra.mxu0 0
        %2629 = vmatprep.subr.bf16.mxu0 0
        %2630 = vmatpush1.bf16.msra.mxu0 0
        %2631 = vmatprep.subr.bf16.mxu0 0
        %2632 = vmatpush1.bf16.msra.mxu0 0
        %2633 = vmatprep.subr.bf16.mxu0 0
        %2634 = vmatpush1.bf16.msra.mxu0 0
        %2635 = vmatprep.subr.bf16.mxu0 0
        %2636 = vmatpush1.bf16.msra.mxu0 0
        %2637 = vmatprep.subr.bf16.mxu0 0
        %2638 = vmatpush1.bf16.msra.mxu0 0
        %2639 = vmatprep.subr.bf16.mxu0 0
        %2640 = vmatpush1.bf16.msra.mxu0 0
        %2641 = vmatprep.subr.bf16.mxu0 0
        %2642 = vmatpush1.bf16.msra.mxu0 %v2622
        %2643 = vmatprep.subr.bf16.mxu0 0
        %2644 = vmatpush2.bf16.msra.mxu0 0
        %2645 = vmatprep.subr.bf16.mxu0 0
        %2646 = vmatpush2.bf16.msra.mxu0 0
        %2647 = vmatprep.subr.bf16.mxu0 0
        %2648 = vmatpush2.bf16.msra.mxu0 0
        %2649 = vmatprep.subr.bf16.mxu0 0
        %2650 = vmatpush2.bf16.msra.mxu0 0
        %2651 = vmatprep.subr.bf16.mxu0 0
        %2652 = vmatpush2.bf16.msra.mxu0 0
        %2653 = vmatprep.subr.bf16.mxu0 0
        %2654 = vmatpush2.bf16.msra.mxu0 0
        %2655 = vmatprep.subr.bf16.mxu0 0
        %2656 = vmatpush2.bf16.msra.mxu0 0
        %2657 = vmatprep.subr.bf16.mxu0 0
        %2658 = vmatpush2.bf16.msra.mxu0 0
        %2659 = vmatprep.mubr.bf16.mxu0 0
        %2660 = vmatmul.mubr.bf16.gmra.mxu0 %v2625
        %v2661 = vpop.f32.mrf.mxu0
        %v2662 = vadd.f32 0.0, %v2661
        %v2663 = vpop.f32.mrf.mxu0
        %v2664 = vpop.f32.mrf.mxu0
        %v2665 = vpop.f32.mrf.mxu0
        %2666 = vdwg.mxu0
        %v2667 = vadd.f32 %v2502, %v2662
        %2668 = vrot.lane.b32.xlu0 %v2165, 96
        %v2669 = vpop.permute.xlu0 %2668
        %2670 = vrot.lane.b32.xlu0 %v2249, 96
        %v2671 = vpop.permute.xlu0 %2670
        %v2673 = vsel %vm1392, %v2669, 0
        %v2676 = vsel %vm1392, %v2671, 0
        %2678 = vmatprep.subr.bf16.mxu0 0
        %2679 = vmatpush1.bf16.xpose.msra.mxu0 0
        %2680 = vmatprep.subr.bf16.mxu0 0
        %2681 = vmatpush1.bf16.xpose.msra.mxu0 0
        %2682 = vmatprep.subr.bf16.mxu0 0
        %2683 = vmatpush1.bf16.xpose.msra.mxu0 0
        %2684 = vmatprep.subr.bf16.mxu0 0
        %2685 = vmatpush1.bf16.xpose.msra.mxu0 0
        %2686 = vmatprep.subr.bf16.mxu0 0
        %2687 = vmatpush1.bf16.xpose.msra.mxu0 0
        %2688 = vmatprep.subr.bf16.mxu0 0
        %2689 = vmatpush1.bf16.xpose.msra.mxu0 0
        %2690 = vmatprep.subr.bf16.mxu0 0
        %2691 = vmatpush1.bf16.xpose.msra.mxu0 0
        %2692 = vmatprep.subr.bf16.mxu0 0
        %2693 = vmatpush1.bf16.xpose.msra.mxu0 %v2676
        %2694 = vmatprep.subr.bf16.mxu0 0
        %2695 = vmatpush2.bf16.xpose.msra.mxu0 0
        %2696 = vmatprep.subr.bf16.mxu0 0
        %2697 = vmatpush2.bf16.xpose.msra.mxu0 0
        %2698 = vmatprep.subr.bf16.mxu0 0
        %2699 = vmatpush2.bf16.xpose.msra.mxu0 0
        %2700 = vmatprep.subr.bf16.mxu0 0
        %2701 = vmatpush2.bf16.xpose.msra.mxu0 0
        %2702 = vmatprep.subr.bf16.mxu0 0
        %2703 = vmatpush2.bf16.xpose.msra.mxu0 0
        %2704 = vmatprep.subr.bf16.mxu0 0
        %2705 = vmatpush2.bf16.xpose.msra.mxu0 0
        %2706 = vmatprep.subr.bf16.mxu0 0
        %2707 = vmatpush2.bf16.xpose.msra.mxu0 0
        %2708 = vmatprep.subr.bf16.mxu0 0
        %2709 = vmatpush2.bf16.xpose.msra.mxu0 0
        %2710 = vmatprep.mubr.bf16.mxu0 0
        %2711 = vmatmul.mubr.bf16.gmra.mxu0 %v2673
        %v2712 = vpop.f32.mrf.mxu0
        %v2713 = vadd.f32 0.0, %v2712
        %v2714 = vpop.f32.mrf.mxu0
        %v2715 = vpop.f32.mrf.mxu0
        %v2716 = vpop.f32.mrf.mxu0
        %2717 = vdwg.mxu0
        %v2718 = vsel %vm2393, %v2713, -1e+30
        %v2719 = vsel %vm1392, %v2718, -inf
        %2720 = vmax.xlane.f32.xlu0 %v2719
        %v2721 = vpop.xlane.xlu0 %2720
        %v2722 = vsub.f32 %v2718, %v2721
        %v2723 = vmul.f32 %v2722, 1.442695
        %v2724 = vpow.pop %v2723
        %v2725 = vsel %vm1392, %v2724, 0.0
        %2726 = vadd.xlane.f32.xlu0 %v2725
        %v2727 = vpop.xlane.xlu0 %2726
        %v2728 = vrcp.pop %v2727
        %v2729 = vmul.f32 %v2724, %v2728
        %v2730 = vpack.c.bf16 %v2729, %v2729
        %2731 = vrot.lane.b32.xlu0 %v2330, 96
        %v2732 = vpop.permute.xlu0 %2731
        %v2735 = vsel %vm1392, %v2730, 0
        %2737 = vmatprep.subr.bf16.mxu0 0
        %2738 = vmatpush1.bf16.msra.mxu0 0
        %2739 = vmatprep.subr.bf16.mxu0 0
        %2740 = vmatpush1.bf16.msra.mxu0 0
        %2741 = vmatprep.subr.bf16.mxu0 0
        %2742 = vmatpush1.bf16.msra.mxu0 0
        %2743 = vmatprep.subr.bf16.mxu0 0
        %2744 = vmatpush1.bf16.msra.mxu0 0
        %2745 = vmatprep.subr.bf16.mxu0 0
        %2746 = vmatpush1.bf16.msra.mxu0 0
        %2747 = vmatprep.subr.bf16.mxu0 0
        %2748 = vmatpush1.bf16.msra.mxu0 0
        %2749 = vmatprep.subr.bf16.mxu0 0
        %2750 = vmatpush1.bf16.msra.mxu0 0
        %2751 = vmatprep.subr.bf16.mxu0 0
        %2752 = vmatpush1.bf16.msra.mxu0 %v2732
        %2753 = vmatprep.subr.bf16.mxu0 0
        %2754 = vmatpush2.bf16.msra.mxu0 0
        %2755 = vmatprep.subr.bf16.mxu0 0
        %2756 = vmatpush2.bf16.msra.mxu0 0
        %2757 = vmatprep.subr.bf16.mxu0 0
        %2758 = vmatpush2.bf16.msra.mxu0 0
        %2759 = vmatprep.subr.bf16.mxu0 0
        %2760 = vmatpush2.bf16.msra.mxu0 0
        %2761 = vmatprep.subr.bf16.mxu0 0
        %2762 = vmatpush2.bf16.msra.mxu0 0
        %2763 = vmatprep.subr.bf16.mxu0 0
        %2764 = vmatpush2.bf16.msra.mxu0 0
        %2765 = vmatprep.subr.bf16.mxu0 0
        %2766 = vmatpush2.bf16.msra.mxu0 0
        %2767 = vmatprep.subr.bf16.mxu0 0
        %2768 = vmatpush2.bf16.msra.mxu0 0
        %2769 = vmatprep.mubr.bf16.mxu0 0
        %2770 = vmatmul.mubr.bf16.gmra.mxu0 %v2735
        %v2771 = vpop.f32.mrf.mxu0
        %v2772 = vadd.f32 0.0, %v2771
        %v2773 = vpop.f32.mrf.mxu0
        %v2774 = vpop.f32.mrf.mxu0
        %v2775 = vpop.f32.mrf.mxu0
        %2776 = vdwg.mxu0
        %v2777 = vpack.c.bf16 %v2772, %v2772
        %v2778 = vld [vmem:[#allocation13 + $0x10] sm:$0xf]
        %v2779 = vld [vmem:[#allocation13 + $0x14] sm:$0xf]
        %v2782 = vunpack.c.l.b16 %v2778
        %v2783 = vunpack.c.l.b16 %v2779
        %v2784 = vpack.c.b16 %v2783, %v2782
        %v2787 = vsel %vm1392, %v2777, 0
        %2789 = vmatprep.subr.bf16.mxu0 0
        %2790 = vmatpush1.bf16.msra.mxu0 0
        %2791 = vmatprep.subr.bf16.mxu0 0
        %2792 = vmatpush1.bf16.msra.mxu0 0
        %2793 = vmatprep.subr.bf16.mxu0 0
        %2794 = vmatpush1.bf16.msra.mxu0 0
        %2795 = vmatprep.subr.bf16.mxu0 0
        %2796 = vmatpush1.bf16.msra.mxu0 0
        %2797 = vmatprep.subr.bf16.mxu0 0
        %2798 = vmatpush1.bf16.msra.mxu0 0
        %2799 = vmatprep.subr.bf16.mxu0 0
        %2800 = vmatpush1.bf16.msra.mxu0 0
        %2801 = vmatprep.subr.bf16.mxu0 0
        %2802 = vmatpush1.bf16.msra.mxu0 0
        %2803 = vmatprep.subr.bf16.mxu0 0
        %2804 = vmatpush1.bf16.msra.mxu0 %v2784
        %2805 = vmatprep.subr.bf16.mxu0 0
        %2806 = vmatpush2.bf16.msra.mxu0 0
        %2807 = vmatprep.subr.bf16.mxu0 0
        %2808 = vmatpush2.bf16.msra.mxu0 0
        %2809 = vmatprep.subr.bf16.mxu0 0
        %2810 = vmatpush2.bf16.msra.mxu0 0
        %2811 = vmatprep.subr.bf16.mxu0 0
        %2812 = vmatpush2.bf16.msra.mxu0 0
        %2813 = vmatprep.subr.bf16.mxu0 0
        %2814 = vmatpush2.bf16.msra.mxu0 0
        %2815 = vmatprep.subr.bf16.mxu0 0
        %2816 = vmatpush2.bf16.msra.mxu0 0
        %2817 = vmatprep.subr.bf16.mxu0 0
        %2818 = vmatpush2.bf16.msra.mxu0 0
        %2819 = vmatprep.subr.bf16.mxu0 0
        %2820 = vmatpush2.bf16.msra.mxu0 0
        %2821 = vmatprep.mubr.bf16.mxu0 0
        %2822 = vmatmul.mubr.bf16.gmra.mxu0 %v2787
        %v2823 = vpop.f32.mrf.mxu0
        %v2824 = vadd.f32 0.0, %v2823
        %v2825 = vpop.f32.mrf.mxu0
        %v2826 = vpop.f32.mrf.mxu0
        %v2827 = vpop.f32.mrf.mxu0
        %2828 = vdwg.mxu0
        %v2829 = vadd.f32 %v2667, %v2824
        %2830 = vrot.lane.b32.xlu0 %v2165, 80
        %v2831 = vpop.permute.xlu0 %2830
        %2832 = vrot.lane.b32.xlu0 %v2249, 80
        %v2833 = vpop.permute.xlu0 %2832
        %v2835 = vsel %vm1392, %v2831, 0
        %v2838 = vsel %vm1392, %v2833, 0
        %2840 = vmatprep.subr.bf16.mxu0 0
        %2841 = vmatpush1.bf16.xpose.msra.mxu0 0
        %2842 = vmatprep.subr.bf16.mxu0 0
        %2843 = vmatpush1.bf16.xpose.msra.mxu0 0
        %2844 = vmatprep.subr.bf16.mxu0 0
        %2845 = vmatpush1.bf16.xpose.msra.mxu0 0
        %2846 = vmatprep.subr.bf16.mxu0 0
        %2847 = vmatpush1.bf16.xpose.msra.mxu0 0
        %2848 = vmatprep.subr.bf16.mxu0 0
        %2849 = vmatpush1.bf16.xpose.msra.mxu0 0
        %2850 = vmatprep.subr.bf16.mxu0 0
        %2851 = vmatpush1.bf16.xpose.msra.mxu0 0
        %2852 = vmatprep.subr.bf16.mxu0 0
        %2853 = vmatpush1.bf16.xpose.msra.mxu0 0
        %2854 = vmatprep.subr.bf16.mxu0 0
        %2855 = vmatpush1.bf16.xpose.msra.mxu0 %v2838
        %2856 = vmatprep.subr.bf16.mxu0 0
        %2857 = vmatpush2.bf16.xpose.msra.mxu0 0
        %2858 = vmatprep.subr.bf16.mxu0 0
        %2859 = vmatpush2.bf16.xpose.msra.mxu0 0
        %2860 = vmatprep.subr.bf16.mxu0 0
        %2861 = vmatpush2.bf16.xpose.msra.mxu0 0
        %2862 = vmatprep.subr.bf16.mxu0 0
        %2863 = vmatpush2.bf16.xpose.msra.mxu0 0
        %2864 = vmatprep.subr.bf16.mxu0 0
        %2865 = vmatpush2.bf16.xpose.msra.mxu0 0
        %2866 = vmatprep.subr.bf16.mxu0 0
        %2867 = vmatpush2.bf16.xpose.msra.mxu0 0
        %2868 = vmatprep.subr.bf16.mxu0 0
        %2869 = vmatpush2.bf16.xpose.msra.mxu0 0
        %2870 = vmatprep.subr.bf16.mxu0 0
        %2871 = vmatpush2.bf16.xpose.msra.mxu0 0
        %2872 = vmatprep.mubr.bf16.mxu0 0
        %2873 = vmatmul.mubr.bf16.gmra.mxu0 %v2835
        %v2874 = vpop.f32.mrf.mxu0
        %v2875 = vadd.f32 0.0, %v2874
        %v2876 = vpop.f32.mrf.mxu0
        %v2877 = vpop.f32.mrf.mxu0
        %v2878 = vpop.f32.mrf.mxu0
        %2879 = vdwg.mxu0
        %v2880 = vsel %vm2393, %v2875, -1e+30
        %v2881 = vsel %vm1392, %v2880, -inf
        %2882 = vmax.xlane.f32.xlu0 %v2881
        %v2883 = vpop.xlane.xlu0 %2882
        %v2884 = vsub.f32 %v2880, %v2883
        %v2885 = vmul.f32 %v2884, 1.442695
        %v2886 = vpow.pop %v2885
        %v2887 = vsel %vm1392, %v2886, 0.0
        %2888 = vadd.xlane.f32.xlu0 %v2887
        %v2889 = vpop.xlane.xlu0 %2888
        %v2890 = vrcp.pop %v2889
        %v2891 = vmul.f32 %v2886, %v2890
        %v2892 = vpack.c.bf16 %v2891, %v2891
        %2893 = vrot.lane.b32.xlu0 %v2330, 80
        %v2894 = vpop.permute.xlu0 %2893
        %v2897 = vsel %vm1392, %v2892, 0
        %2899 = vmatprep.subr.bf16.mxu0 0
        %2900 = vmatpush1.bf16.msra.mxu0 0
        %2901 = vmatprep.subr.bf16.mxu0 0
        %2902 = vmatpush1.bf16.msra.mxu0 0
        %2903 = vmatprep.subr.bf16.mxu0 0
        %2904 = vmatpush1.bf16.msra.mxu0 0
        %2905 = vmatprep.subr.bf16.mxu0 0
        %2906 = vmatpush1.bf16.msra.mxu0 0
        %2907 = vmatprep.subr.bf16.mxu0 0
        %2908 = vmatpush1.bf16.msra.mxu0 0
        %2909 = vmatprep.subr.bf16.mxu0 0
        %2910 = vmatpush1.bf16.msra.mxu0 0
        %2911 = vmatprep.subr.bf16.mxu0 0
        %2912 = vmatpush1.bf16.msra.mxu0 0
        %2913 = vmatprep.subr.bf16.mxu0 0
        %2914 = vmatpush1.bf16.msra.mxu0 %v2894
        %2915 = vmatprep.subr.bf16.mxu0 0
        %2916 = vmatpush2.bf16.msra.mxu0 0
        %2917 = vmatprep.subr.bf16.mxu0 0
        %2918 = vmatpush2.bf16.msra.mxu0 0
        %2919 = vmatprep.subr.bf16.mxu0 0
        %2920 = vmatpush2.bf16.msra.mxu0 0
        %2921 = vmatprep.subr.bf16.mxu0 0
        %2922 = vmatpush2.bf16.msra.mxu0 0
        %2923 = vmatprep.subr.bf16.mxu0 0
        %2924 = vmatpush2.bf16.msra.mxu0 0
        %2925 = vmatprep.subr.bf16.mxu0 0
        %2926 = vmatpush2.bf16.msra.mxu0 0
        %2927 = vmatprep.subr.bf16.mxu0 0
        %2928 = vmatpush2.bf16.msra.mxu0 0
        %2929 = vmatprep.subr.bf16.mxu0 0
        %2930 = vmatpush2.bf16.msra.mxu0 0
        %2931 = vmatprep.mubr.bf16.mxu0 0
        %2932 = vmatmul.mubr.bf16.gmra.mxu0 %v2897
        %v2933 = vpop.f32.mrf.mxu0
        %v2934 = vadd.f32 0.0, %v2933
        %v2935 = vpop.f32.mrf.mxu0
        %v2936 = vpop.f32.mrf.mxu0
        %v2937 = vpop.f32.mrf.mxu0
        %2938 = vdwg.mxu0
        %v2939 = vpack.c.bf16 %v2934, %v2934
        %v2940 = vld [vmem:[#allocation13 + $0x18] sm:$0xf]
        %v2941 = vld [vmem:[#allocation13 + $0x1c] sm:$0xf]
        %v2944 = vunpack.c.l.b16 %v2940
        %v2945 = vunpack.c.l.b16 %v2941
        %v2946 = vpack.c.b16 %v2945, %v2944
        %v2949 = vsel %vm1392, %v2939, 0
        %2951 = vmatprep.subr.bf16.mxu0 0
        %2952 = vmatpush1.bf16.msra.mxu0 0
        %2953 = vmatprep.subr.bf16.mxu0 0
        %2954 = vmatpush1.bf16.msra.mxu0 0
        %2955 = vmatprep.subr.bf16.mxu0 0
        %2956 = vmatpush1.bf16.msra.mxu0 0
        %2957 = vmatprep.subr.bf16.mxu0 0
        %2958 = vmatpush1.bf16.msra.mxu0 0
        %2959 = vmatprep.subr.bf16.mxu0 0
        %2960 = vmatpush1.bf16.msra.mxu0 0
        %2961 = vmatprep.subr.bf16.mxu0 0
        %2962 = vmatpush1.bf16.msra.mxu0 0
        %2963 = vmatprep.subr.bf16.mxu0 0
        %2964 = vmatpush1.bf16.msra.mxu0 0
        %2965 = vmatprep.subr.bf16.mxu0 0
        %2966 = vmatpush1.bf16.msra.mxu0 %v2946
        %2967 = vmatprep.subr.bf16.mxu0 0
        %2968 = vmatpush2.bf16.msra.mxu0 0
        %2969 = vmatprep.subr.bf16.mxu0 0
        %2970 = vmatpush2.bf16.msra.mxu0 0
        %2971 = vmatprep.subr.bf16.mxu0 0
        %2972 = vmatpush2.bf16.msra.mxu0 0
        %2973 = vmatprep.subr.bf16.mxu0 0
        %2974 = vmatpush2.bf16.msra.mxu0 0
        %2975 = vmatprep.subr.bf16.mxu0 0
        %2976 = vmatpush2.bf16.msra.mxu0 0
        %2977 = vmatprep.subr.bf16.mxu0 0
        %2978 = vmatpush2.bf16.msra.mxu0 0
        %2979 = vmatprep.subr.bf16.mxu0 0
        %2980 = vmatpush2.bf16.msra.mxu0 0
        %2981 = vmatprep.subr.bf16.mxu0 0
        %2982 = vmatpush2.bf16.msra.mxu0 0
        %2983 = vmatprep.mubr.bf16.mxu0 0
        %2984 = vmatmul.mubr.bf16.gmra.mxu0 %v2949
        %v2985 = vpop.f32.mrf.mxu0
        %v2986 = vadd.f32 0.0, %v2985
        %v2987 = vpop.f32.mrf.mxu0
        %v2988 = vpop.f32.mrf.mxu0
        %v2989 = vpop.f32.mrf.mxu0
        %2990 = vdwg.mxu0
        %v2991 = vadd.f32 %v2829, %v2986
        %v2992 = vadd.f32 %v2051, %v2991
        %v2993 = vld [vmem:[%s49] sm:$0x1]
        %v2994 = vld [vmem:[%s51] sm:$0x1]
        %v2995 = vsel %vm1111, %v2992, 0.0
        %2996 = vadd.xlane.f32.xlu0 %v2995
        %v2997 = vpop.xlane.xlu0 %2996
        %v2998 = vmul.f32 %v2997, %v1115
        %v2999 = vsub.f32 %v2992, %v2998
        %v3000 = vmul.f32 %v2999, %v2999
        %v3001 = vsel %vm1111, %v3000, 0.0
        %3002 = vadd.xlane.f32.xlu0 %v3001
        %v3003 = vpop.xlane.xlu0 %3002
        %v3004 = vmul.f32 %v3003, %v1115
        %v3005 = vadd.f32 %v3004, 1e-05
        %v3006 = vrsqrt.pop %v3005
        %v3007 = vmul.f32 %v2999, %v3006
        %v3009 = vlaneseq
        %v3010 = vshrl.u32 %v3009, 7
        %v3011 = vsub.s32 0, %v3010
        %v3012 = vrot.slane %v2993, %v3011
        %v3014 = vmul.f32 %v3007, %v3012
        %v3016 = vlaneseq
        %v3017 = vshrl.u32 %v3016, 7
        %v3018 = vsub.s32 0, %v3017
        %v3019 = vrot.slane %v2994, %v3018
        %v3021 = vadd.f32 %v3014, %v3019
        %v3022 = vpack.c.bf16 %v3021, %v3021
        %v3023 = vld [vmem:[#allocation14] sm:$0xf]
        %v3024 = vld [vmem:[#allocation14 + $0x4] sm:$0xf]
        %v3025 = vld [vmem:[#allocation14 + $0x8] sm:$0xf]
        %v3026 = vld [vmem:[#allocation14 + $0xc] sm:$0xf]
        %v3027 = vld [vmem:[#allocation14 + $0x10] sm:$0xf]
        %v3028 = vld [vmem:[#allocation14 + $0x14] sm:$0xf]
        %v3029 = vld [vmem:[#allocation14 + $0x18] sm:$0xf]
        %v3030 = vld [vmem:[#allocation14 + $0x1c] sm:$0xf]
        %v3031 = vld [vmem:[%s55] sm:$0x1]
        %v3033 = vlaneseq
        %v3034 = vshrl.u32 %v3033, 7
        %v3035 = vsub.s32 0, %v3034
        %v3036 = vrot.slane %v3031, %v3035
        %v3046 = vunpack.c.l.b16 %v3023
        %v3047 = vunpack.c.l.b16 %v3024
        %v3048 = vunpack.c.l.b16 %v3025
        %v3049 = vunpack.c.l.b16 %v3026
        %v3050 = vunpack.c.l.b16 %v3027
        %v3051 = vunpack.c.l.b16 %v3028
        %v3052 = vunpack.c.l.b16 %v3029
        %v3053 = vunpack.c.l.b16 %v3030
        %v3054 = vpack.c.b16 %v3047, %v3046
        %v3055 = vpack.c.b16 %v3049, %v3048
        %v3056 = vpack.c.b16 %v3051, %v3050
        %v3057 = vpack.c.b16 %v3053, %v3052
        %v3063 = vsel %vm1111, %v3022, 0
        %3065 = vmatprep.subr.bf16.mxu0 0
        %3066 = vmatpush1.bf16.msra.mxu0 0
        %3067 = vmatprep.subr.bf16.mxu0 0
        %3068 = vmatpush1.bf16.msra.mxu0 0
        %3069 = vmatprep.subr.bf16.mxu0 0
        %3070 = vmatpush1.bf16.msra.mxu0 0
        %3071 = vmatprep.subr.bf16.mxu0 0
        %3072 = vmatpush1.bf16.msra.mxu0 0
        %3073 = vmatprep.subr.bf16.mxu0 0
        %3074 = vmatpush1.bf16.msra.mxu0 %v3057
        %3075 = vmatprep.subr.bf16.mxu0 0
        %3076 = vmatpush1.bf16.msra.mxu0 %v3056
        %3077 = vmatprep.subr.bf16.mxu0 0
        %3078 = vmatpush1.bf16.msra.mxu0 %v3055
        %3079 = vmatprep.subr.bf16.mxu0 0
        %3080 = vmatpush1.bf16.msra.mxu0 %v3054
        %3081 = vmatprep.subr.bf16.mxu0 0
        %3082 = vmatpush2.bf16.msra.mxu0 0
        %3083 = vmatprep.subr.bf16.mxu0 0
        %3084 = vmatpush2.bf16.msra.mxu0 0
        %3085 = vmatprep.subr.bf16.mxu0 0
        %3086 = vmatpush2.bf16.msra.mxu0 0
        %3087 = vmatprep.subr.bf16.mxu0 0
        %3088 = vmatpush2.bf16.msra.mxu0 0
        %3089 = vmatprep.subr.bf16.mxu0 0
        %3090 = vmatpush2.bf16.msra.mxu0 0
        %3091 = vmatprep.subr.bf16.mxu0 0
        %3092 = vmatpush2.bf16.msra.mxu0 0
        %3093 = vmatprep.subr.bf16.mxu0 0
        %3094 = vmatpush2.bf16.msra.mxu0 0
        %3095 = vmatprep.subr.bf16.mxu0 0
        %3096 = vmatpush2.bf16.msra.mxu0 0
        %3097 = vmatprep.mubr.bf16.mxu0 0
        %3098 = vmatmul.mubr.bf16.gmra.mxu0 %v3063
        %v3099 = vpop.f32.mrf.mxu0
        %v3100 = vadd.f32 %v3036, %v3099
        %v3101 = vpop.f32.mrf.mxu0
        %v3102 = vpop.f32.mrf.mxu0
        %v3103 = vpop.f32.mrf.mxu0
        %3104 = vdwg.mxu0
        %v3105 = vmax.f32 %v3100, 0.0
        %v3106 = vpack.c.bf16 %v3105, %v3105
        %v3107 = vld [vmem:[%s57] sm:$0xf]
        %v3108 = vld [vmem:[%s57 + $0x4] sm:$0xf]
        %v3109 = vld [vmem:[%s57 + $0x8] sm:$0xf]
        %v3110 = vld [vmem:[%s57 + $0xc] sm:$0xf]
        %v3111 = vld [vmem:[%s57 + $0x10] sm:$0xf]
        %v3112 = vld [vmem:[%s57 + $0x14] sm:$0xf]
        %v3113 = vld [vmem:[%s57 + $0x18] sm:$0xf]
        %v3114 = vld [vmem:[%s57 + $0x1c] sm:$0xf]
        %v3115 = vld [vmem:[%s57 + $0x20] sm:$0xf]
        %v3116 = vld [vmem:[%s57 + $0x24] sm:$0xf]
        %v3117 = vld [vmem:[%s57 + $0x28] sm:$0xf]
        %v3118 = vld [vmem:[%s57 + $0x2c] sm:$0xf]
        %v3119 = vld [vmem:[%s57 + $0x30] sm:$0xf]
        %v3120 = vld [vmem:[%s57 + $0x34] sm:$0xf]
        %v3121 = vld [vmem:[%s57 + $0x38] sm:$0xf]
        %v3122 = vld [vmem:[%s57 + $0x3c] sm:$0xf]
        %v3123 = vld [vmem:[%s59] sm:$0x1]
        %v3125 = vlaneseq
        %v3126 = vshrl.u32 %v3125, 7
        %v3127 = vsub.s32 0, %v3126
        %v3128 = vrot.slane %v3123, %v3127
        %v3146 = vunpack.c.l.b16 %v3107
        %v3147 = vunpack.c.l.b16 %v3108
        %v3148 = vunpack.c.l.b16 %v3109
        %v3149 = vunpack.c.l.b16 %v3110
        %v3150 = vunpack.c.l.b16 %v3111
        %v3151 = vunpack.c.l.b16 %v3112
        %v3152 = vunpack.c.l.b16 %v3113
        %v3153 = vunpack.c.l.b16 %v3114
        %v3154 = vunpack.c.l.b16 %v3115
        %v3155 = vunpack.c.l.b16 %v3116
        %v3156 = vunpack.c.l.b16 %v3117
        %v3157 = vunpack.c.l.b16 %v3118
        %v3158 = vunpack.c.l.b16 %v3119
        %v3159 = vunpack.c.l.b16 %v3120
        %v3160 = vunpack.c.l.b16 %v3121
        %v3161 = vunpack.c.l.b16 %v3122
        %v3162 = vpack.c.b16 %v3147, %v3146
        %v3163 = vpack.c.b16 %v3149, %v3148
        %v3164 = vpack.c.b16 %v3151, %v3150
        %v3165 = vpack.c.b16 %v3153, %v3152
        %v3166 = vpack.c.b16 %v3155, %v3154
        %v3167 = vpack.c.b16 %v3157, %v3156
        %v3168 = vpack.c.b16 %v3159, %v3158
        %v3169 = vpack.c.b16 %v3161, %v3160
        %3178 = vmatprep.subr.bf16.mxu0 0
        %3179 = vmatpush1.bf16.msra.mxu0 %v3169
        %3180 = vmatprep.subr.bf16.mxu0 0
        %3181 = vmatpush1.bf16.msra.mxu0 %v3168
        %3182 = vmatprep.subr.bf16.mxu0 0
        %3183 = vmatpush1.bf16.msra.mxu0 %v3167
        %3184 = vmatprep.subr.bf16.mxu0 0
        %3185 = vmatpush1.bf16.msra.mxu0 %v3166
        %3186 = vmatprep.subr.bf16.mxu0 0
        %3187 = vmatpush1.bf16.msra.mxu0 %v3165
        %3188 = vmatprep.subr.bf16.mxu0 0
        %3189 = vmatpush1.bf16.msra.mxu0 %v3164
        %3190 = vmatprep.subr.bf16.mxu0 0
        %3191 = vmatpush1.bf16.msra.mxu0 %v3163
        %3192 = vmatprep.subr.bf16.mxu0 0
        %3193 = vmatpush1.bf16.msra.mxu0 %v3162
        %3194 = vmatprep.subr.bf16.mxu0 0
        %3195 = vmatpush2.bf16.msra.mxu0 0
        %3196 = vmatprep.subr.bf16.mxu0 0
        %3197 = vmatpush2.bf16.msra.mxu0 0
        %3198 = vmatprep.subr.bf16.mxu0 0
        %3199 = vmatpush2.bf16.msra.mxu0 0
        %3200 = vmatprep.subr.bf16.mxu0 0
        %3201 = vmatpush2.bf16.msra.mxu0 0
        %3202 = vmatprep.subr.bf16.mxu0 0
        %3203 = vmatpush2.bf16.msra.mxu0 0
        %3204 = vmatprep.subr.bf16.mxu0 0
        %3205 = vmatpush2.bf16.msra.mxu0 0
        %3206 = vmatprep.subr.bf16.mxu0 0
        %3207 = vmatpush2.bf16.msra.mxu0 0
        %3208 = vmatprep.subr.bf16.mxu0 0
        %3209 = vmatpush2.bf16.msra.mxu0 0
        %3210 = vmatprep.mubr.bf16.mxu0 0
        %3211 = vmatmul.mubr.bf16.gmra.mxu0 %v3106
        %v3212 = vpop.f32.mrf.mxu0
        %v3213 = vadd.f32 %v3128, %v3212
        %v3214 = vpop.f32.mrf.mxu0
        %v3215 = vpop.f32.mrf.mxu0
        %v3216 = vpop.f32.mrf.mxu0
        %3217 = vdwg.mxu0
        %v3218 = vadd.f32 %v2992, %v3213
        %3219 = vst.msk [vmem:[%s1086] sm:$0xff] %vm1111, %v3218
        %s3220 = sand.u32 %s740, 1
        %s3221 = scalar_lea.sflag [#allocation4], %s3220
        %s3222 = sand.u32 %s740, 1
        %s3223 = smul.addr %s3222, 8
        %s3224 = scalar_lea.vmem [#allocation16], %s3223
        // Predicated region
        $region173: #{tpu_custom_call.1} parent=139 // pred_check
          %p3225 = pneg %p750
        $region174: #{tpu_custom_call.1} parent=139 // pred_check_branch
          %3227 = sbr.rel (%p3225) target = $region176
        $region175: #{tpu_custom_call.1} parent=139 // pred_region
          %s3229 = ssub.s32 128, 128
          %3230 = vsyncadd %s3221, %s3229
          %s3231 = smul.addr %s82, 128
          %s3232 = scalar_lea.hbm %s61, %s3231
          %s3234 = sshll.u32 %s3224, 4
          %s3235 = int_to_ptr.vmem [resolvable:$true] %s3234
          %3237 = dma.vmem_to_hbm [thread:$0]  %s3235, 128, %s3232, %s3221
        $region176: #{tpu_custom_call.1} parent=139 // pred_fallthru
          _
      $region140: #{tpu_custom_call.1} parent=5 // pred_fallthru
        _
      %p3238 = scmp.le.s32.totalorder 2, %s77
      // Predicated region
      $region177: #{tpu_custom_call.1} parent=5 // pred_check
        %p3239 = pneg %p3238
      $region178: #{tpu_custom_call.1} parent=5 // pred_check_branch
        %3241 = sbr.rel (%p3239) target = $region180
      $region179: #{tpu_custom_call.1} parent=5 // pred_region
        %s3242 = ssub.s32 %s77, 2
        // Predicated region
        $region181: #{tpu_custom_call.1} parent=179 // pred_check
          %p3243 = pneg %p756
        $region182: #{tpu_custom_call.1} parent=179 // pred_check_branch
          %3245 = sbr.rel (%p3243) target = $region184
        $region183: #{tpu_custom_call.1} parent=179 // pred_region
          %s3246 = sand.u32 %s741, 1
          %s3247 = scalar_lea.sflag [#allocation4], %s3246
          %s3248 = sand.u32 %s741, 1
          %s3249 = smul.addr %s3248, 8
          %s3250 = scalar_lea.vmem [#allocation16], %s3249
          %3251 = dma.done %s3247, 128
        $region184: #{tpu_custom_call.1} parent=179 // pred_fallthru
          _
      $region180: #{tpu_custom_call.1} parent=5 // pred_fallthru
        _
    $region6: #{tpu_custom_call.1} parent=1 // loop_footer
      %s81 = sadd.s32 1, %s77
    $region7: #{tpu_custom_call.1} parent=1 // loop_footer_branch
      %76 = sbr.rel target = $region3
    $region8: #{tpu_custom_call.1} parent=1 // loop_exit
      _
    %3252 = vsyncpa [#allocation3], 1
    %s3253 = scalar_lea.sflag [#allocation3], 1
    %3254 = vsyncpa %s3253, 1
    %3255 = vsyncpa [#allocation6], 1
    %3256 = vsyncpa [#allocation9], 1
    %3257 = vsyncpa [#allocation12], 1
    %3258 = vsyncpa [#allocation15], 1
    %3259 = vsyncpa [#allocation4], 1
    %s3260 = scalar_lea.sflag [#allocation4], 1
    %3261 = vsyncpa %s3260, 1

</llo_original>
